<compile_context>
chip_gen: v6e
topology: v6e:2x2x1
jax: 0.10.0
libtpu: 0.0.40
codegen_flags: <defaults>
</compile_context>

<pallas_src>
import functools

import jax
import jax.numpy as jnp
from jax.experimental import pallas as pl
from jax.experimental.pallas import tpu as pltpu

TM = 256          # batch tile (rows per grid step); fits easily in scoped VMEM
HIDDEN = 512


def _leaky_relu(x, slope=0.2):
    return jnp.where(x > 0, x, slope * x)


def disc_mlp_kernel(x_ref,
                    w1_ref, b1_ref,
                    w2_ref, b2_ref,
                    w3_ref, b3_ref,
                    w4_ref, b4_ref,
                    o_ref):
    """One batch tile: 3 MXU matmuls (bf16 in, f32 acc) + VPU/XLU final layer."""
    x = x_ref[...]                                                    # (TM, D_pad) bf16

    h = jnp.dot(x, w1_ref[...], preferred_element_type=jnp.float32) + b1_ref[...]
    h = _leaky_relu(h)                                                # f32

    h = jnp.dot(h.astype(jnp.bfloat16), w2_ref[...],
                preferred_element_type=jnp.float32) + b2_ref[...]
    # Dropout(0.4) -> identity in eval mode.
    h = _leaky_relu(h)

    h = jnp.dot(h.astype(jnp.bfloat16), w3_ref[...],
                preferred_element_type=jnp.float32) + b3_ref[...]
    # Dropout(0.4) -> identity in eval mode.
    h = _leaky_relu(h)

    # Final Linear(512, 1): N=1 would waste the MXU, so do it on the VPU (mul)
    # + XLU (lane reduce) instead. w4 is passed as a (1, 512) f32 row.
    s = jnp.sum(h * w4_ref[...], axis=-1, keepdims=True) + b4_ref[...]  # (TM, 1)
    o_ref[...] = s.astype(o_ref.dtype)


@jax.jit
def discriminator_mlp_forward(img, labels, params):
    """Flatten image, embedding lookup, concat; then batch-tiled Pallas MLP."""
    B = img.shape[0]
    img_flat = img.reshape(B, -1).astype(jnp.float32)          # (B, prod(img_shape))
    emb = jnp.take(params["emb"], labels, axis=0)               # (B, n_classes)
    d_in = jnp.concatenate([img_flat, emb], axis=-1)            # (B, D_in) f32
    D_in = d_in.shape[-1]
    H = params["w2"].shape[0]

    # Pad feature dim to a multiple of 128 lanes and batch to a multiple of TM.
    D_pad = ((D_in + 127) // 128) * 128
    B_pad = ((B + TM - 1) // TM) * TM
    x = jnp.pad(d_in.astype(jnp.bfloat16), ((0, B_pad - B), (0, D_pad - D_in)))

    # MXU operands in bf16 (halves the weight/activation DMA); zero-pad w1's
    # contracted dim so padded lanes contribute exactly zero.
    w1 = jnp.pad(params["w1"].astype(jnp.bfloat16), ((0, D_pad - D_in), (0, 0)))
    w2 = params["w2"].astype(jnp.bfloat16)
    w3 = params["w3"].astype(jnp.bfloat16)
    w4_row = params["w4"].reshape(1, H).astype(jnp.float32)     # used on the VPU
    b1, b2, b3 = params["b1"], params["b2"], params["b3"]       # (1, H) f32
    b4 = params["b4"].reshape(1, 1)                             # (1, 1) f32

    num_tiles = B_pad // TM

    def resident(shape):
        # Weight/bias blocks: same block every grid step -> fetched once, VMEM-resident.
        return pl.BlockSpec(shape, lambda i: (0, 0))

    in_specs = [
        pl.BlockSpec((TM, D_pad), lambda i: (i, 0)),            # activation stream
        resident((D_pad, H)), resident((1, H)),
        resident((H, H)),     resident((1, H)),
        resident((H, H)),     resident((1, H)),
        resident((1, H)),     resident((1, 1)),
    ]
    out_specs = pl.BlockSpec((TM, 1), lambda i: (i, 0))

    flops = 2 * B_pad * (D_pad * H + 2 * H * H + H)
    bytes_accessed = (x.size * 2
                      + (w1.size + w2.size + w3.size) * 2
                      + (b1.size + b2.size + b3.size + w4_row.size + b4.size) * 4
                      + B_pad * 4)

    score = pl.pallas_call(
        disc_mlp_kernel,
        out_shape=jax.ShapeDtypeStruct((B_pad, 1), jnp.float32),
        grid=(num_tiles,),
        in_specs=in_specs,
        out_specs=out_specs,
        compiler_params=pltpu.CompilerParams(
            dimension_semantics=("parallel",)),
        cost_estimate=pl.CostEstimate(
            flops=flops, transcendentals=0, bytes_accessed=bytes_accessed),
    )(x, w1, b1, w2, b2, w3, b3, w4_row, b4)

    return score[:B]


def init_params(key, n_classes, img_shape):
    """Deterministic parameter init matching the PyTorch module's shapes (f32)."""
    d_img = 1
    for s in img_shape:
        d_img *= s
    d_in = n_classes + d_img
    hidden = HIDDEN

    keys = jax.random.split(key, 9)

    def lin_w(k, fan_in, fan_out):
        bound = 1.0 / (fan_in ** 0.5)
        return jax.random.uniform(k, (fan_in, fan_out), jnp.float32, -bound, bound)

    def lin_b(k, fan_in, fan_out):
        bound = 1.0 / (fan_in ** 0.5)
        return jax.random.uniform(k, (1, fan_out), jnp.float32, -bound, bound)

    return {
        # nn.Embedding(n_classes, n_classes): weight ~ N(0, 1)
        "emb": jax.random.normal(keys[0], (n_classes, n_classes), jnp.float32),
        "w1": lin_w(keys[1], d_in, hidden),   "b1": lin_b(keys[2], d_in, hidden),
        "w2": lin_w(keys[3], hidden, hidden), "b2": lin_b(keys[4], hidden, hidden),
        "w3": lin_w(keys[5], hidden, hidden), "b3": lin_b(keys[6], hidden, hidden),
        "w4": lin_w(keys[7], hidden, 1),      "b4": lin_b(keys[8], hidden, 1),
    }


def reference_forward(img, labels, params):
    """Pure-JAX reference with the same bf16-MXU / f32-accumulate numerics."""
    B = img.shape[0]
    H = params["w2"].shape[0]
    x = jnp.concatenate(
        [img.reshape(B, -1).astype(jnp.float32),
         jnp.take(params["emb"], labels, axis=0)], axis=-1)

    def dot_bf16(a, w):
        return jnp.dot(a.astype(jnp.bfloat16), w.astype(jnp.bfloat16),
                       preferred_element_type=jnp.float32)

    h = _leaky_relu(dot_bf16(x, params["w1"]) + params["b1"])
    h = _leaky_relu(dot_bf16(h, params["w2"]) + params["b2"])
    h = _leaky_relu(dot_bf16(h, params["w3"]) + params["b3"])
    w4_row = params["w4"].reshape(1, H)
    return jnp.sum(h * w4_row, axis=-1, keepdims=True) + params["b4"].reshape(1, 1)


if __name__ == "__main__":
    n_classes = 10
    img_shape = (16, 16)          # prod = 256 -> D_in = 266 (padded to 384)
    B = 2

    key = jax.random.PRNGKey(0)
    k_img, k_lab, k_par = jax.random.split(key, 3)

    img = jax.random.normal(k_img, (B, 1, 16, 16), jnp.float32)   # NCHW
    labels = jax.random.randint(k_lab, (B,), 0, n_classes, jnp.int32)
    params = init_params(k_par, n_classes, img_shape)

    score = discriminator_mlp_forward(img, labels, params)
    score = jax.block_until_ready(score)

    ref = reference_forward(img, labels, params)
    assert score.shape == (B, 1)
    assert jnp.allclose(score, ref, atol=1e-2, rtol=1e-2), (score, ref)

    print("KERNEL_OK")
</pallas_src>

<mosaic_0001>
module attributes {stable_mosaic.version = 11 : i64} {
  func.func @disc_mlp_kernel(%arg0: i32, %arg1: memref<256x384xbf16, #tpu.memory_space<vmem>>, %arg2: memref<384x512xbf16, #tpu.memory_space<vmem>>, %arg3: memref<1x512xf32, #tpu.memory_space<vmem>>, %arg4: memref<512x512xbf16, #tpu.memory_space<vmem>>, %arg5: memref<1x512xf32, #tpu.memory_space<vmem>>, %arg6: memref<512x512xbf16, #tpu.memory_space<vmem>>, %arg7: memref<1x512xf32, #tpu.memory_space<vmem>>, %arg8: memref<1x512xf32, #tpu.memory_space<vmem>>, %arg9: memref<1x1xf32, #tpu.memory_space<vmem>>, %arg10: memref<256x1xf32, #tpu.memory_space<vmem>>) attributes {dimension_semantics = [#tpu.dimension_semantics<parallel>], iteration_bounds = array<i64: 1>, scalar_prefetch = 0 : i64, scratch_operands = 0 : i64, tpu.core_type = #tpu.core_type<tc>, window_params = [{transform_indices = @transform_0, window_bounds = array<i64: 256, 384>}, {pipeline_mode = #tpu.pipeline_mode<synchronous>, transform_indices = @transform_1, window_bounds = array<i64: 384, 512>}, {pipeline_mode = #tpu.pipeline_mode<synchronous>, transform_indices = @transform_2, window_bounds = array<i64: 1, 512>}, {pipeline_mode = #tpu.pipeline_mode<synchronous>, transform_indices = @transform_3, window_bounds = array<i64: 512, 512>}, {pipeline_mode = #tpu.pipeline_mode<synchronous>, transform_indices = @transform_4, window_bounds = array<i64: 1, 512>}, {pipeline_mode = #tpu.pipeline_mode<synchronous>, transform_indices = @transform_5, window_bounds = array<i64: 512, 512>}, {pipeline_mode = #tpu.pipeline_mode<synchronous>, transform_indices = @transform_6, window_bounds = array<i64: 1, 512>}, {pipeline_mode = #tpu.pipeline_mode<synchronous>, transform_indices = @transform_7, window_bounds = array<i64: 1, 512>}, {pipeline_mode = #tpu.pipeline_mode<synchronous>, transform_indices = @transform_8, window_bounds = array<i64: 1, 1>}, {transform_indices = @transform_9, window_bounds = array<i64: 256, 1>}]} {
    %c0 = arith.constant 0 : index
    %c0_0 = arith.constant 0 : index
    %0 = vector.load %arg1[%c0, %c0_0] : memref<256x384xbf16, #tpu.memory_space<vmem>>, vector<256x384xbf16>
    %c0_1 = arith.constant 0 : index
    %c0_2 = arith.constant 0 : index
    %1 = vector.load %arg2[%c0_1, %c0_2] : memref<384x512xbf16, #tpu.memory_space<vmem>>, vector<384x512xbf16>
    %cst = arith.constant dense<0.000000e+00> : vector<256x512xf32>
    %2 = tpu.matmul %0, %1, %cst {dimension_numbers = #tpu.dot_dimension_numbers<[1], [0], [0], [1], [0, 0, 1, 1], [], []>} : vector<256x384xbf16>, vector<384x512xbf16>, vector<256x512xf32> -> vector<256x512xf32>
    %c0_3 = arith.constant 0 : index
    %c0_4 = arith.constant 0 : index
    %3 = vector.load %arg3[%c0_3, %c0_4] : memref<1x512xf32, #tpu.memory_space<vmem>>, vector<1x512xf32>
    %4 = vector.broadcast %3 : vector<1x512xf32> to vector<256x512xf32>
    %5 = arith.addf %2, %4 : vector<256x512xf32>
    %cst_5 = arith.constant 0.000000e+00 : f32
    %6 = vector.broadcast %cst_5 : f32 to vector<256x512xf32>
    %7 = arith.cmpf ogt, %5, %6 : vector<256x512xf32>
    %cst_6 = arith.constant 2.000000e-01 : f32
    %8 = vector.broadcast %cst_6 : f32 to vector<256x512xf32>
    %9 = arith.mulf %8, %5 : vector<256x512xf32>
    %10 = arith.select %7, %5, %9 : vector<256x512xi1>, vector<256x512xf32>
    %11 = arith.truncf %10 : vector<256x512xf32> to vector<256x512xbf16>
    %c0_7 = arith.constant 0 : index
    %c0_8 = arith.constant 0 : index
    %12 = vector.load %arg4[%c0_7, %c0_8] : memref<512x512xbf16, #tpu.memory_space<vmem>>, vector<512x512xbf16>
    %cst_9 = arith.constant dense<0.000000e+00> : vector<256x512xf32>
    %13 = tpu.matmul %11, %12, %cst_9 {dimension_numbers = #tpu.dot_dimension_numbers<[1], [0], [0], [1], [0, 0, 1, 1], [], []>} : vector<256x512xbf16>, vector<512x512xbf16>, vector<256x512xf32> -> vector<256x512xf32>
    %c0_10 = arith.constant 0 : index
    %c0_11 = arith.constant 0 : index
    %14 = vector.load %arg5[%c0_10, %c0_11] : memref<1x512xf32, #tpu.memory_space<vmem>>, vector<1x512xf32>
    %15 = vector.broadcast %14 : vector<1x512xf32> to vector<256x512xf32>
    %16 = arith.addf %13, %15 : vector<256x512xf32>
    %cst_12 = arith.constant 0.000000e+00 : f32
    %17 = vector.broadcast %cst_12 : f32 to vector<256x512xf32>
    %18 = arith.cmpf ogt, %16, %17 : vector<256x512xf32>
    %cst_13 = arith.constant 2.000000e-01 : f32
    %19 = vector.broadcast %cst_13 : f32 to vector<256x512xf32>
    %20 = arith.mulf %19, %16 : vector<256x512xf32>
    %21 = arith.select %18, %16, %20 : vector<256x512xi1>, vector<256x512xf32>
    %22 = arith.truncf %21 : vector<256x512xf32> to vector<256x512xbf16>
    %c0_14 = arith.constant 0 : index
    %c0_15 = arith.constant 0 : index
    %23 = vector.load %arg6[%c0_14, %c0_15] : memref<512x512xbf16, #tpu.memory_space<vmem>>, vector<512x512xbf16>
    %cst_16 = arith.constant dense<0.000000e+00> : vector<256x512xf32>
    %24 = tpu.matmul %22, %23, %cst_16 {dimension_numbers = #tpu.dot_dimension_numbers<[1], [0], [0], [1], [0, 0, 1, 1], [], []>} : vector<256x512xbf16>, vector<512x512xbf16>, vector<256x512xf32> -> vector<256x512xf32>
    %c0_17 = arith.constant 0 : index
    %c0_18 = arith.constant 0 : index
    %25 = vector.load %arg7[%c0_17, %c0_18] : memref<1x512xf32, #tpu.memory_space<vmem>>, vector<1x512xf32>
    %26 = vector.broadcast %25 : vector<1x512xf32> to vector<256x512xf32>
    %27 = arith.addf %24, %26 : vector<256x512xf32>
    %cst_19 = arith.constant 0.000000e+00 : f32
    %28 = vector.broadcast %cst_19 : f32 to vector<256x512xf32>
    %29 = arith.cmpf ogt, %27, %28 : vector<256x512xf32>
    %cst_20 = arith.constant 2.000000e-01 : f32
    %30 = vector.broadcast %cst_20 : f32 to vector<256x512xf32>
    %31 = arith.mulf %30, %27 : vector<256x512xf32>
    %32 = arith.select %29, %27, %31 : vector<256x512xi1>, vector<256x512xf32>
    %c0_21 = arith.constant 0 : index
    %c0_22 = arith.constant 0 : index
    %33 = vector.load %arg8[%c0_21, %c0_22] : memref<1x512xf32, #tpu.memory_space<vmem>>, vector<1x512xf32>
    %34 = vector.broadcast %33 : vector<1x512xf32> to vector<256x512xf32>
    %35 = arith.mulf %32, %34 : vector<256x512xf32>
    %cst_23 = arith.constant dense<0.000000e+00> : vector<256xf32>
    %36 = vector.multi_reduction <add>, %35, %cst_23 [1] : vector<256x512xf32> to vector<256xf32>
    %37 = vector.shape_cast %36 : vector<256xf32> to vector<256x1xf32>
    %c0_24 = arith.constant 0 : index
    %c0_25 = arith.constant 0 : index
    %38 = vector.load %arg9[%c0_24, %c0_25] : memref<1x1xf32, #tpu.memory_space<vmem>>, vector<1x1xf32>
    %39 = vector.broadcast %38 : vector<1x1xf32> to vector<256x1xf32>
    %40 = arith.addf %37, %39 : vector<256x1xf32>
    %c0_26 = arith.constant 0 : index
    %c0_27 = arith.constant 0 : index
    %41 = vector.load %arg10[%c0_26, %c0_27] : memref<256x1xf32, #tpu.memory_space<vmem>>, vector<256x1xf32>
    tpu.vector_store %arg10[%c0_26, %c0_27], %40 {strides = array<i32>} : memref<256x1xf32, #tpu.memory_space<vmem>>, vector<256x1xf32>,
    return
  }
  func.func @transform_0(%arg0: i32) -> (i32, i32) {
    %c0_i32 = arith.constant 0 : i32
    %c0_i32_0 = arith.constant 0 : i32
    return %arg0, %c0_i32 : i32, i32
  }
  func.func @transform_1(%arg0: i32) -> (i32, i32) {
    %c0_i32 = arith.constant 0 : i32
    %c0_i32_0 = arith.constant 0 : i32
    %c0_i32_1 = arith.constant 0 : i32
    return %c0_i32, %c0_i32_0 : i32, i32
  }
  func.func @transform_2(%arg0: i32) -> (i32, i32) {
    %c0_i32 = arith.constant 0 : i32
    %c0_i32_0 = arith.constant 0 : i32
    %c0_i32_1 = arith.constant 0 : i32
    return %c0_i32, %c0_i32_0 : i32, i32
  }
  func.func @transform_3(%arg0: i32) -> (i32, i32) {
    %c0_i32 = arith.constant 0 : i32
    %c0_i32_0 = arith.constant 0 : i32
    %c0_i32_1 = arith.constant 0 : i32
    return %c0_i32, %c0_i32_0 : i32, i32
  }
  func.func @transform_4(%arg0: i32) -> (i32, i32) {
    %c0_i32 = arith.constant 0 : i32
    %c0_i32_0 = arith.constant 0 : i32
    %c0_i32_1 = arith.constant 0 : i32
    return %c0_i32, %c0_i32_0 : i32, i32
  }
  func.func @transform_5(%arg0: i32) -> (i32, i32) {
    %c0_i32 = arith.constant 0 : i32
    %c0_i32_0 = arith.constant 0 : i32
    %c0_i32_1 = arith.constant 0 : i32
    return %c0_i32, %c0_i32_0 : i32, i32
  }
  func.func @transform_6(%arg0: i32) -> (i32, i32) {
    %c0_i32 = arith.constant 0 : i32
    %c0_i32_0 = arith.constant 0 : i32
    %c0_i32_1 = arith.constant 0 : i32
    return %c0_i32, %c0_i32_0 : i32, i32
  }
  func.func @transform_7(%arg0: i32) -> (i32, i32) {
    %c0_i32 = arith.constant 0 : i32
    %c0_i32_0 = arith.constant 0 : i32
    %c0_i32_1 = arith.constant 0 : i32
    return %c0_i32, %c0_i32_0 : i32, i32
  }
  func.func @transform_8(%arg0: i32) -> (i32, i32) {
    %c0_i32 = arith.constant 0 : i32
    %c0_i32_0 = arith.constant 0 : i32
    %c0_i32_1 = arith.constant 0 : i32
    return %c0_i32, %c0_i32_0 : i32, i32
  }
  func.func @transform_9(%arg0: i32) -> (i32, i32) {
    %c0_i32 = arith.constant 0 : i32
    %c0_i32_0 = arith.constant 0 : i32
    return %arg0, %c0_i32 : i32, i32
  }
}

</mosaic_0001>

<llo_original>
// kernel: discriminator_mlp_forward.1
$region0: #{discriminator_mlp_forward.1}
  #allocation0 [shape = 'u32[]', space=smem, size = 0x4, offset = 0x4, fixed_abs, tag = 'smem constant byte address 0x4 - core index']
  #allocation1 [shape = 'u32[144,128]{1,0:T(1,128)}', space=vmem, size = 0x12000, scoped, tag = 'internal scratch']
  #allocation2 [shape = 'f32[1,1]{1,0:T(1,128)S(1)}', space=vmem, size = 0x200, scoped, tag = 'scoped memory for discriminator_mlp_forward.1']
  %s0 = inlined_call_operand.vmem [shape: bf16[256,384], index: 0, kind: input, shape index: {}]
  %s1 = inlined_call_operand.vmem [shape: bf16[384,512], index: 1, kind: input, shape index: {}]
  %s2 = inlined_call_operand.vmem [shape: f32[1,512], index: 2, kind: input, shape index: {}]
  %s3 = inlined_call_operand.vmem [shape: bf16[512,512], index: 3, kind: input, shape index: {}]
  %s4 = inlined_call_operand.vmem [shape: f32[1,512], index: 4, kind: input, shape index: {}]
  %s5 = inlined_call_operand.vmem [shape: bf16[512,512], index: 5, kind: input, shape index: {}]
  %s6 = inlined_call_operand.vmem [shape: f32[1,512], index: 6, kind: input, shape index: {}]
  %s7 = inlined_call_operand.vmem [shape: f32[1,512], index: 7, kind: input, shape index: {}]
  %s8 = inlined_call_operand.<no memory space> [shape: f32[1,1], index: 8, kind: input, shape index: {}]
  %s9 = inlined_call_operand.vmem [shape: f32[256,1], index: 9, kind: output, shape index: {}]
  %s10 = sld [smem:[#allocation0]]
  $region46: #{discriminator_mlp_forward.1} parent=0
    _
  %s12 = ssub.s32 1, %s10
  %s13 = scalar_select 0, %s12, %s10
  %v14 = vstv %s8
  %15 = vst [vmem:[#allocation2] sm:$0x1] %v14
  // Predicated region
  $region2: #{discriminator_mlp_forward.1} parent=0 // pred_check
    _
  $region3: #{discriminator_mlp_forward.1} parent=0 // pred_check_branch
    %17 = sbr.rel (0) target = $region5
  $region4: #{discriminator_mlp_forward.1} parent=0 // pred_region
    _
  $region5: #{discriminator_mlp_forward.1} parent=0 // pred_fallthru
    _
  // Predicated region
  $region6: #{discriminator_mlp_forward.1} parent=0 // pred_check
    _
  $region7: #{discriminator_mlp_forward.1} parent=0 // pred_check_branch
    %19 = sbr.rel (0) target = $region9
  $region8: #{discriminator_mlp_forward.1} parent=0 // pred_region
    _
  $region9: #{discriminator_mlp_forward.1} parent=0 // pred_fallthru
    _
  // Predicated region
  $region10: #{discriminator_mlp_forward.1} parent=0 // pred_check
    _
  $region11: #{discriminator_mlp_forward.1} parent=0 // pred_check_branch
    %21 = sbr.rel (0) target = $region13
  $region12: #{discriminator_mlp_forward.1} parent=0 // pred_region
    _
  $region13: #{discriminator_mlp_forward.1} parent=0 // pred_fallthru
    _
  // Predicated region
  $region14: #{discriminator_mlp_forward.1} parent=0 // pred_check
    _
  $region15: #{discriminator_mlp_forward.1} parent=0 // pred_check_branch
    %23 = sbr.rel (0) target = $region17
  $region16: #{discriminator_mlp_forward.1} parent=0 // pred_region
    _
  $region17: #{discriminator_mlp_forward.1} parent=0 // pred_fallthru
    _
  // Predicated region
  $region18: #{discriminator_mlp_forward.1} parent=0 // pred_check
    _
  $region19: #{discriminator_mlp_forward.1} parent=0 // pred_check_branch
    %25 = sbr.rel (0) target = $region21
  $region20: #{discriminator_mlp_forward.1} parent=0 // pred_region
    _
  $region21: #{discriminator_mlp_forward.1} parent=0 // pred_fallthru
    _
  // Predicated region
  $region22: #{discriminator_mlp_forward.1} parent=0 // pred_check
    _
  $region23: #{discriminator_mlp_forward.1} parent=0 // pred_check_branch
    %27 = sbr.rel (0) target = $region25
  $region24: #{discriminator_mlp_forward.1} parent=0 // pred_region
    _
  $region25: #{discriminator_mlp_forward.1} parent=0 // pred_fallthru
    _
  // Predicated region
  $region26: #{discriminator_mlp_forward.1} parent=0 // pred_check
    _
  $region27: #{discriminator_mlp_forward.1} parent=0 // pred_check_branch
    %29 = sbr.rel (0) target = $region29
  $region28: #{discriminator_mlp_forward.1} parent=0 // pred_region
    _
  $region29: #{discriminator_mlp_forward.1} parent=0 // pred_fallthru
    _
  // Predicated region
  $region30: #{discriminator_mlp_forward.1} parent=0 // pred_check
    _
  $region31: #{discriminator_mlp_forward.1} parent=0 // pred_check_branch
    %31 = sbr.rel (0) target = $region33
  $region32: #{discriminator_mlp_forward.1} parent=0 // pred_region
    _
  $region33: #{discriminator_mlp_forward.1} parent=0 // pred_fallthru
    _
  // Predicated region
  $region34: #{discriminator_mlp_forward.1} parent=0 // pred_check
    _
  $region35: #{discriminator_mlp_forward.1} parent=0 // pred_check_branch
    %33 = sbr.rel (0) target = $region37
  $region36: #{discriminator_mlp_forward.1} parent=0 // pred_region
    _
  $region37: #{discriminator_mlp_forward.1} parent=0 // pred_fallthru
    _
  %v35 = vld [vmem:[%s0] sm:$0xff]
  %v36 = vld [vmem:[%s0 + $0x8] sm:$0xf]
  %v37 = vld [vmem:[%s0 + $0xc] sm:$0xff]
  %v38 = vld [vmem:[%s0 + $0x14] sm:$0xf]
  %v39 = vld [vmem:[%s0 + $0x18] sm:$0xff]
  %v40 = vld [vmem:[%s0 + $0x20] sm:$0xf]
  %v41 = vld [vmem:[%s0 + $0x24] sm:$0xff]
  %v42 = vld [vmem:[%s0 + $0x2c] sm:$0xf]
  %v43 = vld [vmem:[%s0 + $0x30] sm:$0xff]
  %v44 = vld [vmem:[%s0 + $0x38] sm:$0xf]
  %v45 = vld [vmem:[%s0 + $0x3c] sm:$0xff]
  %v46 = vld [vmem:[%s0 + $0x44] sm:$0xf]
  %v47 = vld [vmem:[%s0 + $0x48] sm:$0xff]
  %v48 = vld [vmem:[%s0 + $0x50] sm:$0xf]
  %v49 = vld [vmem:[%s0 + $0x54] sm:$0xff]
  %v50 = vld [vmem:[%s0 + $0x5c] sm:$0xf]
  %v51 = vld [vmem:[%s0 + $0x60] sm:$0xff]
  %v52 = vld [vmem:[%s0 + $0x68] sm:$0xf]
  %v53 = vld [vmem:[%s0 + $0x6c] sm:$0xff]
  %v54 = vld [vmem:[%s0 + $0x74] sm:$0xf]
  %v55 = vld [vmem:[%s0 + $0x78] sm:$0xff]
  %v56 = vld [vmem:[%s0 + $0x80] sm:$0xf]
  %v57 = vld [vmem:[%s0 + $0x84] sm:$0xff]
  %v58 = vld [vmem:[%s0 + $0x8c] sm:$0xf]
  %v59 = vld [vmem:[%s0 + $0x90] sm:$0xff]
  %v60 = vld [vmem:[%s0 + $0x98] sm:$0xf]
  %v61 = vld [vmem:[%s0 + $0x9c] sm:$0xff]
  %v62 = vld [vmem:[%s0 + $0xa4] sm:$0xf]
  %v63 = vld [vmem:[%s0 + $0xa8] sm:$0xff]
  %v64 = vld [vmem:[%s0 + $0xb0] sm:$0xf]
  %v65 = vld [vmem:[%s0 + $0xb4] sm:$0xff]
  %v66 = vld [vmem:[%s0 + $0xbc] sm:$0xf]
  %v67 = vld [vmem:[%s0 + $0xc0] sm:$0xff]
  %v68 = vld [vmem:[%s0 + $0xc8] sm:$0xf]
  %v69 = vld [vmem:[%s0 + $0xcc] sm:$0xff]
  %v70 = vld [vmem:[%s0 + $0xd4] sm:$0xf]
  %v71 = vld [vmem:[%s0 + $0xd8] sm:$0xff]
  %v72 = vld [vmem:[%s0 + $0xe0] sm:$0xf]
  %v73 = vld [vmem:[%s0 + $0xe4] sm:$0xff]
  %v74 = vld [vmem:[%s0 + $0xec] sm:$0xf]
  %v75 = vld [vmem:[%s0 + $0xf0] sm:$0xff]
  %v76 = vld [vmem:[%s0 + $0xf8] sm:$0xf]
  %v77 = vld [vmem:[%s0 + $0xfc] sm:$0xff]
  %v78 = vld [vmem:[%s0 + $0x104] sm:$0xf]
  %v79 = vld [vmem:[%s0 + $0x108] sm:$0xff]
  %v80 = vld [vmem:[%s0 + $0x110] sm:$0xf]
  %v81 = vld [vmem:[%s0 + $0x114] sm:$0xff]
  %v82 = vld [vmem:[%s0 + $0x11c] sm:$0xf]
  %v83 = vld [vmem:[%s0 + $0x120] sm:$0xff]
  %v84 = vld [vmem:[%s0 + $0x128] sm:$0xf]
  %v85 = vld [vmem:[%s0 + $0x12c] sm:$0xff]
  %v86 = vld [vmem:[%s0 + $0x134] sm:$0xf]
  %v87 = vld [vmem:[%s0 + $0x138] sm:$0xff]
  %v88 = vld [vmem:[%s0 + $0x140] sm:$0xf]
  %v89 = vld [vmem:[%s0 + $0x144] sm:$0xff]
  %v90 = vld [vmem:[%s0 + $0x14c] sm:$0xf]
  %v91 = vld [vmem:[%s0 + $0x150] sm:$0xff]
  %v92 = vld [vmem:[%s0 + $0x158] sm:$0xf]
  %v93 = vld [vmem:[%s0 + $0x15c] sm:$0xff]
  %v94 = vld [vmem:[%s0 + $0x164] sm:$0xf]
  %v95 = vld [vmem:[%s0 + $0x168] sm:$0xff]
  %v96 = vld [vmem:[%s0 + $0x170] sm:$0xf]
  %v97 = vld [vmem:[%s0 + $0x174] sm:$0xff]
  %v98 = vld [vmem:[%s0 + $0x17c] sm:$0xf]
  %v99 = vld [vmem:[%s1] sm:$0xff]
  %v100 = vld [vmem:[%s1 + $0x8] sm:$0xff]
  %v101 = vld [vmem:[%s1 + $0x10] sm:$0xff]
  %v102 = vld [vmem:[%s1 + $0x18] sm:$0xff]
  %v103 = vld [vmem:[%s1 + $0x20] sm:$0xff]
  %v104 = vld [vmem:[%s1 + $0x28] sm:$0xff]
  %v105 = vld [vmem:[%s1 + $0x30] sm:$0xff]
  %v106 = vld [vmem:[%s1 + $0x38] sm:$0xff]
  %v107 = vld [vmem:[%s1 + $0x40] sm:$0xff]
  %v108 = vld [vmem:[%s1 + $0x48] sm:$0xff]
  %v109 = vld [vmem:[%s1 + $0x50] sm:$0xff]
  %v110 = vld [vmem:[%s1 + $0x58] sm:$0xff]
  %v111 = vld [vmem:[%s1 + $0x60] sm:$0xff]
  %v112 = vld [vmem:[%s1 + $0x68] sm:$0xff]
  %v113 = vld [vmem:[%s1 + $0x70] sm:$0xff]
  %v114 = vld [vmem:[%s1 + $0x78] sm:$0xff]
  %v115 = vld [vmem:[%s1 + $0x80] sm:$0xff]
  %v116 = vld [vmem:[%s1 + $0x88] sm:$0xff]
  %v117 = vld [vmem:[%s1 + $0x90] sm:$0xff]
  %v118 = vld [vmem:[%s1 + $0x98] sm:$0xff]
  %v119 = vld [vmem:[%s1 + $0xa0] sm:$0xff]
  %v120 = vld [vmem:[%s1 + $0xa8] sm:$0xff]
  %v121 = vld [vmem:[%s1 + $0xb0] sm:$0xff]
  %v122 = vld [vmem:[%s1 + $0xb8] sm:$0xff]
  %v123 = vld [vmem:[%s1 + $0xc0] sm:$0xff]
  %v124 = vld [vmem:[%s1 + $0xc8] sm:$0xff]
  %v125 = vld [vmem:[%s1 + $0xd0] sm:$0xff]
  %v126 = vld [vmem:[%s1 + $0xd8] sm:$0xff]
  %v127 = vld [vmem:[%s1 + $0xe0] sm:$0xff]
  %v128 = vld [vmem:[%s1 + $0xe8] sm:$0xff]
  %v129 = vld [vmem:[%s1 + $0xf0] sm:$0xff]
  %v130 = vld [vmem:[%s1 + $0xf8] sm:$0xff]
  %v131 = vld [vmem:[%s1 + $0x100] sm:$0xff]
  %v132 = vld [vmem:[%s1 + $0x108] sm:$0xff]
  %v133 = vld [vmem:[%s1 + $0x110] sm:$0xff]
  %v134 = vld [vmem:[%s1 + $0x118] sm:$0xff]
  %v135 = vld [vmem:[%s1 + $0x120] sm:$0xff]
  %v136 = vld [vmem:[%s1 + $0x128] sm:$0xff]
  %v137 = vld [vmem:[%s1 + $0x130] sm:$0xff]
  %v138 = vld [vmem:[%s1 + $0x138] sm:$0xff]
  %v139 = vld [vmem:[%s1 + $0x140] sm:$0xff]
  %v140 = vld [vmem:[%s1 + $0x148] sm:$0xff]
  %v141 = vld [vmem:[%s1 + $0x150] sm:$0xff]
  %v142 = vld [vmem:[%s1 + $0x158] sm:$0xff]
  %v143 = vld [vmem:[%s1 + $0x160] sm:$0xff]
  %v144 = vld [vmem:[%s1 + $0x168] sm:$0xff]
  %v145 = vld [vmem:[%s1 + $0x170] sm:$0xff]
  %v146 = vld [vmem:[%s1 + $0x178] sm:$0xff]
  %v147 = vld [vmem:[%s1 + $0x180] sm:$0xff]
  %v148 = vld [vmem:[%s1 + $0x188] sm:$0xff]
  %v149 = vld [vmem:[%s1 + $0x190] sm:$0xff]
  %v150 = vld [vmem:[%s1 + $0x198] sm:$0xff]
  %v151 = vld [vmem:[%s1 + $0x1a0] sm:$0xff]
  %v152 = vld [vmem:[%s1 + $0x1a8] sm:$0xff]
  %v153 = vld [vmem:[%s1 + $0x1b0] sm:$0xff]
  %v154 = vld [vmem:[%s1 + $0x1b8] sm:$0xff]
  %v155 = vld [vmem:[%s1 + $0x1c0] sm:$0xff]
  %v156 = vld [vmem:[%s1 + $0x1c8] sm:$0xff]
  %v157 = vld [vmem:[%s1 + $0x1d0] sm:$0xff]
  %v158 = vld [vmem:[%s1 + $0x1d8] sm:$0xff]
  %v159 = vld [vmem:[%s1 + $0x1e0] sm:$0xff]
  %v160 = vld [vmem:[%s1 + $0x1e8] sm:$0xff]
  %v161 = vld [vmem:[%s1 + $0x1f0] sm:$0xff]
  %v162 = vld [vmem:[%s1 + $0x1f8] sm:$0xff]
  %v163 = vld [vmem:[%s1 + $0x200] sm:$0xff]
  %v164 = vld [vmem:[%s1 + $0x208] sm:$0xff]
  %v165 = vld [vmem:[%s1 + $0x210] sm:$0xff]
  %v166 = vld [vmem:[%s1 + $0x218] sm:$0xff]
  %v167 = vld [vmem:[%s1 + $0x220] sm:$0xff]
  %v168 = vld [vmem:[%s1 + $0x228] sm:$0xff]
  %v169 = vld [vmem:[%s1 + $0x230] sm:$0xff]
  %v170 = vld [vmem:[%s1 + $0x238] sm:$0xff]
  %v171 = vld [vmem:[%s1 + $0x240] sm:$0xff]
  %v172 = vld [vmem:[%s1 + $0x248] sm:$0xff]
  %v173 = vld [vmem:[%s1 + $0x250] sm:$0xff]
  %v174 = vld [vmem:[%s1 + $0x258] sm:$0xff]
  %v175 = vld [vmem:[%s1 + $0x260] sm:$0xff]
  %v176 = vld [vmem:[%s1 + $0x268] sm:$0xff]
  %v177 = vld [vmem:[%s1 + $0x270] sm:$0xff]
  %v178 = vld [vmem:[%s1 + $0x278] sm:$0xff]
  %v179 = vld [vmem:[%s1 + $0x280] sm:$0xff]
  %v180 = vld [vmem:[%s1 + $0x288] sm:$0xff]
  %v181 = vld [vmem:[%s1 + $0x290] sm:$0xff]
  %v182 = vld [vmem:[%s1 + $0x298] sm:$0xff]
  %v183 = vld [vmem:[%s1 + $0x2a0] sm:$0xff]
  %v184 = vld [vmem:[%s1 + $0x2a8] sm:$0xff]
  %v185 = vld [vmem:[%s1 + $0x2b0] sm:$0xff]
  %v186 = vld [vmem:[%s1 + $0x2b8] sm:$0xff]
  %v187 = vld [vmem:[%s1 + $0x2c0] sm:$0xff]
  %v188 = vld [vmem:[%s1 + $0x2c8] sm:$0xff]
  %v189 = vld [vmem:[%s1 + $0x2d0] sm:$0xff]
  %v190 = vld [vmem:[%s1 + $0x2d8] sm:$0xff]
  %v191 = vld [vmem:[%s1 + $0x2e0] sm:$0xff]
  %v192 = vld [vmem:[%s1 + $0x2e8] sm:$0xff]
  %v193 = vld [vmem:[%s1 + $0x2f0] sm:$0xff]
  %v194 = vld [vmem:[%s1 + $0x2f8] sm:$0xff]
  %v195 = vld [vmem:[%s2] sm:$0xf]
  %v197 = vlaneseq
  %v198 = vshrl.u32 %v197, 7
  %v199 = vsub.s32 0, %v198
  %v200 = vrot.slane %v195, %v199
  %v201 = vlaneseq
  %v202 = vshrl.u32 %v201, 7
  %v203 = vsub.s32 1, %v202
  %v204 = vrot.slane %v195, %v203
  %v205 = vlaneseq
  %v206 = vshrl.u32 %v205, 7
  %v207 = vsub.s32 2, %v206
  %v208 = vrot.slane %v195, %v207
  %v209 = vlaneseq
  %v210 = vshrl.u32 %v209, 7
  %v211 = vsub.s32 3, %v210
  %v212 = vrot.slane %v195, %v211
  %v281 = vunpack.c.l.b16 %v35
  %v282 = vunpack.c.h.b16 %v35
  %v283 = vunpack.c.l.b16 %v36
  %v284 = vunpack.c.l.b16 %v37
  %v285 = vunpack.c.h.b16 %v37
  %v286 = vunpack.c.l.b16 %v38
  %v287 = vunpack.c.l.b16 %v39
  %v288 = vunpack.c.h.b16 %v39
  %v289 = vunpack.c.l.b16 %v40
  %v290 = vunpack.c.l.b16 %v41
  %v291 = vunpack.c.h.b16 %v41
  %v292 = vunpack.c.l.b16 %v42
  %v293 = vunpack.c.l.b16 %v43
  %v294 = vunpack.c.h.b16 %v43
  %v295 = vunpack.c.l.b16 %v44
  %v296 = vunpack.c.l.b16 %v45
  %v297 = vunpack.c.h.b16 %v45
  %v298 = vunpack.c.l.b16 %v46
  %v299 = vunpack.c.l.b16 %v47
  %v300 = vunpack.c.h.b16 %v47
  %v301 = vunpack.c.l.b16 %v48
  %v302 = vunpack.c.l.b16 %v49
  %v303 = vunpack.c.h.b16 %v49
  %v304 = vunpack.c.l.b16 %v50
  %v305 = vunpack.c.l.b16 %v51
  %v306 = vunpack.c.h.b16 %v51
  %v307 = vunpack.c.l.b16 %v52
  %v308 = vunpack.c.l.b16 %v53
  %v309 = vunpack.c.h.b16 %v53
  %v310 = vunpack.c.l.b16 %v54
  %v311 = vunpack.c.l.b16 %v55
  %v312 = vunpack.c.h.b16 %v55
  %v313 = vunpack.c.l.b16 %v56
  %v314 = vunpack.c.l.b16 %v57
  %v315 = vunpack.c.h.b16 %v57
  %v316 = vunpack.c.l.b16 %v58
  %v317 = vunpack.c.l.b16 %v59
  %v318 = vunpack.c.h.b16 %v59
  %v319 = vunpack.c.l.b16 %v60
  %v320 = vunpack.c.l.b16 %v61
  %v321 = vunpack.c.h.b16 %v61
  %v322 = vunpack.c.l.b16 %v62
  %v323 = vunpack.c.l.b16 %v63
  %v324 = vunpack.c.h.b16 %v63
  %v325 = vunpack.c.l.b16 %v64
  %v326 = vunpack.c.l.b16 %v65
  %v327 = vunpack.c.h.b16 %v65
  %v328 = vunpack.c.l.b16 %v66
  %v329 = vunpack.c.l.b16 %v67
  %v330 = vunpack.c.h.b16 %v67
  %v331 = vunpack.c.l.b16 %v68
  %v332 = vunpack.c.l.b16 %v69
  %v333 = vunpack.c.h.b16 %v69
  %v334 = vunpack.c.l.b16 %v70
  %v335 = vunpack.c.l.b16 %v71
  %v336 = vunpack.c.h.b16 %v71
  %v337 = vunpack.c.l.b16 %v72
  %v338 = vunpack.c.l.b16 %v73
  %v339 = vunpack.c.h.b16 %v73
  %v340 = vunpack.c.l.b16 %v74
  %v341 = vunpack.c.l.b16 %v75
  %v342 = vunpack.c.h.b16 %v75
  %v343 = vunpack.c.l.b16 %v76
  %v344 = vunpack.c.l.b16 %v77
  %v345 = vunpack.c.h.b16 %v77
  %v346 = vunpack.c.l.b16 %v78
  %v347 = vunpack.c.l.b16 %v79
  %v348 = vunpack.c.h.b16 %v79
  %v349 = vunpack.c.l.b16 %v80
  %v350 = vunpack.c.l.b16 %v81
  %v351 = vunpack.c.h.b16 %v81
  %v352 = vunpack.c.l.b16 %v82
  %v353 = vunpack.c.l.b16 %v83
  %v354 = vunpack.c.h.b16 %v83
  %v355 = vunpack.c.l.b16 %v84
  %v356 = vunpack.c.l.b16 %v85
  %v357 = vunpack.c.h.b16 %v85
  %v358 = vunpack.c.l.b16 %v86
  %v359 = vunpack.c.l.b16 %v87
  %v360 = vunpack.c.h.b16 %v87
  %v361 = vunpack.c.l.b16 %v88
  %v362 = vunpack.c.l.b16 %v89
  %v363 = vunpack.c.h.b16 %v89
  %v364 = vunpack.c.l.b16 %v90
  %v365 = vunpack.c.l.b16 %v91
  %v366 = vunpack.c.h.b16 %v91
  %v367 = vunpack.c.l.b16 %v92
  %v368 = vunpack.c.l.b16 %v93
  %v369 = vunpack.c.h.b16 %v93
  %v370 = vunpack.c.l.b16 %v94
  %v371 = vunpack.c.l.b16 %v95
  %v372 = vunpack.c.h.b16 %v95
  %v373 = vunpack.c.l.b16 %v96
  %v374 = vunpack.c.l.b16 %v97
  %v375 = vunpack.c.h.b16 %v97
  %v376 = vunpack.c.l.b16 %v98
  %v377 = vpack.c.b16 %v284, %v281
  %v378 = vpack.c.b16 %v285, %v282
  %v379 = vpack.c.b16 %v286, %v283
  %v380 = vpack.c.b16 %v290, %v287
  %v381 = vpack.c.b16 %v291, %v288
  %v382 = vpack.c.b16 %v292, %v289
  %v383 = vpack.c.b16 %v296, %v293
  %v384 = vpack.c.b16 %v297, %v294
  %v385 = vpack.c.b16 %v298, %v295
  %v386 = vpack.c.b16 %v302, %v299
  %v387 = vpack.c.b16 %v303, %v300
  %v388 = vpack.c.b16 %v304, %v301
  %v389 = vpack.c.b16 %v308, %v305
  %v390 = vpack.c.b16 %v309, %v306
  %v391 = vpack.c.b16 %v310, %v307
  %v392 = vpack.c.b16 %v314, %v311
  %v393 = vpack.c.b16 %v315, %v312
  %v394 = vpack.c.b16 %v316, %v313
  %v395 = vpack.c.b16 %v320, %v317
  %v396 = vpack.c.b16 %v321, %v318
  %v397 = vpack.c.b16 %v322, %v319
  %v398 = vpack.c.b16 %v326, %v323
  %v399 = vpack.c.b16 %v327, %v324
  %v400 = vpack.c.b16 %v328, %v325
  %v401 = vpack.c.b16 %v332, %v329
  %v402 = vpack.c.b16 %v333, %v330
  %v403 = vpack.c.b16 %v334, %v331
  %v404 = vpack.c.b16 %v338, %v335
  %v405 = vpack.c.b16 %v339, %v336
  %v406 = vpack.c.b16 %v340, %v337
  %v407 = vpack.c.b16 %v344, %v341
  %v408 = vpack.c.b16 %v345, %v342
  %v409 = vpack.c.b16 %v346, %v343
  %v410 = vpack.c.b16 %v350, %v347
  %v411 = vpack.c.b16 %v351, %v348
  %v412 = vpack.c.b16 %v352, %v349
  %v413 = vpack.c.b16 %v356, %v353
  %v414 = vpack.c.b16 %v357, %v354
  %v415 = vpack.c.b16 %v358, %v355
  %v416 = vpack.c.b16 %v362, %v359
  %v417 = vpack.c.b16 %v363, %v360
  %v418 = vpack.c.b16 %v364, %v361
  %v419 = vpack.c.b16 %v368, %v365
  %v420 = vpack.c.b16 %v369, %v366
  %v421 = vpack.c.b16 %v370, %v367
  %v422 = vpack.c.b16 %v374, %v371
  %v423 = vpack.c.b16 %v375, %v372
  %v424 = vpack.c.b16 %v376, %v373
  %v569 = vunpack.c.l.b16 %v99
  %v570 = vunpack.c.h.b16 %v99
  %v571 = vunpack.c.l.b16 %v100
  %v572 = vunpack.c.h.b16 %v100
  %v573 = vunpack.c.l.b16 %v101
  %v574 = vunpack.c.h.b16 %v101
  %v575 = vunpack.c.l.b16 %v102
  %v576 = vunpack.c.h.b16 %v102
  %v577 = vunpack.c.l.b16 %v103
  %v578 = vunpack.c.h.b16 %v103
  %v579 = vunpack.c.l.b16 %v104
  %v580 = vunpack.c.h.b16 %v104
  %v581 = vunpack.c.l.b16 %v105
  %v582 = vunpack.c.h.b16 %v105
  %v583 = vunpack.c.l.b16 %v106
  %v584 = vunpack.c.h.b16 %v106
  %v585 = vunpack.c.l.b16 %v107
  %v586 = vunpack.c.h.b16 %v107
  %v587 = vunpack.c.l.b16 %v108
  %v588 = vunpack.c.h.b16 %v108
  %v589 = vunpack.c.l.b16 %v109
  %v590 = vunpack.c.h.b16 %v109
  %v591 = vunpack.c.l.b16 %v110
  %v592 = vunpack.c.h.b16 %v110
  %v593 = vunpack.c.l.b16 %v111
  %v594 = vunpack.c.h.b16 %v111
  %v595 = vunpack.c.l.b16 %v112
  %v596 = vunpack.c.h.b16 %v112
  %v597 = vunpack.c.l.b16 %v113
  %v598 = vunpack.c.h.b16 %v113
  %v599 = vunpack.c.l.b16 %v114
  %v600 = vunpack.c.h.b16 %v114
  %v601 = vunpack.c.l.b16 %v115
  %v602 = vunpack.c.h.b16 %v115
  %v603 = vunpack.c.l.b16 %v116
  %v604 = vunpack.c.h.b16 %v116
  %v605 = vunpack.c.l.b16 %v117
  %v606 = vunpack.c.h.b16 %v117
  %v607 = vunpack.c.l.b16 %v118
  %v608 = vunpack.c.h.b16 %v118
  %v609 = vunpack.c.l.b16 %v119
  %v610 = vunpack.c.h.b16 %v119
  %v611 = vunpack.c.l.b16 %v120
  %v612 = vunpack.c.h.b16 %v120
  %v613 = vunpack.c.l.b16 %v121
  %v614 = vunpack.c.h.b16 %v121
  %v615 = vunpack.c.l.b16 %v122
  %v616 = vunpack.c.h.b16 %v122
  %v617 = vunpack.c.l.b16 %v123
  %v618 = vunpack.c.h.b16 %v123
  %v619 = vunpack.c.l.b16 %v124
  %v620 = vunpack.c.h.b16 %v124
  %v621 = vunpack.c.l.b16 %v125
  %v622 = vunpack.c.h.b16 %v125
  %v623 = vunpack.c.l.b16 %v126
  %v624 = vunpack.c.h.b16 %v126
  %v625 = vunpack.c.l.b16 %v127
  %v626 = vunpack.c.h.b16 %v127
  %v627 = vunpack.c.l.b16 %v128
  %v628 = vunpack.c.h.b16 %v128
  %v629 = vunpack.c.l.b16 %v129
  %v630 = vunpack.c.h.b16 %v129
  %v631 = vunpack.c.l.b16 %v130
  %v632 = vunpack.c.h.b16 %v130
  %v633 = vunpack.c.l.b16 %v131
  %v634 = vunpack.c.h.b16 %v131
  %v635 = vunpack.c.l.b16 %v132
  %v636 = vunpack.c.h.b16 %v132
  %v637 = vunpack.c.l.b16 %v133
  %v638 = vunpack.c.h.b16 %v133
  %v639 = vunpack.c.l.b16 %v134
  %v640 = vunpack.c.h.b16 %v134
  %v641 = vunpack.c.l.b16 %v135
  %v642 = vunpack.c.h.b16 %v135
  %v643 = vunpack.c.l.b16 %v136
  %v644 = vunpack.c.h.b16 %v136
  %v645 = vunpack.c.l.b16 %v137
  %v646 = vunpack.c.h.b16 %v137
  %v647 = vunpack.c.l.b16 %v138
  %v648 = vunpack.c.h.b16 %v138
  %v649 = vunpack.c.l.b16 %v139
  %v650 = vunpack.c.h.b16 %v139
  %v651 = vunpack.c.l.b16 %v140
  %v652 = vunpack.c.h.b16 %v140
  %v653 = vunpack.c.l.b16 %v141
  %v654 = vunpack.c.h.b16 %v141
  %v655 = vunpack.c.l.b16 %v142
  %v656 = vunpack.c.h.b16 %v142
  %v657 = vunpack.c.l.b16 %v143
  %v658 = vunpack.c.h.b16 %v143
  %v659 = vunpack.c.l.b16 %v144
  %v660 = vunpack.c.h.b16 %v144
  %v661 = vunpack.c.l.b16 %v145
  %v662 = vunpack.c.h.b16 %v145
  %v663 = vunpack.c.l.b16 %v146
  %v664 = vunpack.c.h.b16 %v146
  %v665 = vunpack.c.l.b16 %v147
  %v666 = vunpack.c.h.b16 %v147
  %v667 = vunpack.c.l.b16 %v148
  %v668 = vunpack.c.h.b16 %v148
  %v669 = vunpack.c.l.b16 %v149
  %v670 = vunpack.c.h.b16 %v149
  %v671 = vunpack.c.l.b16 %v150
  %v672 = vunpack.c.h.b16 %v150
  %v673 = vunpack.c.l.b16 %v151
  %v674 = vunpack.c.h.b16 %v151
  %v675 = vunpack.c.l.b16 %v152
  %v676 = vunpack.c.h.b16 %v152
  %v677 = vunpack.c.l.b16 %v153
  %v678 = vunpack.c.h.b16 %v153
  %v679 = vunpack.c.l.b16 %v154
  %v680 = vunpack.c.h.b16 %v154
  %v681 = vunpack.c.l.b16 %v155
  %v682 = vunpack.c.h.b16 %v155
  %v683 = vunpack.c.l.b16 %v156
  %v684 = vunpack.c.h.b16 %v156
  %v685 = vunpack.c.l.b16 %v157
  %v686 = vunpack.c.h.b16 %v157
  %v687 = vunpack.c.l.b16 %v158
  %v688 = vunpack.c.h.b16 %v158
  %v689 = vunpack.c.l.b16 %v159
  %v690 = vunpack.c.h.b16 %v159
  %v691 = vunpack.c.l.b16 %v160
  %v692 = vunpack.c.h.b16 %v160
  %v693 = vunpack.c.l.b16 %v161
  %v694 = vunpack.c.h.b16 %v161
  %v695 = vunpack.c.l.b16 %v162
  %v696 = vunpack.c.h.b16 %v162
  %v697 = vunpack.c.l.b16 %v163
  %v698 = vunpack.c.h.b16 %v163
  %v699 = vunpack.c.l.b16 %v164
  %v700 = vunpack.c.h.b16 %v164
  %v701 = vunpack.c.l.b16 %v165
  %v702 = vunpack.c.h.b16 %v165
  %v703 = vunpack.c.l.b16 %v166
  %v704 = vunpack.c.h.b16 %v166
  %v705 = vunpack.c.l.b16 %v167
  %v706 = vunpack.c.h.b16 %v167
  %v707 = vunpack.c.l.b16 %v168
  %v708 = vunpack.c.h.b16 %v168
  %v709 = vunpack.c.l.b16 %v169
  %v710 = vunpack.c.h.b16 %v169
  %v711 = vunpack.c.l.b16 %v170
  %v712 = vunpack.c.h.b16 %v170
  %v713 = vunpack.c.l.b16 %v171
  %v714 = vunpack.c.h.b16 %v171
  %v715 = vunpack.c.l.b16 %v172
  %v716 = vunpack.c.h.b16 %v172
  %v717 = vunpack.c.l.b16 %v173
  %v718 = vunpack.c.h.b16 %v173
  %v719 = vunpack.c.l.b16 %v174
  %v720 = vunpack.c.h.b16 %v174
  %v721 = vunpack.c.l.b16 %v175
  %v722 = vunpack.c.h.b16 %v175
  %v723 = vunpack.c.l.b16 %v176
  %v724 = vunpack.c.h.b16 %v176
  %v725 = vunpack.c.l.b16 %v177
  %v726 = vunpack.c.h.b16 %v177
  %v727 = vunpack.c.l.b16 %v178
  %v728 = vunpack.c.h.b16 %v178
  %v729 = vunpack.c.l.b16 %v179
  %v730 = vunpack.c.h.b16 %v179
  %v731 = vunpack.c.l.b16 %v180
  %v732 = vunpack.c.h.b16 %v180
  %v733 = vunpack.c.l.b16 %v181
  %v734 = vunpack.c.h.b16 %v181
  %v735 = vunpack.c.l.b16 %v182
  %v736 = vunpack.c.h.b16 %v182
  %v737 = vunpack.c.l.b16 %v183
  %v738 = vunpack.c.h.b16 %v183
  %v739 = vunpack.c.l.b16 %v184
  %v740 = vunpack.c.h.b16 %v184
  %v741 = vunpack.c.l.b16 %v185
  %v742 = vunpack.c.h.b16 %v185
  %v743 = vunpack.c.l.b16 %v186
  %v744 = vunpack.c.h.b16 %v186
  %v745 = vunpack.c.l.b16 %v187
  %v746 = vunpack.c.h.b16 %v187
  %v747 = vunpack.c.l.b16 %v188
  %v748 = vunpack.c.h.b16 %v188
  %v749 = vunpack.c.l.b16 %v189
  %v750 = vunpack.c.h.b16 %v189
  %v751 = vunpack.c.l.b16 %v190
  %v752 = vunpack.c.h.b16 %v190
  %v753 = vunpack.c.l.b16 %v191
  %v754 = vunpack.c.h.b16 %v191
  %v755 = vunpack.c.l.b16 %v192
  %v756 = vunpack.c.h.b16 %v192
  %v757 = vunpack.c.l.b16 %v193
  %v758 = vunpack.c.h.b16 %v193
  %v759 = vunpack.c.l.b16 %v194
  %v760 = vunpack.c.h.b16 %v194
  %v761 = vpack.c.b16 %v573, %v569
  %v762 = vpack.c.b16 %v574, %v570
  %v763 = vpack.c.b16 %v575, %v571
  %v764 = vpack.c.b16 %v576, %v572
  %v765 = vpack.c.b16 %v581, %v577
  %v766 = vpack.c.b16 %v582, %v578
  %v767 = vpack.c.b16 %v583, %v579
  %v768 = vpack.c.b16 %v584, %v580
  %v769 = vpack.c.b16 %v589, %v585
  %v770 = vpack.c.b16 %v590, %v586
  %v771 = vpack.c.b16 %v591, %v587
  %v772 = vpack.c.b16 %v592, %v588
  %v773 = vpack.c.b16 %v597, %v593
  %v774 = vpack.c.b16 %v598, %v594
  %v775 = vpack.c.b16 %v599, %v595
  %v776 = vpack.c.b16 %v600, %v596
  %v777 = vpack.c.b16 %v605, %v601
  %v778 = vpack.c.b16 %v606, %v602
  %v779 = vpack.c.b16 %v607, %v603
  %v780 = vpack.c.b16 %v608, %v604
  %v781 = vpack.c.b16 %v613, %v609
  %v782 = vpack.c.b16 %v614, %v610
  %v783 = vpack.c.b16 %v615, %v611
  %v784 = vpack.c.b16 %v616, %v612
  %v785 = vpack.c.b16 %v621, %v617
  %v786 = vpack.c.b16 %v622, %v618
  %v787 = vpack.c.b16 %v623, %v619
  %v788 = vpack.c.b16 %v624, %v620
  %v789 = vpack.c.b16 %v629, %v625
  %v790 = vpack.c.b16 %v630, %v626
  %v791 = vpack.c.b16 %v631, %v627
  %v792 = vpack.c.b16 %v632, %v628
  %v793 = vpack.c.b16 %v637, %v633
  %v794 = vpack.c.b16 %v638, %v634
  %v795 = vpack.c.b16 %v639, %v635
  %v796 = vpack.c.b16 %v640, %v636
  %v797 = vpack.c.b16 %v645, %v641
  %v798 = vpack.c.b16 %v646, %v642
  %v799 = vpack.c.b16 %v647, %v643
  %v800 = vpack.c.b16 %v648, %v644
  %v801 = vpack.c.b16 %v653, %v649
  %v802 = vpack.c.b16 %v654, %v650
  %v803 = vpack.c.b16 %v655, %v651
  %v804 = vpack.c.b16 %v656, %v652
  %v805 = vpack.c.b16 %v661, %v657
  %v806 = vpack.c.b16 %v662, %v658
  %v807 = vpack.c.b16 %v663, %v659
  %v808 = vpack.c.b16 %v664, %v660
  %v809 = vpack.c.b16 %v669, %v665
  %v810 = vpack.c.b16 %v670, %v666
  %v811 = vpack.c.b16 %v671, %v667
  %v812 = vpack.c.b16 %v672, %v668
  %v813 = vpack.c.b16 %v677, %v673
  %v814 = vpack.c.b16 %v678, %v674
  %v815 = vpack.c.b16 %v679, %v675
  %v816 = vpack.c.b16 %v680, %v676
  %v817 = vpack.c.b16 %v685, %v681
  %v818 = vpack.c.b16 %v686, %v682
  %v819 = vpack.c.b16 %v687, %v683
  %v820 = vpack.c.b16 %v688, %v684
  %v821 = vpack.c.b16 %v693, %v689
  %v822 = vpack.c.b16 %v694, %v690
  %v823 = vpack.c.b16 %v695, %v691
  %v824 = vpack.c.b16 %v696, %v692
  %v825 = vpack.c.b16 %v701, %v697
  %v826 = vpack.c.b16 %v702, %v698
  %v827 = vpack.c.b16 %v703, %v699
  %v828 = vpack.c.b16 %v704, %v700
  %v829 = vpack.c.b16 %v709, %v705
  %v830 = vpack.c.b16 %v710, %v706
  %v831 = vpack.c.b16 %v711, %v707
  %v832 = vpack.c.b16 %v712, %v708
  %v833 = vpack.c.b16 %v717, %v713
  %v834 = vpack.c.b16 %v718, %v714
  %v835 = vpack.c.b16 %v719, %v715
  %v836 = vpack.c.b16 %v720, %v716
  %v837 = vpack.c.b16 %v725, %v721
  %v838 = vpack.c.b16 %v726, %v722
  %v839 = vpack.c.b16 %v727, %v723
  %v840 = vpack.c.b16 %v728, %v724
  %v841 = vpack.c.b16 %v733, %v729
  %v842 = vpack.c.b16 %v734, %v730
  %v843 = vpack.c.b16 %v735, %v731
  %v844 = vpack.c.b16 %v736, %v732
  %v845 = vpack.c.b16 %v741, %v737
  %v846 = vpack.c.b16 %v742, %v738
  %v847 = vpack.c.b16 %v743, %v739
  %v848 = vpack.c.b16 %v744, %v740
  %v849 = vpack.c.b16 %v749, %v745
  %v850 = vpack.c.b16 %v750, %v746
  %v851 = vpack.c.b16 %v751, %v747
  %v852 = vpack.c.b16 %v752, %v748
  %v853 = vpack.c.b16 %v757, %v753
  %v854 = vpack.c.b16 %v758, %v754
  %v855 = vpack.c.b16 %v759, %v755
  %v856 = vpack.c.b16 %v760, %v756
  %953 = vmatprep.subr.bf16.mxu0 %v790
  %954 = vmatpush1.bf16.msra.mxu0 %v789
  %955 = vmatprep.subr.bf16.mxu0 %v786
  %956 = vmatpush1.bf16.msra.mxu0 %v785
  %957 = vmatprep.subr.bf16.mxu0 %v782
  %958 = vmatpush1.bf16.msra.mxu0 %v781
  %959 = vmatprep.subr.bf16.mxu0 %v778
  %960 = vmatpush1.bf16.msra.mxu0 %v777
  %961 = vmatprep.subr.bf16.mxu0 %v774
  %962 = vmatpush1.bf16.msra.mxu0 %v773
  %963 = vmatprep.subr.bf16.mxu0 %v770
  %964 = vmatpush1.bf16.msra.mxu0 %v769
  %965 = vmatprep.subr.bf16.mxu0 %v766
  %966 = vmatpush1.bf16.msra.mxu0 %v765
  %967 = vmatprep.subr.bf16.mxu0 %v762
  %968 = vmatpush1.bf16.msra.mxu0 %v761
  %969 = vmatprep.subr.bf16.mxu0 %v822
  %970 = vmatpush2.bf16.msra.mxu0 %v821
  %971 = vmatprep.subr.bf16.mxu0 %v818
  %972 = vmatpush2.bf16.msra.mxu0 %v817
  %973 = vmatprep.subr.bf16.mxu0 %v814
  %974 = vmatpush2.bf16.msra.mxu0 %v813
  %975 = vmatprep.subr.bf16.mxu0 %v810
  %976 = vmatpush2.bf16.msra.mxu0 %v809
  %977 = vmatprep.subr.bf16.mxu0 %v806
  %978 = vmatpush2.bf16.msra.mxu0 %v805
  %979 = vmatprep.subr.bf16.mxu0 %v802
  %980 = vmatpush2.bf16.msra.mxu0 %v801
  %981 = vmatprep.subr.bf16.mxu0 %v798
  %982 = vmatpush2.bf16.msra.mxu0 %v797
  %983 = vmatprep.subr.bf16.mxu0 %v794
  %984 = vmatpush2.bf16.msra.mxu0 %v793
  %985 = vmatprep.mubr.bf16.mxu0 %v378
  %986 = vmatmul.mubr.bf16.gmra.mxu0 %v377
  %v987 = vpop.f32.mrf.mxu0
  %v988 = vadd.f32 %v200, %v987
  %v989 = vpop.f32.mrf.mxu0
  %v990 = vadd.f32 %v204, %v989
  %v991 = vpop.f32.mrf.mxu0
  %v992 = vadd.f32 %v200, %v991
  %v993 = vpop.f32.mrf.mxu0
  %v994 = vadd.f32 %v204, %v993
  %995 = vmatprep.mubr.bf16.mxu0 %v381
  %996 = vmatmul.mubr.bf16.gmra.mxu0 %v380
  %v997 = vpop.f32.mrf.mxu0
  %v998 = vadd.f32 %v200, %v997
  %v999 = vpop.f32.mrf.mxu0
  %v1000 = vadd.f32 %v204, %v999
  %v1001 = vpop.f32.mrf.mxu0
  %v1002 = vadd.f32 %v200, %v1001
  %v1003 = vpop.f32.mrf.mxu0
  %v1004 = vadd.f32 %v204, %v1003
  %1005 = vmatprep.mubr.bf16.mxu0 %v384
  %1006 = vmatmul.mubr.bf16.gmra.mxu0 %v383
  %v1007 = vpop.f32.mrf.mxu0
  %v1008 = vadd.f32 %v200, %v1007
  %v1009 = vpop.f32.mrf.mxu0
  %v1010 = vadd.f32 %v204, %v1009
  %v1011 = vpop.f32.mrf.mxu0
  %v1012 = vadd.f32 %v200, %v1011
  %v1013 = vpop.f32.mrf.mxu0
  %v1014 = vadd.f32 %v204, %v1013
  %1015 = vmatprep.mubr.bf16.mxu0 %v387
  %1016 = vmatmul.mubr.bf16.gmra.mxu0 %v386
  %v1017 = vpop.f32.mrf.mxu0
  %v1018 = vadd.f32 %v200, %v1017
  %v1019 = vpop.f32.mrf.mxu0
  %v1020 = vadd.f32 %v204, %v1019
  %v1021 = vpop.f32.mrf.mxu0
  %v1022 = vadd.f32 %v200, %v1021
  %v1023 = vpop.f32.mrf.mxu0
  %v1024 = vadd.f32 %v204, %v1023
  %1025 = vmatprep.mubr.bf16.mxu0 %v390
  %1026 = vmatmul.mubr.bf16.gmra.mxu0 %v389
  %v1027 = vpop.f32.mrf.mxu0
  %v1028 = vadd.f32 %v200, %v1027
  %v1029 = vpop.f32.mrf.mxu0
  %v1030 = vadd.f32 %v204, %v1029
  %v1031 = vpop.f32.mrf.mxu0
  %v1032 = vadd.f32 %v200, %v1031
  %v1033 = vpop.f32.mrf.mxu0
  %v1034 = vadd.f32 %v204, %v1033
  %1035 = vmatprep.mubr.bf16.mxu0 %v393
  %1036 = vmatmul.mubr.bf16.gmra.mxu0 %v392
  %v1037 = vpop.f32.mrf.mxu0
  %v1038 = vadd.f32 %v200, %v1037
  %v1039 = vpop.f32.mrf.mxu0
  %v1040 = vadd.f32 %v204, %v1039
  %v1041 = vpop.f32.mrf.mxu0
  %v1042 = vadd.f32 %v200, %v1041
  %v1043 = vpop.f32.mrf.mxu0
  %v1044 = vadd.f32 %v204, %v1043
  %1045 = vmatprep.mubr.bf16.mxu0 %v396
  %1046 = vmatmul.mubr.bf16.gmra.mxu0 %v395
  %v1047 = vpop.f32.mrf.mxu0
  %v1048 = vadd.f32 %v200, %v1047
  %v1049 = vpop.f32.mrf.mxu0
  %v1050 = vadd.f32 %v204, %v1049
  %v1051 = vpop.f32.mrf.mxu0
  %v1052 = vadd.f32 %v200, %v1051
  %v1053 = vpop.f32.mrf.mxu0
  %v1054 = vadd.f32 %v204, %v1053
  %1055 = vmatprep.mubr.bf16.mxu0 %v399
  %1056 = vmatmul.mubr.bf16.gmra.mxu0 %v398
  %v1057 = vpop.f32.mrf.mxu0
  %v1058 = vadd.f32 %v200, %v1057
  %v1059 = vpop.f32.mrf.mxu0
  %v1060 = vadd.f32 %v204, %v1059
  %v1061 = vpop.f32.mrf.mxu0
  %v1062 = vadd.f32 %v200, %v1061
  %v1063 = vpop.f32.mrf.mxu0
  %v1064 = vadd.f32 %v204, %v1063
  %1065 = vmatprep.mubr.bf16.mxu0 %v402
  %1066 = vmatmul.mubr.bf16.gmra.mxu0 %v401
  %v1067 = vpop.f32.mrf.mxu0
  %v1068 = vadd.f32 %v200, %v1067
  %v1069 = vpop.f32.mrf.mxu0
  %v1070 = vadd.f32 %v204, %v1069
  %v1071 = vpop.f32.mrf.mxu0
  %v1072 = vadd.f32 %v200, %v1071
  %v1073 = vpop.f32.mrf.mxu0
  %v1074 = vadd.f32 %v204, %v1073
  %1075 = vmatprep.mubr.bf16.mxu0 %v405
  %1076 = vmatmul.mubr.bf16.gmra.mxu0 %v404
  %v1077 = vpop.f32.mrf.mxu0
  %v1078 = vadd.f32 %v200, %v1077
  %v1079 = vpop.f32.mrf.mxu0
  %v1080 = vadd.f32 %v204, %v1079
  %v1081 = vpop.f32.mrf.mxu0
  %v1082 = vadd.f32 %v200, %v1081
  %v1083 = vpop.f32.mrf.mxu0
  %v1084 = vadd.f32 %v204, %v1083
  %1085 = vmatprep.mubr.bf16.mxu0 %v408
  %1086 = vmatmul.mubr.bf16.gmra.mxu0 %v407
  %v1087 = vpop.f32.mrf.mxu0
  %v1088 = vadd.f32 %v200, %v1087
  %v1089 = vpop.f32.mrf.mxu0
  %v1090 = vadd.f32 %v204, %v1089
  %v1091 = vpop.f32.mrf.mxu0
  %v1092 = vadd.f32 %v200, %v1091
  %v1093 = vpop.f32.mrf.mxu0
  %v1094 = vadd.f32 %v204, %v1093
  %1095 = vmatprep.mubr.bf16.mxu0 %v411
  %1096 = vmatmul.mubr.bf16.gmra.mxu0 %v410
  %v1097 = vpop.f32.mrf.mxu0
  %v1098 = vadd.f32 %v200, %v1097
  %v1099 = vpop.f32.mrf.mxu0
  %v1100 = vadd.f32 %v204, %v1099
  %v1101 = vpop.f32.mrf.mxu0
  %v1102 = vadd.f32 %v200, %v1101
  %v1103 = vpop.f32.mrf.mxu0
  %v1104 = vadd.f32 %v204, %v1103
  %1105 = vmatprep.mubr.bf16.mxu0 %v414
  %1106 = vmatmul.mubr.bf16.gmra.mxu0 %v413
  %v1107 = vpop.f32.mrf.mxu0
  %v1108 = vadd.f32 %v200, %v1107
  %v1109 = vpop.f32.mrf.mxu0
  %v1110 = vadd.f32 %v204, %v1109
  %v1111 = vpop.f32.mrf.mxu0
  %v1112 = vadd.f32 %v200, %v1111
  %v1113 = vpop.f32.mrf.mxu0
  %v1114 = vadd.f32 %v204, %v1113
  %1115 = vmatprep.mubr.bf16.mxu0 %v417
  %1116 = vmatmul.mubr.bf16.gmra.mxu0 %v416
  %v1117 = vpop.f32.mrf.mxu0
  %v1118 = vadd.f32 %v200, %v1117
  %v1119 = vpop.f32.mrf.mxu0
  %v1120 = vadd.f32 %v204, %v1119
  %v1121 = vpop.f32.mrf.mxu0
  %v1122 = vadd.f32 %v200, %v1121
  %v1123 = vpop.f32.mrf.mxu0
  %v1124 = vadd.f32 %v204, %v1123
  %1125 = vmatprep.mubr.bf16.mxu0 %v420
  %1126 = vmatmul.mubr.bf16.gmra.mxu0 %v419
  %v1127 = vpop.f32.mrf.mxu0
  %v1128 = vadd.f32 %v200, %v1127
  %v1129 = vpop.f32.mrf.mxu0
  %v1130 = vadd.f32 %v204, %v1129
  %v1131 = vpop.f32.mrf.mxu0
  %v1132 = vadd.f32 %v200, %v1131
  %v1133 = vpop.f32.mrf.mxu0
  %v1134 = vadd.f32 %v204, %v1133
  %1135 = vmatprep.mubr.bf16.mxu0 %v423
  %1136 = vmatmul.mubr.bf16.gmra.mxu0 %v422
  %v1137 = vpop.f32.mrf.mxu0
  %v1138 = vadd.f32 %v200, %v1137
  %v1139 = vpop.f32.mrf.mxu0
  %v1140 = vadd.f32 %v204, %v1139
  %v1141 = vpop.f32.mrf.mxu0
  %v1142 = vadd.f32 %v200, %v1141
  %v1143 = vpop.f32.mrf.mxu0
  %v1144 = vadd.f32 %v204, %v1143
  %1145 = vdwg.mxu0
  %1146 = vmatprep.subr.bf16.mxu0 %v854
  %1147 = vmatpush1.bf16.msra.mxu0 %v853
  %1148 = vmatprep.subr.bf16.mxu0 %v850
  %1149 = vmatpush1.bf16.msra.mxu0 %v849
  %1150 = vmatprep.subr.bf16.mxu0 %v846
  %1151 = vmatpush1.bf16.msra.mxu0 %v845
  %1152 = vmatprep.subr.bf16.mxu0 %v842
  %1153 = vmatpush1.bf16.msra.mxu0 %v841
  %1154 = vmatprep.subr.bf16.mxu0 %v838
  %1155 = vmatpush1.bf16.msra.mxu0 %v837
  %1156 = vmatprep.subr.bf16.mxu0 %v834
  %1157 = vmatpush1.bf16.msra.mxu0 %v833
  %1158 = vmatprep.subr.bf16.mxu0 %v830
  %1159 = vmatpush1.bf16.msra.mxu0 %v829
  %1160 = vmatprep.subr.bf16.mxu0 %v826
  %1161 = vmatpush1.bf16.msra.mxu0 %v825
  %1162 = vmatprep.subr.bf16.mxu0 0
  %1163 = vmatpush2.bf16.msra.mxu0 0
  %1164 = vmatprep.subr.bf16.mxu0 0
  %1165 = vmatpush2.bf16.msra.mxu0 0
  %1166 = vmatprep.subr.bf16.mxu0 0
  %1167 = vmatpush2.bf16.msra.mxu0 0
  %1168 = vmatprep.subr.bf16.mxu0 0
  %1169 = vmatpush2.bf16.msra.mxu0 0
  %1170 = vmatprep.subr.bf16.mxu0 0
  %1171 = vmatpush2.bf16.msra.mxu0 0
  %1172 = vmatprep.subr.bf16.mxu0 0
  %1173 = vmatpush2.bf16.msra.mxu0 0
  %1174 = vmatprep.subr.bf16.mxu0 0
  %1175 = vmatpush2.bf16.msra.mxu0 0
  %1176 = vmatprep.subr.bf16.mxu0 0
  %1177 = vmatpush2.bf16.msra.mxu0 0
  %1178 = vmatprep.mubr.bf16.mxu0 0
  %1179 = vmatmul.mubr.bf16.gmra.mxu0 %v379
  %v1180 = vpop.f32.mrf.mxu0
  %v1181 = vadd.f32 %v988, %v1180
  %v1182 = vpop.f32.mrf.mxu0
  %v1183 = vadd.f32 %v990, %v1182
  %v1184 = vpop.f32.mrf.mxu0
  %v1185 = vadd.f32 %v992, %v1184
  %v1186 = vpop.f32.mrf.mxu0
  %v1187 = vadd.f32 %v994, %v1186
  %1188 = vmatprep.mubr.bf16.mxu0 0
  %1189 = vmatmul.mubr.bf16.gmra.mxu0 %v382
  %v1190 = vpop.f32.mrf.mxu0
  %v1191 = vadd.f32 %v998, %v1190
  %v1192 = vpop.f32.mrf.mxu0
  %v1193 = vadd.f32 %v1000, %v1192
  %v1194 = vpop.f32.mrf.mxu0
  %v1195 = vadd.f32 %v1002, %v1194
  %v1196 = vpop.f32.mrf.mxu0
  %v1197 = vadd.f32 %v1004, %v1196
  %1198 = vmatprep.mubr.bf16.mxu0 0
  %1199 = vmatmul.mubr.bf16.gmra.mxu0 %v385
  %v1200 = vpop.f32.mrf.mxu0
  %v1201 = vadd.f32 %v1008, %v1200
  %v1202 = vpop.f32.mrf.mxu0
  %v1203 = vadd.f32 %v1010, %v1202
  %v1204 = vpop.f32.mrf.mxu0
  %v1205 = vadd.f32 %v1012, %v1204
  %v1206 = vpop.f32.mrf.mxu0
  %v1207 = vadd.f32 %v1014, %v1206
  %1208 = vmatprep.mubr.bf16.mxu0 0
  %1209 = vmatmul.mubr.bf16.gmra.mxu0 %v388
  %v1210 = vpop.f32.mrf.mxu0
  %v1211 = vadd.f32 %v1018, %v1210
  %v1212 = vpop.f32.mrf.mxu0
  %v1213 = vadd.f32 %v1020, %v1212
  %v1214 = vpop.f32.mrf.mxu0
  %v1215 = vadd.f32 %v1022, %v1214
  %v1216 = vpop.f32.mrf.mxu0
  %v1217 = vadd.f32 %v1024, %v1216
  %1218 = vmatprep.mubr.bf16.mxu0 0
  %1219 = vmatmul.mubr.bf16.gmra.mxu0 %v391
  %v1220 = vpop.f32.mrf.mxu0
  %v1221 = vadd.f32 %v1028, %v1220
  %v1222 = vpop.f32.mrf.mxu0
  %v1223 = vadd.f32 %v1030, %v1222
  %v1224 = vpop.f32.mrf.mxu0
  %v1225 = vadd.f32 %v1032, %v1224
  %v1226 = vpop.f32.mrf.mxu0
  %v1227 = vadd.f32 %v1034, %v1226
  %1228 = vmatprep.mubr.bf16.mxu0 0
  %1229 = vmatmul.mubr.bf16.gmra.mxu0 %v394
  %v1230 = vpop.f32.mrf.mxu0
  %v1231 = vadd.f32 %v1038, %v1230
  %v1232 = vpop.f32.mrf.mxu0
  %v1233 = vadd.f32 %v1040, %v1232
  %v1234 = vpop.f32.mrf.mxu0
  %v1235 = vadd.f32 %v1042, %v1234
  %v1236 = vpop.f32.mrf.mxu0
  %v1237 = vadd.f32 %v1044, %v1236
  %1238 = vmatprep.mubr.bf16.mxu0 0
  %1239 = vmatmul.mubr.bf16.gmra.mxu0 %v397
  %v1240 = vpop.f32.mrf.mxu0
  %v1241 = vadd.f32 %v1048, %v1240
  %v1242 = vpop.f32.mrf.mxu0
  %v1243 = vadd.f32 %v1050, %v1242
  %v1244 = vpop.f32.mrf.mxu0
  %v1245 = vadd.f32 %v1052, %v1244
  %v1246 = vpop.f32.mrf.mxu0
  %v1247 = vadd.f32 %v1054, %v1246
  %1248 = vmatprep.mubr.bf16.mxu0 0
  %1249 = vmatmul.mubr.bf16.gmra.mxu0 %v400
  %v1250 = vpop.f32.mrf.mxu0
  %v1251 = vadd.f32 %v1058, %v1250
  %v1252 = vpop.f32.mrf.mxu0
  %v1253 = vadd.f32 %v1060, %v1252
  %v1254 = vpop.f32.mrf.mxu0
  %v1255 = vadd.f32 %v1062, %v1254
  %v1256 = vpop.f32.mrf.mxu0
  %v1257 = vadd.f32 %v1064, %v1256
  %1258 = vmatprep.mubr.bf16.mxu0 0
  %1259 = vmatmul.mubr.bf16.gmra.mxu0 %v403
  %v1260 = vpop.f32.mrf.mxu0
  %v1261 = vadd.f32 %v1068, %v1260
  %v1262 = vpop.f32.mrf.mxu0
  %v1263 = vadd.f32 %v1070, %v1262
  %v1264 = vpop.f32.mrf.mxu0
  %v1265 = vadd.f32 %v1072, %v1264
  %v1266 = vpop.f32.mrf.mxu0
  %v1267 = vadd.f32 %v1074, %v1266
  %1268 = vmatprep.mubr.bf16.mxu0 0
  %1269 = vmatmul.mubr.bf16.gmra.mxu0 %v406
  %v1270 = vpop.f32.mrf.mxu0
  %v1271 = vadd.f32 %v1078, %v1270
  %v1272 = vpop.f32.mrf.mxu0
  %v1273 = vadd.f32 %v1080, %v1272
  %v1274 = vpop.f32.mrf.mxu0
  %v1275 = vadd.f32 %v1082, %v1274
  %v1276 = vpop.f32.mrf.mxu0
  %v1277 = vadd.f32 %v1084, %v1276
  %1278 = vmatprep.mubr.bf16.mxu0 0
  %1279 = vmatmul.mubr.bf16.gmra.mxu0 %v409
  %v1280 = vpop.f32.mrf.mxu0
  %v1281 = vadd.f32 %v1088, %v1280
  %v1282 = vpop.f32.mrf.mxu0
  %v1283 = vadd.f32 %v1090, %v1282
  %v1284 = vpop.f32.mrf.mxu0
  %v1285 = vadd.f32 %v1092, %v1284
  %v1286 = vpop.f32.mrf.mxu0
  %v1287 = vadd.f32 %v1094, %v1286
  %1288 = vmatprep.mubr.bf16.mxu0 0
  %1289 = vmatmul.mubr.bf16.gmra.mxu0 %v412
  %v1290 = vpop.f32.mrf.mxu0
  %v1291 = vadd.f32 %v1098, %v1290
  %v1292 = vpop.f32.mrf.mxu0
  %v1293 = vadd.f32 %v1100, %v1292
  %v1294 = vpop.f32.mrf.mxu0
  %v1295 = vadd.f32 %v1102, %v1294
  %v1296 = vpop.f32.mrf.mxu0
  %v1297 = vadd.f32 %v1104, %v1296
  %1298 = vmatprep.mubr.bf16.mxu0 0
  %1299 = vmatmul.mubr.bf16.gmra.mxu0 %v415
  %v1300 = vpop.f32.mrf.mxu0
  %v1301 = vadd.f32 %v1108, %v1300
  %v1302 = vpop.f32.mrf.mxu0
  %v1303 = vadd.f32 %v1110, %v1302
  %v1304 = vpop.f32.mrf.mxu0
  %v1305 = vadd.f32 %v1112, %v1304
  %v1306 = vpop.f32.mrf.mxu0
  %v1307 = vadd.f32 %v1114, %v1306
  %1308 = vmatprep.mubr.bf16.mxu0 0
  %1309 = vmatmul.mubr.bf16.gmra.mxu0 %v418
  %v1310 = vpop.f32.mrf.mxu0
  %v1311 = vadd.f32 %v1118, %v1310
  %v1312 = vpop.f32.mrf.mxu0
  %v1313 = vadd.f32 %v1120, %v1312
  %v1314 = vpop.f32.mrf.mxu0
  %v1315 = vadd.f32 %v1122, %v1314
  %v1316 = vpop.f32.mrf.mxu0
  %v1317 = vadd.f32 %v1124, %v1316
  %1318 = vmatprep.mubr.bf16.mxu0 0
  %1319 = vmatmul.mubr.bf16.gmra.mxu0 %v421
  %v1320 = vpop.f32.mrf.mxu0
  %v1321 = vadd.f32 %v1128, %v1320
  %v1322 = vpop.f32.mrf.mxu0
  %v1323 = vadd.f32 %v1130, %v1322
  %v1324 = vpop.f32.mrf.mxu0
  %v1325 = vadd.f32 %v1132, %v1324
  %v1326 = vpop.f32.mrf.mxu0
  %v1327 = vadd.f32 %v1134, %v1326
  %1328 = vmatprep.mubr.bf16.mxu0 0
  %1329 = vmatmul.mubr.bf16.gmra.mxu0 %v424
  %v1330 = vpop.f32.mrf.mxu0
  %v1331 = vadd.f32 %v1138, %v1330
  %v1332 = vpop.f32.mrf.mxu0
  %v1333 = vadd.f32 %v1140, %v1332
  %v1334 = vpop.f32.mrf.mxu0
  %v1335 = vadd.f32 %v1142, %v1334
  %v1336 = vpop.f32.mrf.mxu0
  %v1337 = vadd.f32 %v1144, %v1336
  %1338 = vdwg.mxu0
  %1339 = vmatprep.subr.bf16.mxu0 %v792
  %1340 = vmatpush1.bf16.msra.mxu0 %v791
  %1341 = vmatprep.subr.bf16.mxu0 %v788
  %1342 = vmatpush1.bf16.msra.mxu0 %v787
  %1343 = vmatprep.subr.bf16.mxu0 %v784
  %1344 = vmatpush1.bf16.msra.mxu0 %v783
  %1345 = vmatprep.subr.bf16.mxu0 %v780
  %1346 = vmatpush1.bf16.msra.mxu0 %v779
  %1347 = vmatprep.subr.bf16.mxu0 %v776
  %1348 = vmatpush1.bf16.msra.mxu0 %v775
  %1349 = vmatprep.subr.bf16.mxu0 %v772
  %1350 = vmatpush1.bf16.msra.mxu0 %v771
  %1351 = vmatprep.subr.bf16.mxu0 %v768
  %1352 = vmatpush1.bf16.msra.mxu0 %v767
  %1353 = vmatprep.subr.bf16.mxu0 %v764
  %1354 = vmatpush1.bf16.msra.mxu0 %v763
  %1355 = vmatprep.subr.bf16.mxu0 %v824
  %1356 = vmatpush2.bf16.msra.mxu0 %v823
  %1357 = vmatprep.subr.bf16.mxu0 %v820
  %1358 = vmatpush2.bf16.msra.mxu0 %v819
  %1359 = vmatprep.subr.bf16.mxu0 %v816
  %1360 = vmatpush2.bf16.msra.mxu0 %v815
  %1361 = vmatprep.subr.bf16.mxu0 %v812
  %1362 = vmatpush2.bf16.msra.mxu0 %v811
  %1363 = vmatprep.subr.bf16.mxu0 %v808
  %1364 = vmatpush2.bf16.msra.mxu0 %v807
  %1365 = vmatprep.subr.bf16.mxu0 %v804
  %1366 = vmatpush2.bf16.msra.mxu0 %v803
  %1367 = vmatprep.subr.bf16.mxu0 %v800
  %1368 = vmatpush2.bf16.msra.mxu0 %v799
  %1369 = vmatprep.subr.bf16.mxu0 %v796
  %1370 = vmatpush2.bf16.msra.mxu0 %v795
  %1371 = vmatprep.mubr.bf16.mxu0 %v378
  %1372 = vmatmul.mubr.bf16.gmra.mxu0 %v377
  %v1373 = vpop.f32.mrf.mxu0
  %v1374 = vadd.f32 %v208, %v1373
  %v1375 = vpop.f32.mrf.mxu0
  %v1376 = vadd.f32 %v212, %v1375
  %v1377 = vpop.f32.mrf.mxu0
  %v1378 = vadd.f32 %v208, %v1377
  %v1379 = vpop.f32.mrf.mxu0
  %v1380 = vadd.f32 %v212, %v1379
  %1381 = vmatprep.mubr.bf16.mxu0 %v381
  %1382 = vmatmul.mubr.bf16.gmra.mxu0 %v380
  %v1383 = vpop.f32.mrf.mxu0
  %v1384 = vadd.f32 %v208, %v1383
  %v1385 = vpop.f32.mrf.mxu0
  %v1386 = vadd.f32 %v212, %v1385
  %v1387 = vpop.f32.mrf.mxu0
  %v1388 = vadd.f32 %v208, %v1387
  %v1389 = vpop.f32.mrf.mxu0
  %v1390 = vadd.f32 %v212, %v1389
  %1391 = vmatprep.mubr.bf16.mxu0 %v384
  %1392 = vmatmul.mubr.bf16.gmra.mxu0 %v383
  %v1393 = vpop.f32.mrf.mxu0
  %v1394 = vadd.f32 %v208, %v1393
  %v1395 = vpop.f32.mrf.mxu0
  %v1396 = vadd.f32 %v212, %v1395
  %v1397 = vpop.f32.mrf.mxu0
  %v1398 = vadd.f32 %v208, %v1397
  %v1399 = vpop.f32.mrf.mxu0
  %v1400 = vadd.f32 %v212, %v1399
  %1401 = vmatprep.mubr.bf16.mxu0 %v387
  %1402 = vmatmul.mubr.bf16.gmra.mxu0 %v386
  %v1403 = vpop.f32.mrf.mxu0
  %v1404 = vadd.f32 %v208, %v1403
  %v1405 = vpop.f32.mrf.mxu0
  %v1406 = vadd.f32 %v212, %v1405
  %v1407 = vpop.f32.mrf.mxu0
  %v1408 = vadd.f32 %v208, %v1407
  %v1409 = vpop.f32.mrf.mxu0
  %v1410 = vadd.f32 %v212, %v1409
  %1411 = vmatprep.mubr.bf16.mxu0 %v390
  %1412 = vmatmul.mubr.bf16.gmra.mxu0 %v389
  %v1413 = vpop.f32.mrf.mxu0
  %v1414 = vadd.f32 %v208, %v1413
  %v1415 = vpop.f32.mrf.mxu0
  %v1416 = vadd.f32 %v212, %v1415
  %v1417 = vpop.f32.mrf.mxu0
  %v1418 = vadd.f32 %v208, %v1417
  %v1419 = vpop.f32.mrf.mxu0
  %v1420 = vadd.f32 %v212, %v1419
  %1421 = vmatprep.mubr.bf16.mxu0 %v393
  %1422 = vmatmul.mubr.bf16.gmra.mxu0 %v392
  %v1423 = vpop.f32.mrf.mxu0
  %v1424 = vadd.f32 %v208, %v1423
  %v1425 = vpop.f32.mrf.mxu0
  %v1426 = vadd.f32 %v212, %v1425
  %v1427 = vpop.f32.mrf.mxu0
  %v1428 = vadd.f32 %v208, %v1427
  %v1429 = vpop.f32.mrf.mxu0
  %v1430 = vadd.f32 %v212, %v1429
  %1431 = vmatprep.mubr.bf16.mxu0 %v396
  %1432 = vmatmul.mubr.bf16.gmra.mxu0 %v395
  %v1433 = vpop.f32.mrf.mxu0
  %v1434 = vadd.f32 %v208, %v1433
  %v1435 = vpop.f32.mrf.mxu0
  %v1436 = vadd.f32 %v212, %v1435
  %v1437 = vpop.f32.mrf.mxu0
  %v1438 = vadd.f32 %v208, %v1437
  %v1439 = vpop.f32.mrf.mxu0
  %v1440 = vadd.f32 %v212, %v1439
  %1441 = vmatprep.mubr.bf16.mxu0 %v399
  %1442 = vmatmul.mubr.bf16.gmra.mxu0 %v398
  %v1443 = vpop.f32.mrf.mxu0
  %v1444 = vadd.f32 %v208, %v1443
  %v1445 = vpop.f32.mrf.mxu0
  %v1446 = vadd.f32 %v212, %v1445
  %v1447 = vpop.f32.mrf.mxu0
  %v1448 = vadd.f32 %v208, %v1447
  %v1449 = vpop.f32.mrf.mxu0
  %v1450 = vadd.f32 %v212, %v1449
  %1451 = vmatprep.mubr.bf16.mxu0 %v402
  %1452 = vmatmul.mubr.bf16.gmra.mxu0 %v401
  %v1453 = vpop.f32.mrf.mxu0
  %v1454 = vadd.f32 %v208, %v1453
  %v1455 = vpop.f32.mrf.mxu0
  %v1456 = vadd.f32 %v212, %v1455
  %v1457 = vpop.f32.mrf.mxu0
  %v1458 = vadd.f32 %v208, %v1457
  %v1459 = vpop.f32.mrf.mxu0
  %v1460 = vadd.f32 %v212, %v1459
  %1461 = vmatprep.mubr.bf16.mxu0 %v405
  %1462 = vmatmul.mubr.bf16.gmra.mxu0 %v404
  %v1463 = vpop.f32.mrf.mxu0
  %v1464 = vadd.f32 %v208, %v1463
  %v1465 = vpop.f32.mrf.mxu0
  %v1466 = vadd.f32 %v212, %v1465
  %v1467 = vpop.f32.mrf.mxu0
  %v1468 = vadd.f32 %v208, %v1467
  %v1469 = vpop.f32.mrf.mxu0
  %v1470 = vadd.f32 %v212, %v1469
  %1471 = vmatprep.mubr.bf16.mxu0 %v408
  %1472 = vmatmul.mubr.bf16.gmra.mxu0 %v407
  %v1473 = vpop.f32.mrf.mxu0
  %v1474 = vadd.f32 %v208, %v1473
  %v1475 = vpop.f32.mrf.mxu0
  %v1476 = vadd.f32 %v212, %v1475
  %v1477 = vpop.f32.mrf.mxu0
  %v1478 = vadd.f32 %v208, %v1477
  %v1479 = vpop.f32.mrf.mxu0
  %v1480 = vadd.f32 %v212, %v1479
  %1481 = vmatprep.mubr.bf16.mxu0 %v411
  %1482 = vmatmul.mubr.bf16.gmra.mxu0 %v410
  %v1483 = vpop.f32.mrf.mxu0
  %v1484 = vadd.f32 %v208, %v1483
  %v1485 = vpop.f32.mrf.mxu0
  %v1486 = vadd.f32 %v212, %v1485
  %v1487 = vpop.f32.mrf.mxu0
  %v1488 = vadd.f32 %v208, %v1487
  %v1489 = vpop.f32.mrf.mxu0
  %v1490 = vadd.f32 %v212, %v1489
  %1491 = vmatprep.mubr.bf16.mxu0 %v414
  %1492 = vmatmul.mubr.bf16.gmra.mxu0 %v413
  %v1493 = vpop.f32.mrf.mxu0
  %v1494 = vadd.f32 %v208, %v1493
  %v1495 = vpop.f32.mrf.mxu0
  %v1496 = vadd.f32 %v212, %v1495
  %v1497 = vpop.f32.mrf.mxu0
  %v1498 = vadd.f32 %v208, %v1497
  %v1499 = vpop.f32.mrf.mxu0
  %v1500 = vadd.f32 %v212, %v1499
  %1501 = vmatprep.mubr.bf16.mxu0 %v417
  %1502 = vmatmul.mubr.bf16.gmra.mxu0 %v416
  %v1503 = vpop.f32.mrf.mxu0
  %v1504 = vadd.f32 %v208, %v1503
  %v1505 = vpop.f32.mrf.mxu0
  %v1506 = vadd.f32 %v212, %v1505
  %v1507 = vpop.f32.mrf.mxu0
  %v1508 = vadd.f32 %v208, %v1507
  %v1509 = vpop.f32.mrf.mxu0
  %v1510 = vadd.f32 %v212, %v1509
  %1511 = vmatprep.mubr.bf16.mxu0 %v420
  %1512 = vmatmul.mubr.bf16.gmra.mxu0 %v419
  %v1513 = vpop.f32.mrf.mxu0
  %v1514 = vadd.f32 %v208, %v1513
  %v1515 = vpop.f32.mrf.mxu0
  %v1516 = vadd.f32 %v212, %v1515
  %v1517 = vpop.f32.mrf.mxu0
  %v1518 = vadd.f32 %v208, %v1517
  %v1519 = vpop.f32.mrf.mxu0
  %v1520 = vadd.f32 %v212, %v1519
  %1521 = vmatprep.mubr.bf16.mxu0 %v423
  %1522 = vmatmul.mubr.bf16.gmra.mxu0 %v422
  %v1523 = vpop.f32.mrf.mxu0
  %v1524 = vadd.f32 %v208, %v1523
  %v1525 = vpop.f32.mrf.mxu0
  %v1526 = vadd.f32 %v212, %v1525
  %v1527 = vpop.f32.mrf.mxu0
  %v1528 = vadd.f32 %v208, %v1527
  %v1529 = vpop.f32.mrf.mxu0
  %v1530 = vadd.f32 %v212, %v1529
  %1531 = vdwg.mxu0
  %1532 = vmatprep.subr.bf16.mxu0 %v856
  %1533 = vmatpush1.bf16.msra.mxu0 %v855
  %1534 = vmatprep.subr.bf16.mxu0 %v852
  %1535 = vmatpush1.bf16.msra.mxu0 %v851
  %1536 = vmatprep.subr.bf16.mxu0 %v848
  %1537 = vmatpush1.bf16.msra.mxu0 %v847
  %1538 = vmatprep.subr.bf16.mxu0 %v844
  %1539 = vmatpush1.bf16.msra.mxu0 %v843
  %1540 = vmatprep.subr.bf16.mxu0 %v840
  %1541 = vmatpush1.bf16.msra.mxu0 %v839
  %1542 = vmatprep.subr.bf16.mxu0 %v836
  %1543 = vmatpush1.bf16.msra.mxu0 %v835
  %1544 = vmatprep.subr.bf16.mxu0 %v832
  %1545 = vmatpush1.bf16.msra.mxu0 %v831
  %1546 = vmatprep.subr.bf16.mxu0 %v828
  %1547 = vmatpush1.bf16.msra.mxu0 %v827
  %1548 = vmatprep.subr.bf16.mxu0 0
  %1549 = vmatpush2.bf16.msra.mxu0 0
  %1550 = vmatprep.subr.bf16.mxu0 0
  %1551 = vmatpush2.bf16.msra.mxu0 0
  %1552 = vmatprep.subr.bf16.mxu0 0
  %1553 = vmatpush2.bf16.msra.mxu0 0
  %1554 = vmatprep.subr.bf16.mxu0 0
  %1555 = vmatpush2.bf16.msra.mxu0 0
  %1556 = vmatprep.subr.bf16.mxu0 0
  %1557 = vmatpush2.bf16.msra.mxu0 0
  %1558 = vmatprep.subr.bf16.mxu0 0
  %1559 = vmatpush2.bf16.msra.mxu0 0
  %1560 = vmatprep.subr.bf16.mxu0 0
  %1561 = vmatpush2.bf16.msra.mxu0 0
  %1562 = vmatprep.subr.bf16.mxu0 0
  %1563 = vmatpush2.bf16.msra.mxu0 0
  %1564 = vmatprep.mubr.bf16.mxu0 0
  %1565 = vmatmul.mubr.bf16.gmra.mxu0 %v379
  %v1566 = vpop.f32.mrf.mxu0
  %v1567 = vadd.f32 %v1374, %v1566
  %v1568 = vpop.f32.mrf.mxu0
  %v1569 = vadd.f32 %v1376, %v1568
  %v1570 = vpop.f32.mrf.mxu0
  %v1571 = vadd.f32 %v1378, %v1570
  %v1572 = vpop.f32.mrf.mxu0
  %v1573 = vadd.f32 %v1380, %v1572
  %1574 = vmatprep.mubr.bf16.mxu0 0
  %1575 = vmatmul.mubr.bf16.gmra.mxu0 %v382
  %v1576 = vpop.f32.mrf.mxu0
  %v1577 = vadd.f32 %v1384, %v1576
  %v1578 = vpop.f32.mrf.mxu0
  %v1579 = vadd.f32 %v1386, %v1578
  %v1580 = vpop.f32.mrf.mxu0
  %v1581 = vadd.f32 %v1388, %v1580
  %v1582 = vpop.f32.mrf.mxu0
  %v1583 = vadd.f32 %v1390, %v1582
  %1584 = vmatprep.mubr.bf16.mxu0 0
  %1585 = vmatmul.mubr.bf16.gmra.mxu0 %v385
  %v1586 = vpop.f32.mrf.mxu0
  %v1587 = vadd.f32 %v1394, %v1586
  %v1588 = vpop.f32.mrf.mxu0
  %v1589 = vadd.f32 %v1396, %v1588
  %v1590 = vpop.f32.mrf.mxu0
  %v1591 = vadd.f32 %v1398, %v1590
  %v1592 = vpop.f32.mrf.mxu0
  %v1593 = vadd.f32 %v1400, %v1592
  %1594 = vmatprep.mubr.bf16.mxu0 0
  %1595 = vmatmul.mubr.bf16.gmra.mxu0 %v388
  %v1596 = vpop.f32.mrf.mxu0
  %v1597 = vadd.f32 %v1404, %v1596
  %v1598 = vpop.f32.mrf.mxu0
  %v1599 = vadd.f32 %v1406, %v1598
  %v1600 = vpop.f32.mrf.mxu0
  %v1601 = vadd.f32 %v1408, %v1600
  %v1602 = vpop.f32.mrf.mxu0
  %v1603 = vadd.f32 %v1410, %v1602
  %1604 = vmatprep.mubr.bf16.mxu0 0
  %1605 = vmatmul.mubr.bf16.gmra.mxu0 %v391
  %v1606 = vpop.f32.mrf.mxu0
  %v1607 = vadd.f32 %v1414, %v1606
  %v1608 = vpop.f32.mrf.mxu0
  %v1609 = vadd.f32 %v1416, %v1608
  %v1610 = vpop.f32.mrf.mxu0
  %v1611 = vadd.f32 %v1418, %v1610
  %v1612 = vpop.f32.mrf.mxu0
  %v1613 = vadd.f32 %v1420, %v1612
  %1614 = vmatprep.mubr.bf16.mxu0 0
  %1615 = vmatmul.mubr.bf16.gmra.mxu0 %v394
  %v1616 = vpop.f32.mrf.mxu0
  %v1617 = vadd.f32 %v1424, %v1616
  %v1618 = vpop.f32.mrf.mxu0
  %v1619 = vadd.f32 %v1426, %v1618
  %v1620 = vpop.f32.mrf.mxu0
  %v1621 = vadd.f32 %v1428, %v1620
  %v1622 = vpop.f32.mrf.mxu0
  %v1623 = vadd.f32 %v1430, %v1622
  %1624 = vmatprep.mubr.bf16.mxu0 0
  %1625 = vmatmul.mubr.bf16.gmra.mxu0 %v397
  %v1626 = vpop.f32.mrf.mxu0
  %v1627 = vadd.f32 %v1434, %v1626
  %v1628 = vpop.f32.mrf.mxu0
  %v1629 = vadd.f32 %v1436, %v1628
  %v1630 = vpop.f32.mrf.mxu0
  %v1631 = vadd.f32 %v1438, %v1630
  %v1632 = vpop.f32.mrf.mxu0
  %v1633 = vadd.f32 %v1440, %v1632
  %1634 = vmatprep.mubr.bf16.mxu0 0
  %1635 = vmatmul.mubr.bf16.gmra.mxu0 %v400
  %v1636 = vpop.f32.mrf.mxu0
  %v1637 = vadd.f32 %v1444, %v1636
  %v1638 = vpop.f32.mrf.mxu0
  %v1639 = vadd.f32 %v1446, %v1638
  %v1640 = vpop.f32.mrf.mxu0
  %v1641 = vadd.f32 %v1448, %v1640
  %v1642 = vpop.f32.mrf.mxu0
  %v1643 = vadd.f32 %v1450, %v1642
  %1644 = vmatprep.mubr.bf16.mxu0 0
  %1645 = vmatmul.mubr.bf16.gmra.mxu0 %v403
  %v1646 = vpop.f32.mrf.mxu0
  %v1647 = vadd.f32 %v1454, %v1646
  %v1648 = vpop.f32.mrf.mxu0
  %v1649 = vadd.f32 %v1456, %v1648
  %v1650 = vpop.f32.mrf.mxu0
  %v1651 = vadd.f32 %v1458, %v1650
  %v1652 = vpop.f32.mrf.mxu0
  %v1653 = vadd.f32 %v1460, %v1652
  %1654 = vmatprep.mubr.bf16.mxu0 0
  %1655 = vmatmul.mubr.bf16.gmra.mxu0 %v406
  %v1656 = vpop.f32.mrf.mxu0
  %v1657 = vadd.f32 %v1464, %v1656
  %v1658 = vpop.f32.mrf.mxu0
  %v1659 = vadd.f32 %v1466, %v1658
  %v1660 = vpop.f32.mrf.mxu0
  %v1661 = vadd.f32 %v1468, %v1660
  %v1662 = vpop.f32.mrf.mxu0
  %v1663 = vadd.f32 %v1470, %v1662
  %1664 = vmatprep.mubr.bf16.mxu0 0
  %1665 = vmatmul.mubr.bf16.gmra.mxu0 %v409
  %v1666 = vpop.f32.mrf.mxu0
  %v1667 = vadd.f32 %v1474, %v1666
  %v1668 = vpop.f32.mrf.mxu0
  %v1669 = vadd.f32 %v1476, %v1668
  %v1670 = vpop.f32.mrf.mxu0
  %v1671 = vadd.f32 %v1478, %v1670
  %v1672 = vpop.f32.mrf.mxu0
  %v1673 = vadd.f32 %v1480, %v1672
  %1674 = vmatprep.mubr.bf16.mxu0 0
  %1675 = vmatmul.mubr.bf16.gmra.mxu0 %v412
  %v1676 = vpop.f32.mrf.mxu0
  %v1677 = vadd.f32 %v1484, %v1676
  %v1678 = vpop.f32.mrf.mxu0
  %v1679 = vadd.f32 %v1486, %v1678
  %v1680 = vpop.f32.mrf.mxu0
  %v1681 = vadd.f32 %v1488, %v1680
  %v1682 = vpop.f32.mrf.mxu0
  %v1683 = vadd.f32 %v1490, %v1682
  %1684 = vmatprep.mubr.bf16.mxu0 0
  %1685 = vmatmul.mubr.bf16.gmra.mxu0 %v415
  %v1686 = vpop.f32.mrf.mxu0
  %v1687 = vadd.f32 %v1494, %v1686
  %v1688 = vpop.f32.mrf.mxu0
  %v1689 = vadd.f32 %v1496, %v1688
  %v1690 = vpop.f32.mrf.mxu0
  %v1691 = vadd.f32 %v1498, %v1690
  %v1692 = vpop.f32.mrf.mxu0
  %v1693 = vadd.f32 %v1500, %v1692
  %1694 = vmatprep.mubr.bf16.mxu0 0
  %1695 = vmatmul.mubr.bf16.gmra.mxu0 %v418
  %v1696 = vpop.f32.mrf.mxu0
  %v1697 = vadd.f32 %v1504, %v1696
  %v1698 = vpop.f32.mrf.mxu0
  %v1699 = vadd.f32 %v1506, %v1698
  %v1700 = vpop.f32.mrf.mxu0
  %v1701 = vadd.f32 %v1508, %v1700
  %v1702 = vpop.f32.mrf.mxu0
  %v1703 = vadd.f32 %v1510, %v1702
  %1704 = vmatprep.mubr.bf16.mxu0 0
  %1705 = vmatmul.mubr.bf16.gmra.mxu0 %v421
  %v1706 = vpop.f32.mrf.mxu0
  %v1707 = vadd.f32 %v1514, %v1706
  %v1708 = vpop.f32.mrf.mxu0
  %v1709 = vadd.f32 %v1516, %v1708
  %v1710 = vpop.f32.mrf.mxu0
  %v1711 = vadd.f32 %v1518, %v1710
  %v1712 = vpop.f32.mrf.mxu0
  %v1713 = vadd.f32 %v1520, %v1712
  %1714 = vmatprep.mubr.bf16.mxu0 0
  %1715 = vmatmul.mubr.bf16.gmra.mxu0 %v424
  %v1716 = vpop.f32.mrf.mxu0
  %v1717 = vadd.f32 %v1524, %v1716
  %v1718 = vpop.f32.mrf.mxu0
  %v1719 = vadd.f32 %v1526, %v1718
  %v1720 = vpop.f32.mrf.mxu0
  %v1721 = vadd.f32 %v1528, %v1720
  %v1722 = vpop.f32.mrf.mxu0
  %v1723 = vadd.f32 %v1530, %v1722
  %1724 = vdwg.mxu0
  %vm1725 = vcmp.gt.f32.partialorder %v1181, 0.0
  %vm1726 = vcmp.gt.f32.partialorder %v1183, 0.0
  %vm1727 = vcmp.gt.f32.partialorder %v1567, 0.0
  %vm1728 = vcmp.gt.f32.partialorder %v1569, 0.0
  %vm1729 = vcmp.gt.f32.partialorder %v1185, 0.0
  %vm1730 = vcmp.gt.f32.partialorder %v1187, 0.0
  %vm1731 = vcmp.gt.f32.partialorder %v1571, 0.0
  %vm1732 = vcmp.gt.f32.partialorder %v1573, 0.0
  %vm1733 = vcmp.gt.f32.partialorder %v1191, 0.0
  %vm1734 = vcmp.gt.f32.partialorder %v1193, 0.0
  %vm1735 = vcmp.gt.f32.partialorder %v1577, 0.0
  %vm1736 = vcmp.gt.f32.partialorder %v1579, 0.0
  %vm1737 = vcmp.gt.f32.partialorder %v1195, 0.0
  %vm1738 = vcmp.gt.f32.partialorder %v1197, 0.0
  %vm1739 = vcmp.gt.f32.partialorder %v1581, 0.0
  %vm1740 = vcmp.gt.f32.partialorder %v1583, 0.0
  %vm1741 = vcmp.gt.f32.partialorder %v1201, 0.0
  %vm1742 = vcmp.gt.f32.partialorder %v1203, 0.0
  %vm1743 = vcmp.gt.f32.partialorder %v1587, 0.0
  %vm1744 = vcmp.gt.f32.partialorder %v1589, 0.0
  %vm1745 = vcmp.gt.f32.partialorder %v1205, 0.0
  %vm1746 = vcmp.gt.f32.partialorder %v1207, 0.0
  %vm1747 = vcmp.gt.f32.partialorder %v1591, 0.0
  %vm1748 = vcmp.gt.f32.partialorder %v1593, 0.0
  %vm1749 = vcmp.gt.f32.partialorder %v1211, 0.0
  %vm1750 = vcmp.gt.f32.partialorder %v1213, 0.0
  %vm1751 = vcmp.gt.f32.partialorder %v1597, 0.0
  %vm1752 = vcmp.gt.f32.partialorder %v1599, 0.0
  %vm1753 = vcmp.gt.f32.partialorder %v1215, 0.0
  %vm1754 = vcmp.gt.f32.partialorder %v1217, 0.0
  %vm1755 = vcmp.gt.f32.partialorder %v1601, 0.0
  %vm1756 = vcmp.gt.f32.partialorder %v1603, 0.0
  %vm1757 = vcmp.gt.f32.partialorder %v1221, 0.0
  %vm1758 = vcmp.gt.f32.partialorder %v1223, 0.0
  %vm1759 = vcmp.gt.f32.partialorder %v1607, 0.0
  %vm1760 = vcmp.gt.f32.partialorder %v1609, 0.0
  %vm1761 = vcmp.gt.f32.partialorder %v1225, 0.0
  %vm1762 = vcmp.gt.f32.partialorder %v1227, 0.0
  %vm1763 = vcmp.gt.f32.partialorder %v1611, 0.0
  %vm1764 = vcmp.gt.f32.partialorder %v1613, 0.0
  %vm1765 = vcmp.gt.f32.partialorder %v1231, 0.0
  %vm1766 = vcmp.gt.f32.partialorder %v1233, 0.0
  %vm1767 = vcmp.gt.f32.partialorder %v1617, 0.0
  %vm1768 = vcmp.gt.f32.partialorder %v1619, 0.0
  %vm1769 = vcmp.gt.f32.partialorder %v1235, 0.0
  %vm1770 = vcmp.gt.f32.partialorder %v1237, 0.0
  %vm1771 = vcmp.gt.f32.partialorder %v1621, 0.0
  %vm1772 = vcmp.gt.f32.partialorder %v1623, 0.0
  %vm1773 = vcmp.gt.f32.partialorder %v1241, 0.0
  %vm1774 = vcmp.gt.f32.partialorder %v1243, 0.0
  %vm1775 = vcmp.gt.f32.partialorder %v1627, 0.0
  %vm1776 = vcmp.gt.f32.partialorder %v1629, 0.0
  %vm1777 = vcmp.gt.f32.partialorder %v1245, 0.0
  %vm1778 = vcmp.gt.f32.partialorder %v1247, 0.0
  %vm1779 = vcmp.gt.f32.partialorder %v1631, 0.0
  %vm1780 = vcmp.gt.f32.partialorder %v1633, 0.0
  %vm1781 = vcmp.gt.f32.partialorder %v1251, 0.0
  %vm1782 = vcmp.gt.f32.partialorder %v1253, 0.0
  %vm1783 = vcmp.gt.f32.partialorder %v1637, 0.0
  %vm1784 = vcmp.gt.f32.partialorder %v1639, 0.0
  %vm1785 = vcmp.gt.f32.partialorder %v1255, 0.0
  %vm1786 = vcmp.gt.f32.partialorder %v1257, 0.0
  %vm1787 = vcmp.gt.f32.partialorder %v1641, 0.0
  %vm1788 = vcmp.gt.f32.partialorder %v1643, 0.0
  %vm1789 = vcmp.gt.f32.partialorder %v1261, 0.0
  %vm1790 = vcmp.gt.f32.partialorder %v1263, 0.0
  %vm1791 = vcmp.gt.f32.partialorder %v1647, 0.0
  %vm1792 = vcmp.gt.f32.partialorder %v1649, 0.0
  %vm1793 = vcmp.gt.f32.partialorder %v1265, 0.0
  %vm1794 = vcmp.gt.f32.partialorder %v1267, 0.0
  %vm1795 = vcmp.gt.f32.partialorder %v1651, 0.0
  %vm1796 = vcmp.gt.f32.partialorder %v1653, 0.0
  %vm1797 = vcmp.gt.f32.partialorder %v1271, 0.0
  %vm1798 = vcmp.gt.f32.partialorder %v1273, 0.0
  %vm1799 = vcmp.gt.f32.partialorder %v1657, 0.0
  %vm1800 = vcmp.gt.f32.partialorder %v1659, 0.0
  %vm1801 = vcmp.gt.f32.partialorder %v1275, 0.0
  %vm1802 = vcmp.gt.f32.partialorder %v1277, 0.0
  %vm1803 = vcmp.gt.f32.partialorder %v1661, 0.0
  %vm1804 = vcmp.gt.f32.partialorder %v1663, 0.0
  %vm1805 = vcmp.gt.f32.partialorder %v1281, 0.0
  %vm1806 = vcmp.gt.f32.partialorder %v1283, 0.0
  %vm1807 = vcmp.gt.f32.partialorder %v1667, 0.0
  %vm1808 = vcmp.gt.f32.partialorder %v1669, 0.0
  %vm1809 = vcmp.gt.f32.partialorder %v1285, 0.0
  %vm1810 = vcmp.gt.f32.partialorder %v1287, 0.0
  %vm1811 = vcmp.gt.f32.partialorder %v1671, 0.0
  %vm1812 = vcmp.gt.f32.partialorder %v1673, 0.0
  %vm1813 = vcmp.gt.f32.partialorder %v1291, 0.0
  %vm1814 = vcmp.gt.f32.partialorder %v1293, 0.0
  %vm1815 = vcmp.gt.f32.partialorder %v1677, 0.0
  %vm1816 = vcmp.gt.f32.partialorder %v1679, 0.0
  %vm1817 = vcmp.gt.f32.partialorder %v1295, 0.0
  %vm1818 = vcmp.gt.f32.partialorder %v1297, 0.0
  %vm1819 = vcmp.gt.f32.partialorder %v1681, 0.0
  %vm1820 = vcmp.gt.f32.partialorder %v1683, 0.0
  %vm1821 = vcmp.gt.f32.partialorder %v1301, 0.0
  %vm1822 = vcmp.gt.f32.partialorder %v1303, 0.0
  %vm1823 = vcmp.gt.f32.partialorder %v1687, 0.0
  %vm1824 = vcmp.gt.f32.partialorder %v1689, 0.0
  %vm1825 = vcmp.gt.f32.partialorder %v1305, 0.0
  %vm1826 = vcmp.gt.f32.partialorder %v1307, 0.0
  %vm1827 = vcmp.gt.f32.partialorder %v1691, 0.0
  %vm1828 = vcmp.gt.f32.partialorder %v1693, 0.0
  %vm1829 = vcmp.gt.f32.partialorder %v1311, 0.0
  %vm1830 = vcmp.gt.f32.partialorder %v1313, 0.0
  %vm1831 = vcmp.gt.f32.partialorder %v1697, 0.0
  %vm1832 = vcmp.gt.f32.partialorder %v1699, 0.0
  %vm1833 = vcmp.gt.f32.partialorder %v1315, 0.0
  %vm1834 = vcmp.gt.f32.partialorder %v1317, 0.0
  %vm1835 = vcmp.gt.f32.partialorder %v1701, 0.0
  %vm1836 = vcmp.gt.f32.partialorder %v1703, 0.0
  %vm1837 = vcmp.gt.f32.partialorder %v1321, 0.0
  %vm1838 = vcmp.gt.f32.partialorder %v1323, 0.0
  %vm1839 = vcmp.gt.f32.partialorder %v1707, 0.0
  %vm1840 = vcmp.gt.f32.partialorder %v1709, 0.0
  %vm1841 = vcmp.gt.f32.partialorder %v1325, 0.0
  %vm1842 = vcmp.gt.f32.partialorder %v1327, 0.0
  %vm1843 = vcmp.gt.f32.partialorder %v1711, 0.0
  %vm1844 = vcmp.gt.f32.partialorder %v1713, 0.0
  %vm1845 = vcmp.gt.f32.partialorder %v1331, 0.0
  %vm1846 = vcmp.gt.f32.partialorder %v1333, 0.0
  %vm1847 = vcmp.gt.f32.partialorder %v1717, 0.0
  %vm1848 = vcmp.gt.f32.partialorder %v1719, 0.0
  %vm1849 = vcmp.gt.f32.partialorder %v1335, 0.0
  %vm1850 = vcmp.gt.f32.partialorder %v1337, 0.0
  %vm1851 = vcmp.gt.f32.partialorder %v1721, 0.0
  %vm1852 = vcmp.gt.f32.partialorder %v1723, 0.0
  %v1853 = vmul.f32 %v1181, 0.2
  %v1854 = vmul.f32 %v1183, 0.2
  %v1855 = vmul.f32 %v1567, 0.2
  %v1856 = vmul.f32 %v1569, 0.2
  %v1857 = vmul.f32 %v1185, 0.2
  %v1858 = vmul.f32 %v1187, 0.2
  %v1859 = vmul.f32 %v1571, 0.2
  %v1860 = vmul.f32 %v1573, 0.2
  %v1861 = vmul.f32 %v1191, 0.2
  %v1862 = vmul.f32 %v1193, 0.2
  %v1863 = vmul.f32 %v1577, 0.2
  %v1864 = vmul.f32 %v1579, 0.2
  %v1865 = vmul.f32 %v1195, 0.2
  %v1866 = vmul.f32 %v1197, 0.2
  %v1867 = vmul.f32 %v1581, 0.2
  %v1868 = vmul.f32 %v1583, 0.2
  %v1869 = vmul.f32 %v1201, 0.2
  %v1870 = vmul.f32 %v1203, 0.2
  %v1871 = vmul.f32 %v1587, 0.2
  %v1872 = vmul.f32 %v1589, 0.2
  %v1873 = vmul.f32 %v1205, 0.2
  %v1874 = vmul.f32 %v1207, 0.2
  %v1875 = vmul.f32 %v1591, 0.2
  %v1876 = vmul.f32 %v1593, 0.2
  %v1877 = vmul.f32 %v1211, 0.2
  %v1878 = vmul.f32 %v1213, 0.2
  %v1879 = vmul.f32 %v1597, 0.2
  %v1880 = vmul.f32 %v1599, 0.2
  %v1881 = vmul.f32 %v1215, 0.2
  %v1882 = vmul.f32 %v1217, 0.2
  %v1883 = vmul.f32 %v1601, 0.2
  %v1884 = vmul.f32 %v1603, 0.2
  %v1885 = vmul.f32 %v1221, 0.2
  %v1886 = vmul.f32 %v1223, 0.2
  %v1887 = vmul.f32 %v1607, 0.2
  %v1888 = vmul.f32 %v1609, 0.2
  %v1889 = vmul.f32 %v1225, 0.2
  %v1890 = vmul.f32 %v1227, 0.2
  %v1891 = vmul.f32 %v1611, 0.2
  %v1892 = vmul.f32 %v1613, 0.2
  %v1893 = vmul.f32 %v1231, 0.2
  %v1894 = vmul.f32 %v1233, 0.2
  %v1895 = vmul.f32 %v1617, 0.2
  %v1896 = vmul.f32 %v1619, 0.2
  %v1897 = vmul.f32 %v1235, 0.2
  %v1898 = vmul.f32 %v1237, 0.2
  %v1899 = vmul.f32 %v1621, 0.2
  %v1900 = vmul.f32 %v1623, 0.2
  %v1901 = vmul.f32 %v1241, 0.2
  %v1902 = vmul.f32 %v1243, 0.2
  %v1903 = vmul.f32 %v1627, 0.2
  %v1904 = vmul.f32 %v1629, 0.2
  %v1905 = vmul.f32 %v1245, 0.2
  %v1906 = vmul.f32 %v1247, 0.2
  %v1907 = vmul.f32 %v1631, 0.2
  %v1908 = vmul.f32 %v1633, 0.2
  %v1909 = vmul.f32 %v1251, 0.2
  %v1910 = vmul.f32 %v1253, 0.2
  %v1911 = vmul.f32 %v1637, 0.2
  %v1912 = vmul.f32 %v1639, 0.2
  %v1913 = vmul.f32 %v1255, 0.2
  %v1914 = vmul.f32 %v1257, 0.2
  %v1915 = vmul.f32 %v1641, 0.2
  %v1916 = vmul.f32 %v1643, 0.2
  %v1917 = vmul.f32 %v1261, 0.2
  %v1918 = vmul.f32 %v1263, 0.2
  %v1919 = vmul.f32 %v1647, 0.2
  %v1920 = vmul.f32 %v1649, 0.2
  %v1921 = vmul.f32 %v1265, 0.2
  %v1922 = vmul.f32 %v1267, 0.2
  %v1923 = vmul.f32 %v1651, 0.2
  %v1924 = vmul.f32 %v1653, 0.2
  %v1925 = vmul.f32 %v1271, 0.2
  %v1926 = vmul.f32 %v1273, 0.2
  %v1927 = vmul.f32 %v1657, 0.2
  %v1928 = vmul.f32 %v1659, 0.2
  %v1929 = vmul.f32 %v1275, 0.2
  %v1930 = vmul.f32 %v1277, 0.2
  %v1931 = vmul.f32 %v1661, 0.2
  %v1932 = vmul.f32 %v1663, 0.2
  %v1933 = vmul.f32 %v1281, 0.2
  %v1934 = vmul.f32 %v1283, 0.2
  %v1935 = vmul.f32 %v1667, 0.2
  %v1936 = vmul.f32 %v1669, 0.2
  %v1937 = vmul.f32 %v1285, 0.2
  %v1938 = vmul.f32 %v1287, 0.2
  %v1939 = vmul.f32 %v1671, 0.2
  %v1940 = vmul.f32 %v1673, 0.2
  %v1941 = vmul.f32 %v1291, 0.2
  %v1942 = vmul.f32 %v1293, 0.2
  %v1943 = vmul.f32 %v1677, 0.2
  %v1944 = vmul.f32 %v1679, 0.2
  %v1945 = vmul.f32 %v1295, 0.2
  %v1946 = vmul.f32 %v1297, 0.2
  %v1947 = vmul.f32 %v1681, 0.2
  %v1948 = vmul.f32 %v1683, 0.2
  %v1949 = vmul.f32 %v1301, 0.2
  %v1950 = vmul.f32 %v1303, 0.2
  %v1951 = vmul.f32 %v1687, 0.2
  %v1952 = vmul.f32 %v1689, 0.2
  %v1953 = vmul.f32 %v1305, 0.2
  %v1954 = vmul.f32 %v1307, 0.2
  %v1955 = vmul.f32 %v1691, 0.2
  %v1956 = vmul.f32 %v1693, 0.2
  %v1957 = vmul.f32 %v1311, 0.2
  %v1958 = vmul.f32 %v1313, 0.2
  %v1959 = vmul.f32 %v1697, 0.2
  %v1960 = vmul.f32 %v1699, 0.2
  %v1961 = vmul.f32 %v1315, 0.2
  %v1962 = vmul.f32 %v1317, 0.2
  %v1963 = vmul.f32 %v1701, 0.2
  %v1964 = vmul.f32 %v1703, 0.2
  %v1965 = vmul.f32 %v1321, 0.2
  %v1966 = vmul.f32 %v1323, 0.2
  %v1967 = vmul.f32 %v1707, 0.2
  %v1968 = vmul.f32 %v1709, 0.2
  %v1969 = vmul.f32 %v1325, 0.2
  %v1970 = vmul.f32 %v1327, 0.2
  %v1971 = vmul.f32 %v1711, 0.2
  %v1972 = vmul.f32 %v1713, 0.2
  %v1973 = vmul.f32 %v1331, 0.2
  %v1974 = vmul.f32 %v1333, 0.2
  %v1975 = vmul.f32 %v1717, 0.2
  %v1976 = vmul.f32 %v1719, 0.2
  %v1977 = vmul.f32 %v1335, 0.2
  %v1978 = vmul.f32 %v1337, 0.2
  %v1979 = vmul.f32 %v1721, 0.2
  %v1980 = vmul.f32 %v1723, 0.2
  %v1981 = vsel %vm1725, %v1181, %v1853
  %v1982 = vsel %vm1726, %v1183, %v1854
  %v1983 = vsel %vm1727, %v1567, %v1855
  %v1984 = vsel %vm1728, %v1569, %v1856
  %v1985 = vsel %vm1729, %v1185, %v1857
  %v1986 = vsel %vm1730, %v1187, %v1858
  %v1987 = vsel %vm1731, %v1571, %v1859
  %v1988 = vsel %vm1732, %v1573, %v1860
  %v1989 = vsel %vm1733, %v1191, %v1861
  %v1990 = vsel %vm1734, %v1193, %v1862
  %v1991 = vsel %vm1735, %v1577, %v1863
  %v1992 = vsel %vm1736, %v1579, %v1864
  %v1993 = vsel %vm1737, %v1195, %v1865
  %v1994 = vsel %vm1738, %v1197, %v1866
  %v1995 = vsel %vm1739, %v1581, %v1867
  %v1996 = vsel %vm1740, %v1583, %v1868
  %v1997 = vsel %vm1741, %v1201, %v1869
  %v1998 = vsel %vm1742, %v1203, %v1870
  %v1999 = vsel %vm1743, %v1587, %v1871
  %v2000 = vsel %vm1744, %v1589, %v1872
  %v2001 = vsel %vm1745, %v1205, %v1873
  %v2002 = vsel %vm1746, %v1207, %v1874
  %v2003 = vsel %vm1747, %v1591, %v1875
  %v2004 = vsel %vm1748, %v1593, %v1876
  %v2005 = vsel %vm1749, %v1211, %v1877
  %v2006 = vsel %vm1750, %v1213, %v1878
  %v2007 = vsel %vm1751, %v1597, %v1879
  %v2008 = vsel %vm1752, %v1599, %v1880
  %v2009 = vsel %vm1753, %v1215, %v1881
  %v2010 = vsel %vm1754, %v1217, %v1882
  %v2011 = vsel %vm1755, %v1601, %v1883
  %v2012 = vsel %vm1756, %v1603, %v1884
  %v2013 = vsel %vm1757, %v1221, %v1885
  %v2014 = vsel %vm1758, %v1223, %v1886
  %v2015 = vsel %vm1759, %v1607, %v1887
  %v2016 = vsel %vm1760, %v1609, %v1888
  %v2017 = vsel %vm1761, %v1225, %v1889
  %v2018 = vsel %vm1762, %v1227, %v1890
  %v2019 = vsel %vm1763, %v1611, %v1891
  %v2020 = vsel %vm1764, %v1613, %v1892
  %v2021 = vsel %vm1765, %v1231, %v1893
  %v2022 = vsel %vm1766, %v1233, %v1894
  %v2023 = vsel %vm1767, %v1617, %v1895
  %v2024 = vsel %vm1768, %v1619, %v1896
  %v2025 = vsel %vm1769, %v1235, %v1897
  %v2026 = vsel %vm1770, %v1237, %v1898
  %v2027 = vsel %vm1771, %v1621, %v1899
  %v2028 = vsel %vm1772, %v1623, %v1900
  %v2029 = vsel %vm1773, %v1241, %v1901
  %v2030 = vsel %vm1774, %v1243, %v1902
  %v2031 = vsel %vm1775, %v1627, %v1903
  %v2032 = vsel %vm1776, %v1629, %v1904
  %v2033 = vsel %vm1777, %v1245, %v1905
  %v2034 = vsel %vm1778, %v1247, %v1906
  %v2035 = vsel %vm1779, %v1631, %v1907
  %v2036 = vsel %vm1780, %v1633, %v1908
  %v2037 = vsel %vm1781, %v1251, %v1909
  %v2038 = vsel %vm1782, %v1253, %v1910
  %v2039 = vsel %vm1783, %v1637, %v1911
  %v2040 = vsel %vm1784, %v1639, %v1912
  %v2041 = vsel %vm1785, %v1255, %v1913
  %v2042 = vsel %vm1786, %v1257, %v1914
  %v2043 = vsel %vm1787, %v1641, %v1915
  %v2044 = vsel %vm1788, %v1643, %v1916
  %v2045 = vsel %vm1789, %v1261, %v1917
  %v2046 = vsel %vm1790, %v1263, %v1918
  %v2047 = vsel %vm1791, %v1647, %v1919
  %v2048 = vsel %vm1792, %v1649, %v1920
  %v2049 = vsel %vm1793, %v1265, %v1921
  %v2050 = vsel %vm1794, %v1267, %v1922
  %v2051 = vsel %vm1795, %v1651, %v1923
  %v2052 = vsel %vm1796, %v1653, %v1924
  %v2053 = vsel %vm1797, %v1271, %v1925
  %v2054 = vsel %vm1798, %v1273, %v1926
  %v2055 = vsel %vm1799, %v1657, %v1927
  %v2056 = vsel %vm1800, %v1659, %v1928
  %v2057 = vsel %vm1801, %v1275, %v1929
  %v2058 = vsel %vm1802, %v1277, %v1930
  %v2059 = vsel %vm1803, %v1661, %v1931
  %v2060 = vsel %vm1804, %v1663, %v1932
  %v2061 = vsel %vm1805, %v1281, %v1933
  %v2062 = vsel %vm1806, %v1283, %v1934
  %v2063 = vsel %vm1807, %v1667, %v1935
  %v2064 = vsel %vm1808, %v1669, %v1936
  %v2065 = vsel %vm1809, %v1285, %v1937
  %v2066 = vsel %vm1810, %v1287, %v1938
  %v2067 = vsel %vm1811, %v1671, %v1939
  %v2068 = vsel %vm1812, %v1673, %v1940
  %v2069 = vsel %vm1813, %v1291, %v1941
  %v2070 = vsel %vm1814, %v1293, %v1942
  %v2071 = vsel %vm1815, %v1677, %v1943
  %v2072 = vsel %vm1816, %v1679, %v1944
  %v2073 = vsel %vm1817, %v1295, %v1945
  %v2074 = vsel %vm1818, %v1297, %v1946
  %v2075 = vsel %vm1819, %v1681, %v1947
  %v2076 = vsel %vm1820, %v1683, %v1948
  %v2077 = vsel %vm1821, %v1301, %v1949
  %v2078 = vsel %vm1822, %v1303, %v1950
  %v2079 = vsel %vm1823, %v1687, %v1951
  %v2080 = vsel %vm1824, %v1689, %v1952
  %v2081 = vsel %vm1825, %v1305, %v1953
  %v2082 = vsel %vm1826, %v1307, %v1954
  %v2083 = vsel %vm1827, %v1691, %v1955
  %v2084 = vsel %vm1828, %v1693, %v1956
  %v2085 = vsel %vm1829, %v1311, %v1957
  %v2086 = vsel %vm1830, %v1313, %v1958
  %v2087 = vsel %vm1831, %v1697, %v1959
  %v2088 = vsel %vm1832, %v1699, %v1960
  %v2089 = vsel %vm1833, %v1315, %v1961
  %v2090 = vsel %vm1834, %v1317, %v1962
  %v2091 = vsel %vm1835, %v1701, %v1963
  %v2092 = vsel %vm1836, %v1703, %v1964
  %v2093 = vsel %vm1837, %v1321, %v1965
  %v2094 = vsel %vm1838, %v1323, %v1966
  %v2095 = vsel %vm1839, %v1707, %v1967
  %v2096 = vsel %vm1840, %v1709, %v1968
  %v2097 = vsel %vm1841, %v1325, %v1969
  %v2098 = vsel %vm1842, %v1327, %v1970
  %v2099 = vsel %vm1843, %v1711, %v1971
  %v2100 = vsel %vm1844, %v1713, %v1972
  %v2101 = vsel %vm1845, %v1331, %v1973
  %v2102 = vsel %vm1846, %v1333, %v1974
  %v2103 = vsel %vm1847, %v1717, %v1975
  %v2104 = vsel %vm1848, %v1719, %v1976
  %v2105 = vsel %vm1849, %v1335, %v1977
  %v2106 = vsel %vm1850, %v1337, %v1978
  %v2107 = vsel %vm1851, %v1721, %v1979
  %v2108 = vsel %vm1852, %v1723, %v1980
  %v2109 = vpack.c.bf16 %v1985, %v1981
  %v2110 = vpack.c.bf16 %v1986, %v1982
  %v2111 = vpack.c.bf16 %v1987, %v1983
  %v2112 = vpack.c.bf16 %v1988, %v1984
  %v2113 = vpack.c.bf16 %v1993, %v1989
  %v2114 = vpack.c.bf16 %v1994, %v1990
  %v2115 = vpack.c.bf16 %v1995, %v1991
  %v2116 = vpack.c.bf16 %v1996, %v1992
  %v2117 = vpack.c.bf16 %v2001, %v1997
  %v2118 = vpack.c.bf16 %v2002, %v1998
  %v2119 = vpack.c.bf16 %v2003, %v1999
  %v2120 = vpack.c.bf16 %v2004, %v2000
  %v2121 = vpack.c.bf16 %v2009, %v2005
  %v2122 = vpack.c.bf16 %v2010, %v2006
  %v2123 = vpack.c.bf16 %v2011, %v2007
  %v2124 = vpack.c.bf16 %v2012, %v2008
  %v2125 = vpack.c.bf16 %v2017, %v2013
  %v2126 = vpack.c.bf16 %v2018, %v2014
  %v2127 = vpack.c.bf16 %v2019, %v2015
  %v2128 = vpack.c.bf16 %v2020, %v2016
  %v2129 = vpack.c.bf16 %v2025, %v2021
  %v2130 = vpack.c.bf16 %v2026, %v2022
  %v2131 = vpack.c.bf16 %v2027, %v2023
  %v2132 = vpack.c.bf16 %v2028, %v2024
  %v2133 = vpack.c.bf16 %v2033, %v2029
  %v2134 = vpack.c.bf16 %v2034, %v2030
  %v2135 = vpack.c.bf16 %v2035, %v2031
  %v2136 = vpack.c.bf16 %v2036, %v2032
  %v2137 = vpack.c.bf16 %v2041, %v2037
  %v2138 = vpack.c.bf16 %v2042, %v2038
  %v2139 = vpack.c.bf16 %v2043, %v2039
  %v2140 = vpack.c.bf16 %v2044, %v2040
  %v2141 = vpack.c.bf16 %v2049, %v2045
  %v2142 = vpack.c.bf16 %v2050, %v2046
  %v2143 = vpack.c.bf16 %v2051, %v2047
  %v2144 = vpack.c.bf16 %v2052, %v2048
  %v2145 = vpack.c.bf16 %v2057, %v2053
  %v2146 = vpack.c.bf16 %v2058, %v2054
  %v2147 = vpack.c.bf16 %v2059, %v2055
  %v2148 = vpack.c.bf16 %v2060, %v2056
  %v2149 = vpack.c.bf16 %v2065, %v2061
  %v2150 = vpack.c.bf16 %v2066, %v2062
  %v2151 = vpack.c.bf16 %v2067, %v2063
  %v2152 = vpack.c.bf16 %v2068, %v2064
  %v2153 = vpack.c.bf16 %v2073, %v2069
  %v2154 = vpack.c.bf16 %v2074, %v2070
  %v2155 = vpack.c.bf16 %v2075, %v2071
  %v2156 = vpack.c.bf16 %v2076, %v2072
  %v2157 = vpack.c.bf16 %v2081, %v2077
  %v2158 = vpack.c.bf16 %v2082, %v2078
  %v2159 = vpack.c.bf16 %v2083, %v2079
  %v2160 = vpack.c.bf16 %v2084, %v2080
  %v2161 = vpack.c.bf16 %v2089, %v2085
  %v2162 = vpack.c.bf16 %v2090, %v2086
  %v2163 = vpack.c.bf16 %v2091, %v2087
  %v2164 = vpack.c.bf16 %v2092, %v2088
  %v2165 = vpack.c.bf16 %v2097, %v2093
  %v2166 = vpack.c.bf16 %v2098, %v2094
  %v2167 = vpack.c.bf16 %v2099, %v2095
  %v2168 = vpack.c.bf16 %v2100, %v2096
  %v2169 = vpack.c.bf16 %v2105, %v2101
  %v2170 = vpack.c.bf16 %v2106, %v2102
  %v2171 = vpack.c.bf16 %v2107, %v2103
  %v2172 = vpack.c.bf16 %v2108, %v2104
  %v2173 = vld [vmem:[%s3] sm:$0xff]
  %v2174 = vld [vmem:[%s3 + $0x8] sm:$0xff]
  %v2175 = vld [vmem:[%s3 + $0x10] sm:$0xff]
  %v2176 = vld [vmem:[%s3 + $0x18] sm:$0xff]
  %v2177 = vld [vmem:[%s3 + $0x20] sm:$0xff]
  %v2178 = vld [vmem:[%s3 + $0x28] sm:$0xff]
  %v2179 = vld [vmem:[%s3 + $0x30] sm:$0xff]
  %v2180 = vld [vmem:[%s3 + $0x38] sm:$0xff]
  %v2181 = vld [vmem:[%s3 + $0x40] sm:$0xff]
  %v2182 = vld [vmem:[%s3 + $0x48] sm:$0xff]
  %v2183 = vld [vmem:[%s3 + $0x50] sm:$0xff]
  %v2184 = vld [vmem:[%s3 + $0x58] sm:$0xff]
  %v2185 = vld [vmem:[%s3 + $0x60] sm:$0xff]
  %v2186 = vld [vmem:[%s3 + $0x68] sm:$0xff]
  %v2187 = vld [vmem:[%s3 + $0x70] sm:$0xff]
  %v2188 = vld [vmem:[%s3 + $0x78] sm:$0xff]
  %v2189 = vld [vmem:[%s3 + $0x80] sm:$0xff]
  %v2190 = vld [vmem:[%s3 + $0x88] sm:$0xff]
  %v2191 = vld [vmem:[%s3 + $0x90] sm:$0xff]
  %v2192 = vld [vmem:[%s3 + $0x98] sm:$0xff]
  %v2193 = vld [vmem:[%s3 + $0xa0] sm:$0xff]
  %v2194 = vld [vmem:[%s3 + $0xa8] sm:$0xff]
  %v2195 = vld [vmem:[%s3 + $0xb0] sm:$0xff]
  %v2196 = vld [vmem:[%s3 + $0xb8] sm:$0xff]
  %v2197 = vld [vmem:[%s3 + $0xc0] sm:$0xff]
  %v2198 = vld [vmem:[%s3 + $0xc8] sm:$0xff]
  %v2199 = vld [vmem:[%s3 + $0xd0] sm:$0xff]
  %v2200 = vld [vmem:[%s3 + $0xd8] sm:$0xff]
  %v2201 = vld [vmem:[%s3 + $0xe0] sm:$0xff]
  %v2202 = vld [vmem:[%s3 + $0xe8] sm:$0xff]
  %v2203 = vld [vmem:[%s3 + $0xf0] sm:$0xff]
  %v2204 = vld [vmem:[%s3 + $0xf8] sm:$0xff]
  %v2205 = vld [vmem:[%s3 + $0x100] sm:$0xff]
  %v2206 = vld [vmem:[%s3 + $0x108] sm:$0xff]
  %v2207 = vld [vmem:[%s3 + $0x110] sm:$0xff]
  %v2208 = vld [vmem:[%s3 + $0x118] sm:$0xff]
  %v2209 = vld [vmem:[%s3 + $0x120] sm:$0xff]
  %v2210 = vld [vmem:[%s3 + $0x128] sm:$0xff]
  %v2211 = vld [vmem:[%s3 + $0x130] sm:$0xff]
  %v2212 = vld [vmem:[%s3 + $0x138] sm:$0xff]
  %v2213 = vld [vmem:[%s3 + $0x140] sm:$0xff]
  %v2214 = vld [vmem:[%s3 + $0x148] sm:$0xff]
  %v2215 = vld [vmem:[%s3 + $0x150] sm:$0xff]
  %v2216 = vld [vmem:[%s3 + $0x158] sm:$0xff]
  %v2217 = vld [vmem:[%s3 + $0x160] sm:$0xff]
  %v2218 = vld [vmem:[%s3 + $0x168] sm:$0xff]
  %v2219 = vld [vmem:[%s3 + $0x170] sm:$0xff]
  %v2220 = vld [vmem:[%s3 + $0x178] sm:$0xff]
  %v2221 = vld [vmem:[%s3 + $0x180] sm:$0xff]
  %v2222 = vld [vmem:[%s3 + $0x188] sm:$0xff]
  %v2223 = vld [vmem:[%s3 + $0x190] sm:$0xff]
  %v2224 = vld [vmem:[%s3 + $0x198] sm:$0xff]
  %v2225 = vld [vmem:[%s3 + $0x1a0] sm:$0xff]
  %v2226 = vld [vmem:[%s3 + $0x1a8] sm:$0xff]
  %v2227 = vld [vmem:[%s3 + $0x1b0] sm:$0xff]
  %v2228 = vld [vmem:[%s3 + $0x1b8] sm:$0xff]
  %v2229 = vld [vmem:[%s3 + $0x1c0] sm:$0xff]
  %v2230 = vld [vmem:[%s3 + $0x1c8] sm:$0xff]
  %v2231 = vld [vmem:[%s3 + $0x1d0] sm:$0xff]
  %v2232 = vld [vmem:[%s3 + $0x1d8] sm:$0xff]
  %v2233 = vld [vmem:[%s3 + $0x1e0] sm:$0xff]
  %v2234 = vld [vmem:[%s3 + $0x1e8] sm:$0xff]
  %v2235 = vld [vmem:[%s3 + $0x1f0] sm:$0xff]
  %v2236 = vld [vmem:[%s3 + $0x1f8] sm:$0xff]
  %v2237 = vld [vmem:[%s3 + $0x200] sm:$0xff]
  %v2238 = vld [vmem:[%s3 + $0x208] sm:$0xff]
  %v2239 = vld [vmem:[%s3 + $0x210] sm:$0xff]
  %v2240 = vld [vmem:[%s3 + $0x218] sm:$0xff]
  %v2241 = vld [vmem:[%s3 + $0x220] sm:$0xff]
  %v2242 = vld [vmem:[%s3 + $0x228] sm:$0xff]
  %v2243 = vld [vmem:[%s3 + $0x230] sm:$0xff]
  %v2244 = vld [vmem:[%s3 + $0x238] sm:$0xff]
  %v2245 = vld [vmem:[%s3 + $0x240] sm:$0xff]
  %v2246 = vld [vmem:[%s3 + $0x248] sm:$0xff]
  %v2247 = vld [vmem:[%s3 + $0x250] sm:$0xff]
  %v2248 = vld [vmem:[%s3 + $0x258] sm:$0xff]
  %v2249 = vld [vmem:[%s3 + $0x260] sm:$0xff]
  %v2250 = vld [vmem:[%s3 + $0x268] sm:$0xff]
  %v2251 = vld [vmem:[%s3 + $0x270] sm:$0xff]
  %v2252 = vld [vmem:[%s3 + $0x278] sm:$0xff]
  %v2253 = vld [vmem:[%s3 + $0x280] sm:$0xff]
  %v2254 = vld [vmem:[%s3 + $0x288] sm:$0xff]
  %v2255 = vld [vmem:[%s3 + $0x290] sm:$0xff]
  %v2256 = vld [vmem:[%s3 + $0x298] sm:$0xff]
  %v2257 = vld [vmem:[%s3 + $0x2a0] sm:$0xff]
  %v2258 = vld [vmem:[%s3 + $0x2a8] sm:$0xff]
  %v2259 = vld [vmem:[%s3 + $0x2b0] sm:$0xff]
  %v2260 = vld [vmem:[%s3 + $0x2b8] sm:$0xff]
  %v2261 = vld [vmem:[%s3 + $0x2c0] sm:$0xff]
  %v2262 = vld [vmem:[%s3 + $0x2c8] sm:$0xff]
  %v2263 = vld [vmem:[%s3 + $0x2d0] sm:$0xff]
  %v2264 = vld [vmem:[%s3 + $0x2d8] sm:$0xff]
  %v2265 = vld [vmem:[%s3 + $0x2e0] sm:$0xff]
  %v2266 = vld [vmem:[%s3 + $0x2e8] sm:$0xff]
  %v2267 = vld [vmem:[%s3 + $0x2f0] sm:$0xff]
  %v2268 = vld [vmem:[%s3 + $0x2f8] sm:$0xff]
  %v2269 = vld [vmem:[%s3 + $0x300] sm:$0xff]
  %v2270 = vld [vmem:[%s3 + $0x308] sm:$0xff]
  %v2271 = vld [vmem:[%s3 + $0x310] sm:$0xff]
  %v2272 = vld [vmem:[%s3 + $0x318] sm:$0xff]
  %v2273 = vld [vmem:[%s3 + $0x320] sm:$0xff]
  %v2274 = vld [vmem:[%s3 + $0x328] sm:$0xff]
  %v2275 = vld [vmem:[%s3 + $0x330] sm:$0xff]
  %v2276 = vld [vmem:[%s3 + $0x338] sm:$0xff]
  %v2277 = vld [vmem:[%s3 + $0x340] sm:$0xff]
  %v2278 = vld [vmem:[%s3 + $0x348] sm:$0xff]
  %v2279 = vld [vmem:[%s3 + $0x350] sm:$0xff]
  %v2280 = vld [vmem:[%s3 + $0x358] sm:$0xff]
  %v2281 = vld [vmem:[%s3 + $0x360] sm:$0xff]
  %v2282 = vld [vmem:[%s3 + $0x368] sm:$0xff]
  %v2283 = vld [vmem:[%s3 + $0x370] sm:$0xff]
  %v2284 = vld [vmem:[%s3 + $0x378] sm:$0xff]
  %v2285 = vld [vmem:[%s3 + $0x380] sm:$0xff]
  %v2286 = vld [vmem:[%s3 + $0x388] sm:$0xff]
  %v2287 = vld [vmem:[%s3 + $0x390] sm:$0xff]
  %v2288 = vld [vmem:[%s3 + $0x398] sm:$0xff]
  %v2289 = vld [vmem:[%s3 + $0x3a0] sm:$0xff]
  %v2290 = vld [vmem:[%s3 + $0x3a8] sm:$0xff]
  %v2291 = vld [vmem:[%s3 + $0x3b0] sm:$0xff]
  %v2292 = vld [vmem:[%s3 + $0x3b8] sm:$0xff]
  %v2293 = vld [vmem:[%s3 + $0x3c0] sm:$0xff]
  %v2294 = vld [vmem:[%s3 + $0x3c8] sm:$0xff]
  %v2295 = vld [vmem:[%s3 + $0x3d0] sm:$0xff]
  %v2296 = vld [vmem:[%s3 + $0x3d8] sm:$0xff]
  %v2297 = vld [vmem:[%s3 + $0x3e0] sm:$0xff]
  %v2298 = vld [vmem:[%s3 + $0x3e8] sm:$0xff]
  %v2299 = vld [vmem:[%s3 + $0x3f0] sm:$0xff]
  %v2300 = vld [vmem:[%s3 + $0x3f8] sm:$0xff]
  %v2301 = vld [vmem:[%s4] sm:$0xf]
  %v2303 = vlaneseq
  %v2304 = vshrl.u32 %v2303, 7
  %v2305 = vsub.s32 0, %v2304
  %v2306 = vrot.slane %v2301, %v2305
  %v2307 = vlaneseq
  %v2308 = vshrl.u32 %v2307, 7
  %v2309 = vsub.s32 1, %v2308
  %v2310 = vrot.slane %v2301, %v2309
  %v2311 = vlaneseq
  %v2312 = vshrl.u32 %v2311, 7
  %v2313 = vsub.s32 2, %v2312
  %v2314 = vrot.slane %v2301, %v2313
  %v2315 = vlaneseq
  %v2316 = vshrl.u32 %v2315, 7
  %v2317 = vsub.s32 3, %v2316
  %v2318 = vrot.slane %v2301, %v2317
  %v2451 = vunpack.c.l.b16 %v2173
  %v2452 = vunpack.c.h.b16 %v2173
  %v2453 = vunpack.c.l.b16 %v2174
  %v2454 = vunpack.c.h.b16 %v2174
  %v2455 = vunpack.c.l.b16 %v2175
  %v2456 = vunpack.c.h.b16 %v2175
  %v2457 = vunpack.c.l.b16 %v2176
  %v2458 = vunpack.c.h.b16 %v2176
  %v2459 = vunpack.c.l.b16 %v2177
  %v2460 = vunpack.c.h.b16 %v2177
  %v2461 = vunpack.c.l.b16 %v2178
  %v2462 = vunpack.c.h.b16 %v2178
  %v2463 = vunpack.c.l.b16 %v2179
  %v2464 = vunpack.c.h.b16 %v2179
  %v2465 = vunpack.c.l.b16 %v2180
  %v2466 = vunpack.c.h.b16 %v2180
  %v2467 = vunpack.c.l.b16 %v2181
  %v2468 = vunpack.c.h.b16 %v2181
  %v2469 = vunpack.c.l.b16 %v2182
  %v2470 = vunpack.c.h.b16 %v2182
  %v2471 = vunpack.c.l.b16 %v2183
  %v2472 = vunpack.c.h.b16 %v2183
  %v2473 = vunpack.c.l.b16 %v2184
  %v2474 = vunpack.c.h.b16 %v2184
  %v2475 = vunpack.c.l.b16 %v2185
  %v2476 = vunpack.c.h.b16 %v2185
  %v2477 = vunpack.c.l.b16 %v2186
  %v2478 = vunpack.c.h.b16 %v2186
  %v2479 = vunpack.c.l.b16 %v2187
  %v2480 = vunpack.c.h.b16 %v2187
  %v2481 = vunpack.c.l.b16 %v2188
  %v2482 = vunpack.c.h.b16 %v2188
  %v2483 = vunpack.c.l.b16 %v2189
  %v2484 = vunpack.c.h.b16 %v2189
  %v2485 = vunpack.c.l.b16 %v2190
  %v2486 = vunpack.c.h.b16 %v2190
  %v2487 = vunpack.c.l.b16 %v2191
  %v2488 = vunpack.c.h.b16 %v2191
  %v2489 = vunpack.c.l.b16 %v2192
  %v2490 = vunpack.c.h.b16 %v2192
  %v2491 = vunpack.c.l.b16 %v2193
  %v2492 = vunpack.c.h.b16 %v2193
  %v2493 = vunpack.c.l.b16 %v2194
  %v2494 = vunpack.c.h.b16 %v2194
  %v2495 = vunpack.c.l.b16 %v2195
  %v2496 = vunpack.c.h.b16 %v2195
  %v2497 = vunpack.c.l.b16 %v2196
  %v2498 = vunpack.c.h.b16 %v2196
  %v2499 = vunpack.c.l.b16 %v2197
  %v2500 = vunpack.c.h.b16 %v2197
  %v2501 = vunpack.c.l.b16 %v2198
  %v2502 = vunpack.c.h.b16 %v2198
  %v2503 = vunpack.c.l.b16 %v2199
  %v2504 = vunpack.c.h.b16 %v2199
  %v2505 = vunpack.c.l.b16 %v2200
  %v2506 = vunpack.c.h.b16 %v2200
  %v2507 = vunpack.c.l.b16 %v2201
  %v2508 = vunpack.c.h.b16 %v2201
  %v2509 = vunpack.c.l.b16 %v2202
  %v2510 = vunpack.c.h.b16 %v2202
  %v2511 = vunpack.c.l.b16 %v2203
  %v2512 = vunpack.c.h.b16 %v2203
  %v2513 = vunpack.c.l.b16 %v2204
  %v2514 = vunpack.c.h.b16 %v2204
  %v2515 = vunpack.c.l.b16 %v2205
  %v2516 = vunpack.c.h.b16 %v2205
  %v2517 = vunpack.c.l.b16 %v2206
  %v2518 = vunpack.c.h.b16 %v2206
  %v2519 = vunpack.c.l.b16 %v2207
  %v2520 = vunpack.c.h.b16 %v2207
  %v2521 = vunpack.c.l.b16 %v2208
  %v2522 = vunpack.c.h.b16 %v2208
  %v2523 = vunpack.c.l.b16 %v2209
  %v2524 = vunpack.c.h.b16 %v2209
  %v2525 = vunpack.c.l.b16 %v2210
  %v2526 = vunpack.c.h.b16 %v2210
  %v2527 = vunpack.c.l.b16 %v2211
  %v2528 = vunpack.c.h.b16 %v2211
  %v2529 = vunpack.c.l.b16 %v2212
  %v2530 = vunpack.c.h.b16 %v2212
  %v2531 = vunpack.c.l.b16 %v2213
  %v2532 = vunpack.c.h.b16 %v2213
  %v2533 = vunpack.c.l.b16 %v2214
  %v2534 = vunpack.c.h.b16 %v2214
  %v2535 = vunpack.c.l.b16 %v2215
  %v2536 = vunpack.c.h.b16 %v2215
  %v2537 = vunpack.c.l.b16 %v2216
  %v2538 = vunpack.c.h.b16 %v2216
  %v2539 = vunpack.c.l.b16 %v2217
  %v2540 = vunpack.c.h.b16 %v2217
  %v2541 = vunpack.c.l.b16 %v2218
  %v2542 = vunpack.c.h.b16 %v2218
  %v2543 = vunpack.c.l.b16 %v2219
  %v2544 = vunpack.c.h.b16 %v2219
  %v2545 = vunpack.c.l.b16 %v2220
  %v2546 = vunpack.c.h.b16 %v2220
  %v2547 = vunpack.c.l.b16 %v2221
  %v2548 = vunpack.c.h.b16 %v2221
  %v2549 = vunpack.c.l.b16 %v2222
  %v2550 = vunpack.c.h.b16 %v2222
  %v2551 = vunpack.c.l.b16 %v2223
  %v2552 = vunpack.c.h.b16 %v2223
  %v2553 = vunpack.c.l.b16 %v2224
  %v2554 = vunpack.c.h.b16 %v2224
  %v2555 = vunpack.c.l.b16 %v2225
  %v2556 = vunpack.c.h.b16 %v2225
  %v2557 = vunpack.c.l.b16 %v2226
  %v2558 = vunpack.c.h.b16 %v2226
  %v2559 = vunpack.c.l.b16 %v2227
  %v2560 = vunpack.c.h.b16 %v2227
  %v2561 = vunpack.c.l.b16 %v2228
  %v2562 = vunpack.c.h.b16 %v2228
  %v2563 = vunpack.c.l.b16 %v2229
  %v2564 = vunpack.c.h.b16 %v2229
  %v2565 = vunpack.c.l.b16 %v2230
  %v2566 = vunpack.c.h.b16 %v2230
  %v2567 = vunpack.c.l.b16 %v2231
  %v2568 = vunpack.c.h.b16 %v2231
  %v2569 = vunpack.c.l.b16 %v2232
  %v2570 = vunpack.c.h.b16 %v2232
  %v2571 = vunpack.c.l.b16 %v2233
  %v2572 = vunpack.c.h.b16 %v2233
  %v2573 = vunpack.c.l.b16 %v2234
  %v2574 = vunpack.c.h.b16 %v2234
  %v2575 = vunpack.c.l.b16 %v2235
  %v2576 = vunpack.c.h.b16 %v2235
  %v2577 = vunpack.c.l.b16 %v2236
  %v2578 = vunpack.c.h.b16 %v2236
  %v2579 = vunpack.c.l.b16 %v2237
  %v2580 = vunpack.c.h.b16 %v2237
  %v2581 = vunpack.c.l.b16 %v2238
  %v2582 = vunpack.c.h.b16 %v2238
  %v2583 = vunpack.c.l.b16 %v2239
  %v2584 = vunpack.c.h.b16 %v2239
  %v2585 = vunpack.c.l.b16 %v2240
  %v2586 = vunpack.c.h.b16 %v2240
  %v2587 = vunpack.c.l.b16 %v2241
  %v2588 = vunpack.c.h.b16 %v2241
  %v2589 = vunpack.c.l.b16 %v2242
  %v2590 = vunpack.c.h.b16 %v2242
  %v2591 = vunpack.c.l.b16 %v2243
  %v2592 = vunpack.c.h.b16 %v2243
  %v2593 = vunpack.c.l.b16 %v2244
  %v2594 = vunpack.c.h.b16 %v2244
  %v2595 = vunpack.c.l.b16 %v2245
  %v2596 = vunpack.c.h.b16 %v2245
  %v2597 = vunpack.c.l.b16 %v2246
  %v2598 = vunpack.c.h.b16 %v2246
  %v2599 = vunpack.c.l.b16 %v2247
  %v2600 = vunpack.c.h.b16 %v2247
  %v2601 = vunpack.c.l.b16 %v2248
  %v2602 = vunpack.c.h.b16 %v2248
  %v2603 = vunpack.c.l.b16 %v2249
  %v2604 = vunpack.c.h.b16 %v2249
  %v2605 = vunpack.c.l.b16 %v2250
  %v2606 = vunpack.c.h.b16 %v2250
  %v2607 = vunpack.c.l.b16 %v2251
  %v2608 = vunpack.c.h.b16 %v2251
  %v2609 = vunpack.c.l.b16 %v2252
  %v2610 = vunpack.c.h.b16 %v2252
  %v2611 = vunpack.c.l.b16 %v2253
  %v2612 = vunpack.c.h.b16 %v2253
  %v2613 = vunpack.c.l.b16 %v2254
  %v2614 = vunpack.c.h.b16 %v2254
  %v2615 = vunpack.c.l.b16 %v2255
  %v2616 = vunpack.c.h.b16 %v2255
  %v2617 = vunpack.c.l.b16 %v2256
  %v2618 = vunpack.c.h.b16 %v2256
  %v2619 = vunpack.c.l.b16 %v2257
  %v2620 = vunpack.c.h.b16 %v2257
  %v2621 = vunpack.c.l.b16 %v2258
  %v2622 = vunpack.c.h.b16 %v2258
  %v2623 = vunpack.c.l.b16 %v2259
  %v2624 = vunpack.c.h.b16 %v2259
  %v2625 = vunpack.c.l.b16 %v2260
  %v2626 = vunpack.c.h.b16 %v2260
  %v2627 = vunpack.c.l.b16 %v2261
  %v2628 = vunpack.c.h.b16 %v2261
  %v2629 = vunpack.c.l.b16 %v2262
  %v2630 = vunpack.c.h.b16 %v2262
  %v2631 = vunpack.c.l.b16 %v2263
  %v2632 = vunpack.c.h.b16 %v2263
  %v2633 = vunpack.c.l.b16 %v2264
  %v2634 = vunpack.c.h.b16 %v2264
  %v2635 = vunpack.c.l.b16 %v2265
  %v2636 = vunpack.c.h.b16 %v2265
  %v2637 = vunpack.c.l.b16 %v2266
  %v2638 = vunpack.c.h.b16 %v2266
  %v2639 = vunpack.c.l.b16 %v2267
  %v2640 = vunpack.c.h.b16 %v2267
  %v2641 = vunpack.c.l.b16 %v2268
  %v2642 = vunpack.c.h.b16 %v2268
  %v2643 = vunpack.c.l.b16 %v2269
  %v2644 = vunpack.c.h.b16 %v2269
  %v2645 = vunpack.c.l.b16 %v2270
  %v2646 = vunpack.c.h.b16 %v2270
  %v2647 = vunpack.c.l.b16 %v2271
  %v2648 = vunpack.c.h.b16 %v2271
  %v2649 = vunpack.c.l.b16 %v2272
  %v2650 = vunpack.c.h.b16 %v2272
  %v2651 = vunpack.c.l.b16 %v2273
  %v2652 = vunpack.c.h.b16 %v2273
  %v2653 = vunpack.c.l.b16 %v2274
  %v2654 = vunpack.c.h.b16 %v2274
  %v2655 = vunpack.c.l.b16 %v2275
  %v2656 = vunpack.c.h.b16 %v2275
  %v2657 = vunpack.c.l.b16 %v2276
  %v2658 = vunpack.c.h.b16 %v2276
  %v2659 = vunpack.c.l.b16 %v2277
  %v2660 = vunpack.c.h.b16 %v2277
  %v2661 = vunpack.c.l.b16 %v2278
  %v2662 = vunpack.c.h.b16 %v2278
  %v2663 = vunpack.c.l.b16 %v2279
  %v2664 = vunpack.c.h.b16 %v2279
  %v2665 = vunpack.c.l.b16 %v2280
  %v2666 = vunpack.c.h.b16 %v2280
  %v2667 = vunpack.c.l.b16 %v2281
  %v2668 = vunpack.c.h.b16 %v2281
  %v2669 = vunpack.c.l.b16 %v2282
  %v2670 = vunpack.c.h.b16 %v2282
  %v2671 = vunpack.c.l.b16 %v2283
  %v2672 = vunpack.c.h.b16 %v2283
  %v2673 = vunpack.c.l.b16 %v2284
  %v2674 = vunpack.c.h.b16 %v2284
  %v2675 = vunpack.c.l.b16 %v2285
  %v2676 = vunpack.c.h.b16 %v2285
  %v2677 = vunpack.c.l.b16 %v2286
  %v2678 = vunpack.c.h.b16 %v2286
  %v2679 = vunpack.c.l.b16 %v2287
  %v2680 = vunpack.c.h.b16 %v2287
  %v2681 = vunpack.c.l.b16 %v2288
  %v2682 = vunpack.c.h.b16 %v2288
  %v2683 = vunpack.c.l.b16 %v2289
  %v2684 = vunpack.c.h.b16 %v2289
  %v2685 = vunpack.c.l.b16 %v2290
  %v2686 = vunpack.c.h.b16 %v2290
  %v2687 = vunpack.c.l.b16 %v2291
  %v2688 = vunpack.c.h.b16 %v2291
  %v2689 = vunpack.c.l.b16 %v2292
  %v2690 = vunpack.c.h.b16 %v2292
  %v2691 = vunpack.c.l.b16 %v2293
  %v2692 = vunpack.c.h.b16 %v2293
  %v2693 = vunpack.c.l.b16 %v2294
  %v2694 = vunpack.c.h.b16 %v2294
  %v2695 = vunpack.c.l.b16 %v2295
  %v2696 = vunpack.c.h.b16 %v2295
  %v2697 = vunpack.c.l.b16 %v2296
  %v2698 = vunpack.c.h.b16 %v2296
  %v2699 = vunpack.c.l.b16 %v2297
  %v2700 = vunpack.c.h.b16 %v2297
  %v2701 = vunpack.c.l.b16 %v2298
  %v2702 = vunpack.c.h.b16 %v2298
  %v2703 = vunpack.c.l.b16 %v2299
  %v2704 = vunpack.c.h.b16 %v2299
  %v2705 = vunpack.c.l.b16 %v2300
  %v2706 = vunpack.c.h.b16 %v2300
  %v2707 = vpack.c.b16 %v2455, %v2451
  %v2708 = vpack.c.b16 %v2456, %v2452
  %v2709 = vpack.c.b16 %v2457, %v2453
  %v2710 = vpack.c.b16 %v2458, %v2454
  %v2711 = vpack.c.b16 %v2463, %v2459
  %v2712 = vpack.c.b16 %v2464, %v2460
  %v2713 = vpack.c.b16 %v2465, %v2461
  %v2714 = vpack.c.b16 %v2466, %v2462
  %v2715 = vpack.c.b16 %v2471, %v2467
  %v2716 = vpack.c.b16 %v2472, %v2468
  %v2717 = vpack.c.b16 %v2473, %v2469
  %v2718 = vpack.c.b16 %v2474, %v2470
  %v2719 = vpack.c.b16 %v2479, %v2475
  %v2720 = vpack.c.b16 %v2480, %v2476
  %v2721 = vpack.c.b16 %v2481, %v2477
  %v2722 = vpack.c.b16 %v2482, %v2478
  %v2723 = vpack.c.b16 %v2487, %v2483
  %v2724 = vpack.c.b16 %v2488, %v2484
  %v2725 = vpack.c.b16 %v2489, %v2485
  %v2726 = vpack.c.b16 %v2490, %v2486
  %v2727 = vpack.c.b16 %v2495, %v2491
  %v2728 = vpack.c.b16 %v2496, %v2492
  %v2729 = vpack.c.b16 %v2497, %v2493
  %v2730 = vpack.c.b16 %v2498, %v2494
  %v2731 = vpack.c.b16 %v2503, %v2499
  %v2732 = vpack.c.b16 %v2504, %v2500
  %v2733 = vpack.c.b16 %v2505, %v2501
  %v2734 = vpack.c.b16 %v2506, %v2502
  %v2735 = vpack.c.b16 %v2511, %v2507
  %v2736 = vpack.c.b16 %v2512, %v2508
  %v2737 = vpack.c.b16 %v2513, %v2509
  %v2738 = vpack.c.b16 %v2514, %v2510
  %v2739 = vpack.c.b16 %v2519, %v2515
  %v2740 = vpack.c.b16 %v2520, %v2516
  %v2741 = vpack.c.b16 %v2521, %v2517
  %v2742 = vpack.c.b16 %v2522, %v2518
  %v2743 = vpack.c.b16 %v2527, %v2523
  %v2744 = vpack.c.b16 %v2528, %v2524
  %v2745 = vpack.c.b16 %v2529, %v2525
  %v2746 = vpack.c.b16 %v2530, %v2526
  %v2747 = vpack.c.b16 %v2535, %v2531
  %v2748 = vpack.c.b16 %v2536, %v2532
  %v2749 = vpack.c.b16 %v2537, %v2533
  %v2750 = vpack.c.b16 %v2538, %v2534
  %v2751 = vpack.c.b16 %v2543, %v2539
  %v2752 = vpack.c.b16 %v2544, %v2540
  %v2753 = vpack.c.b16 %v2545, %v2541
  %v2754 = vpack.c.b16 %v2546, %v2542
  %v2755 = vpack.c.b16 %v2551, %v2547
  %v2756 = vpack.c.b16 %v2552, %v2548
  %v2757 = vpack.c.b16 %v2553, %v2549
  %v2758 = vpack.c.b16 %v2554, %v2550
  %v2759 = vpack.c.b16 %v2559, %v2555
  %v2760 = vpack.c.b16 %v2560, %v2556
  %v2761 = vpack.c.b16 %v2561, %v2557
  %v2762 = vpack.c.b16 %v2562, %v2558
  %v2763 = vpack.c.b16 %v2567, %v2563
  %v2764 = vpack.c.b16 %v2568, %v2564
  %v2765 = vpack.c.b16 %v2569, %v2565
  %v2766 = vpack.c.b16 %v2570, %v2566
  %v2767 = vpack.c.b16 %v2575, %v2571
  %v2768 = vpack.c.b16 %v2576, %v2572
  %v2769 = vpack.c.b16 %v2577, %v2573
  %v2770 = vpack.c.b16 %v2578, %v2574
  %v2771 = vpack.c.b16 %v2583, %v2579
  %v2772 = vpack.c.b16 %v2584, %v2580
  %v2773 = vpack.c.b16 %v2585, %v2581
  %v2774 = vpack.c.b16 %v2586, %v2582
  %v2775 = vpack.c.b16 %v2591, %v2587
  %v2776 = vpack.c.b16 %v2592, %v2588
  %v2777 = vpack.c.b16 %v2593, %v2589
  %v2778 = vpack.c.b16 %v2594, %v2590
  %v2779 = vpack.c.b16 %v2599, %v2595
  %v2780 = vpack.c.b16 %v2600, %v2596
  %v2781 = vpack.c.b16 %v2601, %v2597
  %v2782 = vpack.c.b16 %v2602, %v2598
  %v2783 = vpack.c.b16 %v2607, %v2603
  %v2784 = vpack.c.b16 %v2608, %v2604
  %v2785 = vpack.c.b16 %v2609, %v2605
  %v2786 = vpack.c.b16 %v2610, %v2606
  %v2787 = vpack.c.b16 %v2615, %v2611
  %v2788 = vpack.c.b16 %v2616, %v2612
  %v2789 = vpack.c.b16 %v2617, %v2613
  %v2790 = vpack.c.b16 %v2618, %v2614
  %v2791 = vpack.c.b16 %v2623, %v2619
  %v2792 = vpack.c.b16 %v2624, %v2620
  %v2793 = vpack.c.b16 %v2625, %v2621
  %v2794 = vpack.c.b16 %v2626, %v2622
  %v2795 = vpack.c.b16 %v2631, %v2627
  %v2796 = vpack.c.b16 %v2632, %v2628
  %v2797 = vpack.c.b16 %v2633, %v2629
  %v2798 = vpack.c.b16 %v2634, %v2630
  %v2799 = vpack.c.b16 %v2639, %v2635
  %v2800 = vpack.c.b16 %v2640, %v2636
  %v2801 = vpack.c.b16 %v2641, %v2637
  %v2802 = vpack.c.b16 %v2642, %v2638
  %v2803 = vpack.c.b16 %v2647, %v2643
  %v2804 = vpack.c.b16 %v2648, %v2644
  %v2805 = vpack.c.b16 %v2649, %v2645
  %v2806 = vpack.c.b16 %v2650, %v2646
  %v2807 = vpack.c.b16 %v2655, %v2651
  %v2808 = vpack.c.b16 %v2656, %v2652
  %v2809 = vpack.c.b16 %v2657, %v2653
  %v2810 = vpack.c.b16 %v2658, %v2654
  %v2811 = vpack.c.b16 %v2663, %v2659
  %v2812 = vpack.c.b16 %v2664, %v2660
  %v2813 = vpack.c.b16 %v2665, %v2661
  %v2814 = vpack.c.b16 %v2666, %v2662
  %v2815 = vpack.c.b16 %v2671, %v2667
  %v2816 = vpack.c.b16 %v2672, %v2668
  %v2817 = vpack.c.b16 %v2673, %v2669
  %v2818 = vpack.c.b16 %v2674, %v2670
  %v2819 = vpack.c.b16 %v2679, %v2675
  %v2820 = vpack.c.b16 %v2680, %v2676
  %v2821 = vpack.c.b16 %v2681, %v2677
  %v2822 = vpack.c.b16 %v2682, %v2678
  %v2823 = vpack.c.b16 %v2687, %v2683
  %v2824 = vpack.c.b16 %v2688, %v2684
  %v2825 = vpack.c.b16 %v2689, %v2685
  %v2826 = vpack.c.b16 %v2690, %v2686
  %v2827 = vpack.c.b16 %v2695, %v2691
  %v2828 = vpack.c.b16 %v2696, %v2692
  %v2829 = vpack.c.b16 %v2697, %v2693
  %v2830 = vpack.c.b16 %v2698, %v2694
  %v2831 = vpack.c.b16 %v2703, %v2699
  %v2832 = vpack.c.b16 %v2704, %v2700
  %v2833 = vpack.c.b16 %v2705, %v2701
  %v2834 = vpack.c.b16 %v2706, %v2702
  %2963 = vmatprep.subr.bf16.mxu0 %v2736
  %2964 = vmatpush1.bf16.msra.mxu0 %v2735
  %2965 = vmatprep.subr.bf16.mxu0 %v2732
  %2966 = vmatpush1.bf16.msra.mxu0 %v2731
  %2967 = vmatprep.subr.bf16.mxu0 %v2728
  %2968 = vmatpush1.bf16.msra.mxu0 %v2727
  %2969 = vmatprep.subr.bf16.mxu0 %v2724
  %2970 = vmatpush1.bf16.msra.mxu0 %v2723
  %2971 = vmatprep.subr.bf16.mxu0 %v2720
  %2972 = vmatpush1.bf16.msra.mxu0 %v2719
  %2973 = vmatprep.subr.bf16.mxu0 %v2716
  %2974 = vmatpush1.bf16.msra.mxu0 %v2715
  %2975 = vmatprep.subr.bf16.mxu0 %v2712
  %2976 = vmatpush1.bf16.msra.mxu0 %v2711
  %2977 = vmatprep.subr.bf16.mxu0 %v2708
  %2978 = vmatpush1.bf16.msra.mxu0 %v2707
  %2979 = vmatprep.subr.bf16.mxu0 %v2768
  %2980 = vmatpush2.bf16.msra.mxu0 %v2767
  %2981 = vmatprep.subr.bf16.mxu0 %v2764
  %2982 = vmatpush2.bf16.msra.mxu0 %v2763
  %2983 = vmatprep.subr.bf16.mxu0 %v2760
  %2984 = vmatpush2.bf16.msra.mxu0 %v2759
  %2985 = vmatprep.subr.bf16.mxu0 %v2756
  %2986 = vmatpush2.bf16.msra.mxu0 %v2755
  %2987 = vmatprep.subr.bf16.mxu0 %v2752
  %2988 = vmatpush2.bf16.msra.mxu0 %v2751
  %2989 = vmatprep.subr.bf16.mxu0 %v2748
  %2990 = vmatpush2.bf16.msra.mxu0 %v2747
  %2991 = vmatprep.subr.bf16.mxu0 %v2744
  %2992 = vmatpush2.bf16.msra.mxu0 %v2743
  %2993 = vmatprep.subr.bf16.mxu0 %v2740
  %2994 = vmatpush2.bf16.msra.mxu0 %v2739
  %2995 = vmatprep.mubr.bf16.mxu0 %v2110
  %2996 = vmatmul.mubr.bf16.gmra.mxu0 %v2109
  %v2997 = vpop.f32.mrf.mxu0
  %v2998 = vadd.f32 %v2306, %v2997
  %v2999 = vpop.f32.mrf.mxu0
  %v3000 = vadd.f32 %v2310, %v2999
  %v3001 = vpop.f32.mrf.mxu0
  %v3002 = vadd.f32 %v2306, %v3001
  %v3003 = vpop.f32.mrf.mxu0
  %v3004 = vadd.f32 %v2310, %v3003
  %3005 = vmatprep.mubr.bf16.mxu0 %v2114
  %3006 = vmatmul.mubr.bf16.gmra.mxu0 %v2113
  %v3007 = vpop.f32.mrf.mxu0
  %v3008 = vadd.f32 %v2306, %v3007
  %v3009 = vpop.f32.mrf.mxu0
  %v3010 = vadd.f32 %v2310, %v3009
  %v3011 = vpop.f32.mrf.mxu0
  %v3012 = vadd.f32 %v2306, %v3011
  %v3013 = vpop.f32.mrf.mxu0
  %v3014 = vadd.f32 %v2310, %v3013
  %3015 = vmatprep.mubr.bf16.mxu0 %v2118
  %3016 = vmatmul.mubr.bf16.gmra.mxu0 %v2117
  %v3017 = vpop.f32.mrf.mxu0
  %v3018 = vadd.f32 %v2306, %v3017
  %v3019 = vpop.f32.mrf.mxu0
  %v3020 = vadd.f32 %v2310, %v3019
  %v3021 = vpop.f32.mrf.mxu0
  %v3022 = vadd.f32 %v2306, %v3021
  %v3023 = vpop.f32.mrf.mxu0
  %v3024 = vadd.f32 %v2310, %v3023
  %3025 = vmatprep.mubr.bf16.mxu0 %v2122
  %3026 = vmatmul.mubr.bf16.gmra.mxu0 %v2121
  %v3027 = vpop.f32.mrf.mxu0
  %v3028 = vadd.f32 %v2306, %v3027
  %v3029 = vpop.f32.mrf.mxu0
  %v3030 = vadd.f32 %v2310, %v3029
  %v3031 = vpop.f32.mrf.mxu0
  %v3032 = vadd.f32 %v2306, %v3031
  %v3033 = vpop.f32.mrf.mxu0
  %v3034 = vadd.f32 %v2310, %v3033
  %3035 = vmatprep.mubr.bf16.mxu0 %v2126
  %3036 = vmatmul.mubr.bf16.gmra.mxu0 %v2125
  %v3037 = vpop.f32.mrf.mxu0
  %v3038 = vadd.f32 %v2306, %v3037
  %v3039 = vpop.f32.mrf.mxu0
  %v3040 = vadd.f32 %v2310, %v3039
  %v3041 = vpop.f32.mrf.mxu0
  %v3042 = vadd.f32 %v2306, %v3041
  %v3043 = vpop.f32.mrf.mxu0
  %v3044 = vadd.f32 %v2310, %v3043
  %3045 = vmatprep.mubr.bf16.mxu0 %v2130
  %3046 = vmatmul.mubr.bf16.gmra.mxu0 %v2129
  %v3047 = vpop.f32.mrf.mxu0
  %v3048 = vadd.f32 %v2306, %v3047
  %v3049 = vpop.f32.mrf.mxu0
  %v3050 = vadd.f32 %v2310, %v3049
  %v3051 = vpop.f32.mrf.mxu0
  %v3052 = vadd.f32 %v2306, %v3051
  %v3053 = vpop.f32.mrf.mxu0
  %v3054 = vadd.f32 %v2310, %v3053
  %3055 = vmatprep.mubr.bf16.mxu0 %v2134
  %3056 = vmatmul.mubr.bf16.gmra.mxu0 %v2133
  %v3057 = vpop.f32.mrf.mxu0
  %v3058 = vadd.f32 %v2306, %v3057
  %v3059 = vpop.f32.mrf.mxu0
  %v3060 = vadd.f32 %v2310, %v3059
  %v3061 = vpop.f32.mrf.mxu0
  %v3062 = vadd.f32 %v2306, %v3061
  %v3063 = vpop.f32.mrf.mxu0
  %v3064 = vadd.f32 %v2310, %v3063
  %3065 = vmatprep.mubr.bf16.mxu0 %v2138
  %3066 = vmatmul.mubr.bf16.gmra.mxu0 %v2137
  %v3067 = vpop.f32.mrf.mxu0
  %v3068 = vadd.f32 %v2306, %v3067
  %v3069 = vpop.f32.mrf.mxu0
  %v3070 = vadd.f32 %v2310, %v3069
  %v3071 = vpop.f32.mrf.mxu0
  %v3072 = vadd.f32 %v2306, %v3071
  %v3073 = vpop.f32.mrf.mxu0
  %v3074 = vadd.f32 %v2310, %v3073
  %3075 = vmatprep.mubr.bf16.mxu0 %v2142
  %3076 = vmatmul.mubr.bf16.gmra.mxu0 %v2141
  %v3077 = vpop.f32.mrf.mxu0
  %v3078 = vadd.f32 %v2306, %v3077
  %v3079 = vpop.f32.mrf.mxu0
  %v3080 = vadd.f32 %v2310, %v3079
  %v3081 = vpop.f32.mrf.mxu0
  %v3082 = vadd.f32 %v2306, %v3081
  %v3083 = vpop.f32.mrf.mxu0
  %v3084 = vadd.f32 %v2310, %v3083
  %3085 = vmatprep.mubr.bf16.mxu0 %v2146
  %3086 = vmatmul.mubr.bf16.gmra.mxu0 %v2145
  %v3087 = vpop.f32.mrf.mxu0
  %v3088 = vadd.f32 %v2306, %v3087
  %v3089 = vpop.f32.mrf.mxu0
  %v3090 = vadd.f32 %v2310, %v3089
  %v3091 = vpop.f32.mrf.mxu0
  %v3092 = vadd.f32 %v2306, %v3091
  %v3093 = vpop.f32.mrf.mxu0
  %v3094 = vadd.f32 %v2310, %v3093
  %3095 = vmatprep.mubr.bf16.mxu0 %v2150
  %3096 = vmatmul.mubr.bf16.gmra.mxu0 %v2149
  %v3097 = vpop.f32.mrf.mxu0
  %v3098 = vadd.f32 %v2306, %v3097
  %v3099 = vpop.f32.mrf.mxu0
  %v3100 = vadd.f32 %v2310, %v3099
  %v3101 = vpop.f32.mrf.mxu0
  %v3102 = vadd.f32 %v2306, %v3101
  %v3103 = vpop.f32.mrf.mxu0
  %v3104 = vadd.f32 %v2310, %v3103
  %3105 = vmatprep.mubr.bf16.mxu0 %v2154
  %3106 = vmatmul.mubr.bf16.gmra.mxu0 %v2153
  %v3107 = vpop.f32.mrf.mxu0
  %v3108 = vadd.f32 %v2306, %v3107
  %v3109 = vpop.f32.mrf.mxu0
  %v3110 = vadd.f32 %v2310, %v3109
  %v3111 = vpop.f32.mrf.mxu0
  %v3112 = vadd.f32 %v2306, %v3111
  %v3113 = vpop.f32.mrf.mxu0
  %v3114 = vadd.f32 %v2310, %v3113
  %3115 = vmatprep.mubr.bf16.mxu0 %v2158
  %3116 = vmatmul.mubr.bf16.gmra.mxu0 %v2157
  %v3117 = vpop.f32.mrf.mxu0
  %v3118 = vadd.f32 %v2306, %v3117
  %v3119 = vpop.f32.mrf.mxu0
  %v3120 = vadd.f32 %v2310, %v3119
  %v3121 = vpop.f32.mrf.mxu0
  %v3122 = vadd.f32 %v2306, %v3121
  %v3123 = vpop.f32.mrf.mxu0
  %v3124 = vadd.f32 %v2310, %v3123
  %3125 = vmatprep.mubr.bf16.mxu0 %v2162
  %3126 = vmatmul.mubr.bf16.gmra.mxu0 %v2161
  %v3127 = vpop.f32.mrf.mxu0
  %v3128 = vadd.f32 %v2306, %v3127
  %v3129 = vpop.f32.mrf.mxu0
  %v3130 = vadd.f32 %v2310, %v3129
  %v3131 = vpop.f32.mrf.mxu0
  %v3132 = vadd.f32 %v2306, %v3131
  %v3133 = vpop.f32.mrf.mxu0
  %v3134 = vadd.f32 %v2310, %v3133
  %3135 = vmatprep.mubr.bf16.mxu0 %v2166
  %3136 = vmatmul.mubr.bf16.gmra.mxu0 %v2165
  %v3137 = vpop.f32.mrf.mxu0
  %v3138 = vadd.f32 %v2306, %v3137
  %v3139 = vpop.f32.mrf.mxu0
  %v3140 = vadd.f32 %v2310, %v3139
  %v3141 = vpop.f32.mrf.mxu0
  %v3142 = vadd.f32 %v2306, %v3141
  %v3143 = vpop.f32.mrf.mxu0
  %v3144 = vadd.f32 %v2310, %v3143
  %3145 = vmatprep.mubr.bf16.mxu0 %v2170
  %3146 = vmatmul.mubr.bf16.gmra.mxu0 %v2169
  %v3147 = vpop.f32.mrf.mxu0
  %v3148 = vadd.f32 %v2306, %v3147
  %v3149 = vpop.f32.mrf.mxu0
  %v3150 = vadd.f32 %v2310, %v3149
  %v3151 = vpop.f32.mrf.mxu0
  %v3152 = vadd.f32 %v2306, %v3151
  %v3153 = vpop.f32.mrf.mxu0
  %v3154 = vadd.f32 %v2310, %v3153
  %3155 = vdwg.mxu0
  %3156 = vmatprep.subr.bf16.mxu0 %v2800
  %3157 = vmatpush1.bf16.msra.mxu0 %v2799
  %3158 = vmatprep.subr.bf16.mxu0 %v2796
  %3159 = vmatpush1.bf16.msra.mxu0 %v2795
  %3160 = vmatprep.subr.bf16.mxu0 %v2792
  %3161 = vmatpush1.bf16.msra.mxu0 %v2791
  %3162 = vmatprep.subr.bf16.mxu0 %v2788
  %3163 = vmatpush1.bf16.msra.mxu0 %v2787
  %3164 = vmatprep.subr.bf16.mxu0 %v2784
  %3165 = vmatpush1.bf16.msra.mxu0 %v2783
  %3166 = vmatprep.subr.bf16.mxu0 %v2780
  %3167 = vmatpush1.bf16.msra.mxu0 %v2779
  %3168 = vmatprep.subr.bf16.mxu0 %v2776
  %3169 = vmatpush1.bf16.msra.mxu0 %v2775
  %3170 = vmatprep.subr.bf16.mxu0 %v2772
  %3171 = vmatpush1.bf16.msra.mxu0 %v2771
  %3172 = vmatprep.subr.bf16.mxu0 %v2832
  %3173 = vmatpush2.bf16.msra.mxu0 %v2831
  %3174 = vmatprep.subr.bf16.mxu0 %v2828
  %3175 = vmatpush2.bf16.msra.mxu0 %v2827
  %3176 = vmatprep.subr.bf16.mxu0 %v2824
  %3177 = vmatpush2.bf16.msra.mxu0 %v2823
  %3178 = vmatprep.subr.bf16.mxu0 %v2820
  %3179 = vmatpush2.bf16.msra.mxu0 %v2819
  %3180 = vmatprep.subr.bf16.mxu0 %v2816
  %3181 = vmatpush2.bf16.msra.mxu0 %v2815
  %3182 = vmatprep.subr.bf16.mxu0 %v2812
  %3183 = vmatpush2.bf16.msra.mxu0 %v2811
  %3184 = vmatprep.subr.bf16.mxu0 %v2808
  %3185 = vmatpush2.bf16.msra.mxu0 %v2807
  %3186 = vmatprep.subr.bf16.mxu0 %v2804
  %3187 = vmatpush2.bf16.msra.mxu0 %v2803
  %3188 = vmatprep.mubr.bf16.mxu0 %v2112
  %3189 = vmatmul.mubr.bf16.gmra.mxu0 %v2111
  %v3190 = vpop.f32.mrf.mxu0
  %v3191 = vadd.f32 %v2998, %v3190
  %v3192 = vpop.f32.mrf.mxu0
  %v3193 = vadd.f32 %v3000, %v3192
  %v3194 = vpop.f32.mrf.mxu0
  %v3195 = vadd.f32 %v3002, %v3194
  %v3196 = vpop.f32.mrf.mxu0
  %v3197 = vadd.f32 %v3004, %v3196
  %3198 = vmatprep.mubr.bf16.mxu0 %v2116
  %3199 = vmatmul.mubr.bf16.gmra.mxu0 %v2115
  %v3200 = vpop.f32.mrf.mxu0
  %v3201 = vadd.f32 %v3008, %v3200
  %v3202 = vpop.f32.mrf.mxu0
  %v3203 = vadd.f32 %v3010, %v3202
  %v3204 = vpop.f32.mrf.mxu0
  %v3205 = vadd.f32 %v3012, %v3204
  %v3206 = vpop.f32.mrf.mxu0
  %v3207 = vadd.f32 %v3014, %v3206
  %3208 = vmatprep.mubr.bf16.mxu0 %v2120
  %3209 = vmatmul.mubr.bf16.gmra.mxu0 %v2119
  %v3210 = vpop.f32.mrf.mxu0
  %v3211 = vadd.f32 %v3018, %v3210
  %v3212 = vpop.f32.mrf.mxu0
  %v3213 = vadd.f32 %v3020, %v3212
  %v3214 = vpop.f32.mrf.mxu0
  %v3215 = vadd.f32 %v3022, %v3214
  %v3216 = vpop.f32.mrf.mxu0
  %v3217 = vadd.f32 %v3024, %v3216
  %3218 = vmatprep.mubr.bf16.mxu0 %v2124
  %3219 = vmatmul.mubr.bf16.gmra.mxu0 %v2123
  %v3220 = vpop.f32.mrf.mxu0
  %v3221 = vadd.f32 %v3028, %v3220
  %v3222 = vpop.f32.mrf.mxu0
  %v3223 = vadd.f32 %v3030, %v3222
  %v3224 = vpop.f32.mrf.mxu0
  %v3225 = vadd.f32 %v3032, %v3224
  %v3226 = vpop.f32.mrf.mxu0
  %v3227 = vadd.f32 %v3034, %v3226
  %3228 = vmatprep.mubr.bf16.mxu0 %v2128
  %3229 = vmatmul.mubr.bf16.gmra.mxu0 %v2127
  %v3230 = vpop.f32.mrf.mxu0
  %v3231 = vadd.f32 %v3038, %v3230
  %v3232 = vpop.f32.mrf.mxu0
  %v3233 = vadd.f32 %v3040, %v3232
  %v3234 = vpop.f32.mrf.mxu0
  %v3235 = vadd.f32 %v3042, %v3234
  %v3236 = vpop.f32.mrf.mxu0
  %v3237 = vadd.f32 %v3044, %v3236
  %3238 = vmatprep.mubr.bf16.mxu0 %v2132
  %3239 = vmatmul.mubr.bf16.gmra.mxu0 %v2131
  %v3240 = vpop.f32.mrf.mxu0
  %v3241 = vadd.f32 %v3048, %v3240
  %v3242 = vpop.f32.mrf.mxu0
  %v3243 = vadd.f32 %v3050, %v3242
  %v3244 = vpop.f32.mrf.mxu0
  %v3245 = vadd.f32 %v3052, %v3244
  %v3246 = vpop.f32.mrf.mxu0
  %v3247 = vadd.f32 %v3054, %v3246
  %3248 = vmatprep.mubr.bf16.mxu0 %v2136
  %3249 = vmatmul.mubr.bf16.gmra.mxu0 %v2135
  %v3250 = vpop.f32.mrf.mxu0
  %v3251 = vadd.f32 %v3058, %v3250
  %v3252 = vpop.f32.mrf.mxu0
  %v3253 = vadd.f32 %v3060, %v3252
  %v3254 = vpop.f32.mrf.mxu0
  %v3255 = vadd.f32 %v3062, %v3254
  %v3256 = vpop.f32.mrf.mxu0
  %v3257 = vadd.f32 %v3064, %v3256
  %3258 = vmatprep.mubr.bf16.mxu0 %v2140
  %3259 = vmatmul.mubr.bf16.gmra.mxu0 %v2139
  %v3260 = vpop.f32.mrf.mxu0
  %v3261 = vadd.f32 %v3068, %v3260
  %v3262 = vpop.f32.mrf.mxu0
  %v3263 = vadd.f32 %v3070, %v3262
  %v3264 = vpop.f32.mrf.mxu0
  %v3265 = vadd.f32 %v3072, %v3264
  %v3266 = vpop.f32.mrf.mxu0
  %v3267 = vadd.f32 %v3074, %v3266
  %3268 = vmatprep.mubr.bf16.mxu0 %v2144
  %3269 = vmatmul.mubr.bf16.gmra.mxu0 %v2143
  %v3270 = vpop.f32.mrf.mxu0
  %v3271 = vadd.f32 %v3078, %v3270
  %v3272 = vpop.f32.mrf.mxu0
  %v3273 = vadd.f32 %v3080, %v3272
  %v3274 = vpop.f32.mrf.mxu0
  %v3275 = vadd.f32 %v3082, %v3274
  %v3276 = vpop.f32.mrf.mxu0
  %v3277 = vadd.f32 %v3084, %v3276
  %3278 = vmatprep.mubr.bf16.mxu0 %v2148
  %3279 = vmatmul.mubr.bf16.gmra.mxu0 %v2147
  %v3280 = vpop.f32.mrf.mxu0
  %v3281 = vadd.f32 %v3088, %v3280
  %v3282 = vpop.f32.mrf.mxu0
  %v3283 = vadd.f32 %v3090, %v3282
  %v3284 = vpop.f32.mrf.mxu0
  %v3285 = vadd.f32 %v3092, %v3284
  %v3286 = vpop.f32.mrf.mxu0
  %v3287 = vadd.f32 %v3094, %v3286
  %3288 = vmatprep.mubr.bf16.mxu0 %v2152
  %3289 = vmatmul.mubr.bf16.gmra.mxu0 %v2151
  %v3290 = vpop.f32.mrf.mxu0
  %v3291 = vadd.f32 %v3098, %v3290
  %v3292 = vpop.f32.mrf.mxu0
  %v3293 = vadd.f32 %v3100, %v3292
  %v3294 = vpop.f32.mrf.mxu0
  %v3295 = vadd.f32 %v3102, %v3294
  %v3296 = vpop.f32.mrf.mxu0
  %v3297 = vadd.f32 %v3104, %v3296
  %3298 = vmatprep.mubr.bf16.mxu0 %v2156
  %3299 = vmatmul.mubr.bf16.gmra.mxu0 %v2155
  %v3300 = vpop.f32.mrf.mxu0
  %v3301 = vadd.f32 %v3108, %v3300
  %v3302 = vpop.f32.mrf.mxu0
  %v3303 = vadd.f32 %v3110, %v3302
  %v3304 = vpop.f32.mrf.mxu0
  %v3305 = vadd.f32 %v3112, %v3304
  %v3306 = vpop.f32.mrf.mxu0
  %v3307 = vadd.f32 %v3114, %v3306
  %3308 = vmatprep.mubr.bf16.mxu0 %v2160
  %3309 = vmatmul.mubr.bf16.gmra.mxu0 %v2159
  %v3310 = vpop.f32.mrf.mxu0
  %v3311 = vadd.f32 %v3118, %v3310
  %v3312 = vpop.f32.mrf.mxu0
  %v3313 = vadd.f32 %v3120, %v3312
  %v3314 = vpop.f32.mrf.mxu0
  %v3315 = vadd.f32 %v3122, %v3314
  %v3316 = vpop.f32.mrf.mxu0
  %v3317 = vadd.f32 %v3124, %v3316
  %3318 = vmatprep.mubr.bf16.mxu0 %v2164
  %3319 = vmatmul.mubr.bf16.gmra.mxu0 %v2163
  %v3320 = vpop.f32.mrf.mxu0
  %v3321 = vadd.f32 %v3128, %v3320
  %v3322 = vpop.f32.mrf.mxu0
  %v3323 = vadd.f32 %v3130, %v3322
  %v3324 = vpop.f32.mrf.mxu0
  %v3325 = vadd.f32 %v3132, %v3324
  %v3326 = vpop.f32.mrf.mxu0
  %v3327 = vadd.f32 %v3134, %v3326
  %3328 = vmatprep.mubr.bf16.mxu0 %v2168
  %3329 = vmatmul.mubr.bf16.gmra.mxu0 %v2167
  %v3330 = vpop.f32.mrf.mxu0
  %v3331 = vadd.f32 %v3138, %v3330
  %v3332 = vpop.f32.mrf.mxu0
  %v3333 = vadd.f32 %v3140, %v3332
  %v3334 = vpop.f32.mrf.mxu0
  %v3335 = vadd.f32 %v3142, %v3334
  %v3336 = vpop.f32.mrf.mxu0
  %v3337 = vadd.f32 %v3144, %v3336
  %3338 = vmatprep.mubr.bf16.mxu0 %v2172
  %3339 = vmatmul.mubr.bf16.gmra.mxu0 %v2171
  %v3340 = vpop.f32.mrf.mxu0
  %v3341 = vadd.f32 %v3148, %v3340
  %v3342 = vpop.f32.mrf.mxu0
  %v3343 = vadd.f32 %v3150, %v3342
  %v3344 = vpop.f32.mrf.mxu0
  %v3345 = vadd.f32 %v3152, %v3344
  %v3346 = vpop.f32.mrf.mxu0
  %v3347 = vadd.f32 %v3154, %v3346
  %3348 = vdwg.mxu0
  %3349 = vmatprep.subr.bf16.mxu0 %v2738
  %3350 = vmatpush1.bf16.msra.mxu0 %v2737
  %3351 = vmatprep.subr.bf16.mxu0 %v2734
  %3352 = vmatpush1.bf16.msra.mxu0 %v2733
  %3353 = vmatprep.subr.bf16.mxu0 %v2730
  %3354 = vmatpush1.bf16.msra.mxu0 %v2729
  %3355 = vmatprep.subr.bf16.mxu0 %v2726
  %3356 = vmatpush1.bf16.msra.mxu0 %v2725
  %3357 = vmatprep.subr.bf16.mxu0 %v2722
  %3358 = vmatpush1.bf16.msra.mxu0 %v2721
  %3359 = vmatprep.subr.bf16.mxu0 %v2718
  %3360 = vmatpush1.bf16.msra.mxu0 %v2717
  %3361 = vmatprep.subr.bf16.mxu0 %v2714
  %3362 = vmatpush1.bf16.msra.mxu0 %v2713
  %3363 = vmatprep.subr.bf16.mxu0 %v2710
  %3364 = vmatpush1.bf16.msra.mxu0 %v2709
  %3365 = vmatprep.subr.bf16.mxu0 %v2770
  %3366 = vmatpush2.bf16.msra.mxu0 %v2769
  %3367 = vmatprep.subr.bf16.mxu0 %v2766
  %3368 = vmatpush2.bf16.msra.mxu0 %v2765
  %3369 = vmatprep.subr.bf16.mxu0 %v2762
  %3370 = vmatpush2.bf16.msra.mxu0 %v2761
  %3371 = vmatprep.subr.bf16.mxu0 %v2758
  %3372 = vmatpush2.bf16.msra.mxu0 %v2757
  %3373 = vmatprep.subr.bf16.mxu0 %v2754
  %3374 = vmatpush2.bf16.msra.mxu0 %v2753
  %3375 = vmatprep.subr.bf16.mxu0 %v2750
  %3376 = vmatpush2.bf16.msra.mxu0 %v2749
  %3377 = vmatprep.subr.bf16.mxu0 %v2746
  %3378 = vmatpush2.bf16.msra.mxu0 %v2745
  %3379 = vmatprep.subr.bf16.mxu0 %v2742
  %3380 = vmatpush2.bf16.msra.mxu0 %v2741
  %3381 = vmatprep.mubr.bf16.mxu0 %v2110
  %3382 = vmatmul.mubr.bf16.gmra.mxu0 %v2109
  %v3383 = vpop.f32.mrf.mxu0
  %v3384 = vadd.f32 %v2314, %v3383
  %v3385 = vpop.f32.mrf.mxu0
  %v3386 = vadd.f32 %v2318, %v3385
  %v3387 = vpop.f32.mrf.mxu0
  %v3388 = vadd.f32 %v2314, %v3387
  %v3389 = vpop.f32.mrf.mxu0
  %v3390 = vadd.f32 %v2318, %v3389
  %3391 = vmatprep.mubr.bf16.mxu0 %v2114
  %3392 = vmatmul.mubr.bf16.gmra.mxu0 %v2113
  %v3393 = vpop.f32.mrf.mxu0
  %v3394 = vadd.f32 %v2314, %v3393
  %v3395 = vpop.f32.mrf.mxu0
  %v3396 = vadd.f32 %v2318, %v3395
  %v3397 = vpop.f32.mrf.mxu0
  %v3398 = vadd.f32 %v2314, %v3397
  %v3399 = vpop.f32.mrf.mxu0
  %v3400 = vadd.f32 %v2318, %v3399
  %3401 = vmatprep.mubr.bf16.mxu0 %v2118
  %3402 = vmatmul.mubr.bf16.gmra.mxu0 %v2117
  %v3403 = vpop.f32.mrf.mxu0
  %v3404 = vadd.f32 %v2314, %v3403
  %v3405 = vpop.f32.mrf.mxu0
  %v3406 = vadd.f32 %v2318, %v3405
  %v3407 = vpop.f32.mrf.mxu0
  %v3408 = vadd.f32 %v2314, %v3407
  %v3409 = vpop.f32.mrf.mxu0
  %v3410 = vadd.f32 %v2318, %v3409
  %3411 = vmatprep.mubr.bf16.mxu0 %v2122
  %3412 = vmatmul.mubr.bf16.gmra.mxu0 %v2121
  %v3413 = vpop.f32.mrf.mxu0
  %v3414 = vadd.f32 %v2314, %v3413
  %v3415 = vpop.f32.mrf.mxu0
  %v3416 = vadd.f32 %v2318, %v3415
  %v3417 = vpop.f32.mrf.mxu0
  %v3418 = vadd.f32 %v2314, %v3417
  %v3419 = vpop.f32.mrf.mxu0
  %v3420 = vadd.f32 %v2318, %v3419
  %3421 = vmatprep.mubr.bf16.mxu0 %v2126
  %3422 = vmatmul.mubr.bf16.gmra.mxu0 %v2125
  %v3423 = vpop.f32.mrf.mxu0
  %v3424 = vadd.f32 %v2314, %v3423
  %v3425 = vpop.f32.mrf.mxu0
  %v3426 = vadd.f32 %v2318, %v3425
  %v3427 = vpop.f32.mrf.mxu0
  %v3428 = vadd.f32 %v2314, %v3427
  %v3429 = vpop.f32.mrf.mxu0
  %v3430 = vadd.f32 %v2318, %v3429
  %3431 = vmatprep.mubr.bf16.mxu0 %v2130
  %3432 = vmatmul.mubr.bf16.gmra.mxu0 %v2129
  %v3433 = vpop.f32.mrf.mxu0
  %v3434 = vadd.f32 %v2314, %v3433
  %v3435 = vpop.f32.mrf.mxu0
  %v3436 = vadd.f32 %v2318, %v3435
  %v3437 = vpop.f32.mrf.mxu0
  %v3438 = vadd.f32 %v2314, %v3437
  %v3439 = vpop.f32.mrf.mxu0
  %v3440 = vadd.f32 %v2318, %v3439
  %3441 = vmatprep.mubr.bf16.mxu0 %v2134
  %3442 = vmatmul.mubr.bf16.gmra.mxu0 %v2133
  %v3443 = vpop.f32.mrf.mxu0
  %v3444 = vadd.f32 %v2314, %v3443
  %v3445 = vpop.f32.mrf.mxu0
  %v3446 = vadd.f32 %v2318, %v3445
  %v3447 = vpop.f32.mrf.mxu0
  %v3448 = vadd.f32 %v2314, %v3447
  %v3449 = vpop.f32.mrf.mxu0
  %v3450 = vadd.f32 %v2318, %v3449
  %3451 = vmatprep.mubr.bf16.mxu0 %v2138
  %3452 = vmatmul.mubr.bf16.gmra.mxu0 %v2137
  %v3453 = vpop.f32.mrf.mxu0
  %v3454 = vadd.f32 %v2314, %v3453
  %v3455 = vpop.f32.mrf.mxu0
  %v3456 = vadd.f32 %v2318, %v3455
  %v3457 = vpop.f32.mrf.mxu0
  %v3458 = vadd.f32 %v2314, %v3457
  %v3459 = vpop.f32.mrf.mxu0
  %v3460 = vadd.f32 %v2318, %v3459
  %3461 = vmatprep.mubr.bf16.mxu0 %v2142
  %3462 = vmatmul.mubr.bf16.gmra.mxu0 %v2141
  %v3463 = vpop.f32.mrf.mxu0
  %v3464 = vadd.f32 %v2314, %v3463
  %v3465 = vpop.f32.mrf.mxu0
  %v3466 = vadd.f32 %v2318, %v3465
  %v3467 = vpop.f32.mrf.mxu0
  %v3468 = vadd.f32 %v2314, %v3467
  %v3469 = vpop.f32.mrf.mxu0
  %v3470 = vadd.f32 %v2318, %v3469
  %3471 = vmatprep.mubr.bf16.mxu0 %v2146
  %3472 = vmatmul.mubr.bf16.gmra.mxu0 %v2145
  %v3473 = vpop.f32.mrf.mxu0
  %v3474 = vadd.f32 %v2314, %v3473
  %v3475 = vpop.f32.mrf.mxu0
  %v3476 = vadd.f32 %v2318, %v3475
  %v3477 = vpop.f32.mrf.mxu0
  %v3478 = vadd.f32 %v2314, %v3477
  %v3479 = vpop.f32.mrf.mxu0
  %v3480 = vadd.f32 %v2318, %v3479
  %3481 = vmatprep.mubr.bf16.mxu0 %v2150
  %3482 = vmatmul.mubr.bf16.gmra.mxu0 %v2149
  %v3483 = vpop.f32.mrf.mxu0
  %v3484 = vadd.f32 %v2314, %v3483
  %v3485 = vpop.f32.mrf.mxu0
  %v3486 = vadd.f32 %v2318, %v3485
  %v3487 = vpop.f32.mrf.mxu0
  %v3488 = vadd.f32 %v2314, %v3487
  %v3489 = vpop.f32.mrf.mxu0
  %v3490 = vadd.f32 %v2318, %v3489
  %3491 = vmatprep.mubr.bf16.mxu0 %v2154
  %3492 = vmatmul.mubr.bf16.gmra.mxu0 %v2153
  %v3493 = vpop.f32.mrf.mxu0
  %v3494 = vadd.f32 %v2314, %v3493
  %v3495 = vpop.f32.mrf.mxu0
  %v3496 = vadd.f32 %v2318, %v3495
  %v3497 = vpop.f32.mrf.mxu0
  %v3498 = vadd.f32 %v2314, %v3497
  %v3499 = vpop.f32.mrf.mxu0
  %v3500 = vadd.f32 %v2318, %v3499
  %3501 = vmatprep.mubr.bf16.mxu0 %v2158
  %3502 = vmatmul.mubr.bf16.gmra.mxu0 %v2157
  %v3503 = vpop.f32.mrf.mxu0
  %v3504 = vadd.f32 %v2314, %v3503
  %v3505 = vpop.f32.mrf.mxu0
  %v3506 = vadd.f32 %v2318, %v3505
  %v3507 = vpop.f32.mrf.mxu0
  %v3508 = vadd.f32 %v2314, %v3507
  %v3509 = vpop.f32.mrf.mxu0
  %v3510 = vadd.f32 %v2318, %v3509
  %3511 = vmatprep.mubr.bf16.mxu0 %v2162
  %3512 = vmatmul.mubr.bf16.gmra.mxu0 %v2161
  %v3513 = vpop.f32.mrf.mxu0
  %v3514 = vadd.f32 %v2314, %v3513
  %v3515 = vpop.f32.mrf.mxu0
  %v3516 = vadd.f32 %v2318, %v3515
  %v3517 = vpop.f32.mrf.mxu0
  %v3518 = vadd.f32 %v2314, %v3517
  %v3519 = vpop.f32.mrf.mxu0
  %v3520 = vadd.f32 %v2318, %v3519
  %3521 = vmatprep.mubr.bf16.mxu0 %v2166
  %3522 = vmatmul.mubr.bf16.gmra.mxu0 %v2165
  %v3523 = vpop.f32.mrf.mxu0
  %v3524 = vadd.f32 %v2314, %v3523
  %v3525 = vpop.f32.mrf.mxu0
  %v3526 = vadd.f32 %v2318, %v3525
  %v3527 = vpop.f32.mrf.mxu0
  %v3528 = vadd.f32 %v2314, %v3527
  %v3529 = vpop.f32.mrf.mxu0
  %v3530 = vadd.f32 %v2318, %v3529
  %3531 = vmatprep.mubr.bf16.mxu0 %v2170
  %3532 = vmatmul.mubr.bf16.gmra.mxu0 %v2169
  %v3533 = vpop.f32.mrf.mxu0
  %v3534 = vadd.f32 %v2314, %v3533
  %v3535 = vpop.f32.mrf.mxu0
  %v3536 = vadd.f32 %v2318, %v3535
  %v3537 = vpop.f32.mrf.mxu0
  %v3538 = vadd.f32 %v2314, %v3537
  %v3539 = vpop.f32.mrf.mxu0
  %v3540 = vadd.f32 %v2318, %v3539
  %3541 = vdwg.mxu0
  %3542 = vmatprep.subr.bf16.mxu0 %v2802
  %3543 = vmatpush1.bf16.msra.mxu0 %v2801
  %3544 = vmatprep.subr.bf16.mxu0 %v2798
  %3545 = vmatpush1.bf16.msra.mxu0 %v2797
  %3546 = vmatprep.subr.bf16.mxu0 %v2794
  %3547 = vmatpush1.bf16.msra.mxu0 %v2793
  %3548 = vmatprep.subr.bf16.mxu0 %v2790
  %3549 = vmatpush1.bf16.msra.mxu0 %v2789
  %3550 = vmatprep.subr.bf16.mxu0 %v2786
  %3551 = vmatpush1.bf16.msra.mxu0 %v2785
  %3552 = vmatprep.subr.bf16.mxu0 %v2782
  %3553 = vmatpush1.bf16.msra.mxu0 %v2781
  %3554 = vmatprep.subr.bf16.mxu0 %v2778
  %3555 = vmatpush1.bf16.msra.mxu0 %v2777
  %3556 = vmatprep.subr.bf16.mxu0 %v2774
  %3557 = vmatpush1.bf16.msra.mxu0 %v2773
  %3558 = vmatprep.subr.bf16.mxu0 %v2834
  %3559 = vmatpush2.bf16.msra.mxu0 %v2833
  %3560 = vmatprep.subr.bf16.mxu0 %v2830
  %3561 = vmatpush2.bf16.msra.mxu0 %v2829
  %3562 = vmatprep.subr.bf16.mxu0 %v2826
  %3563 = vmatpush2.bf16.msra.mxu0 %v2825
  %3564 = vmatprep.subr.bf16.mxu0 %v2822
  %3565 = vmatpush2.bf16.msra.mxu0 %v2821
  %3566 = vmatprep.subr.bf16.mxu0 %v2818
  %3567 = vmatpush2.bf16.msra.mxu0 %v2817
  %3568 = vmatprep.subr.bf16.mxu0 %v2814
  %3569 = vmatpush2.bf16.msra.mxu0 %v2813
  %3570 = vmatprep.subr.bf16.mxu0 %v2810
  %3571 = vmatpush2.bf16.msra.mxu0 %v2809
  %3572 = vmatprep.subr.bf16.mxu0 %v2806
  %3573 = vmatpush2.bf16.msra.mxu0 %v2805
  %3574 = vmatprep.mubr.bf16.mxu0 %v2112
  %3575 = vmatmul.mubr.bf16.gmra.mxu0 %v2111
  %v3576 = vpop.f32.mrf.mxu0
  %v3577 = vadd.f32 %v3384, %v3576
  %v3578 = vpop.f32.mrf.mxu0
  %v3579 = vadd.f32 %v3386, %v3578
  %v3580 = vpop.f32.mrf.mxu0
  %v3581 = vadd.f32 %v3388, %v3580
  %v3582 = vpop.f32.mrf.mxu0
  %v3583 = vadd.f32 %v3390, %v3582
  %3584 = vmatprep.mubr.bf16.mxu0 %v2116
  %3585 = vmatmul.mubr.bf16.gmra.mxu0 %v2115
  %v3586 = vpop.f32.mrf.mxu0
  %v3587 = vadd.f32 %v3394, %v3586
  %v3588 = vpop.f32.mrf.mxu0
  %v3589 = vadd.f32 %v3396, %v3588
  %v3590 = vpop.f32.mrf.mxu0
  %v3591 = vadd.f32 %v3398, %v3590
  %v3592 = vpop.f32.mrf.mxu0
  %v3593 = vadd.f32 %v3400, %v3592
  %3594 = vmatprep.mubr.bf16.mxu0 %v2120
  %3595 = vmatmul.mubr.bf16.gmra.mxu0 %v2119
  %v3596 = vpop.f32.mrf.mxu0
  %v3597 = vadd.f32 %v3404, %v3596
  %v3598 = vpop.f32.mrf.mxu0
  %v3599 = vadd.f32 %v3406, %v3598
  %v3600 = vpop.f32.mrf.mxu0
  %v3601 = vadd.f32 %v3408, %v3600
  %v3602 = vpop.f32.mrf.mxu0
  %v3603 = vadd.f32 %v3410, %v3602
  %3604 = vmatprep.mubr.bf16.mxu0 %v2124
  %3605 = vmatmul.mubr.bf16.gmra.mxu0 %v2123
  %v3606 = vpop.f32.mrf.mxu0
  %v3607 = vadd.f32 %v3414, %v3606
  %v3608 = vpop.f32.mrf.mxu0
  %v3609 = vadd.f32 %v3416, %v3608
  %v3610 = vpop.f32.mrf.mxu0
  %v3611 = vadd.f32 %v3418, %v3610
  %v3612 = vpop.f32.mrf.mxu0
  %v3613 = vadd.f32 %v3420, %v3612
  %3614 = vmatprep.mubr.bf16.mxu0 %v2128
  %3615 = vmatmul.mubr.bf16.gmra.mxu0 %v2127
  %v3616 = vpop.f32.mrf.mxu0
  %v3617 = vadd.f32 %v3424, %v3616
  %v3618 = vpop.f32.mrf.mxu0
  %v3619 = vadd.f32 %v3426, %v3618
  %v3620 = vpop.f32.mrf.mxu0
  %v3621 = vadd.f32 %v3428, %v3620
  %v3622 = vpop.f32.mrf.mxu0
  %v3623 = vadd.f32 %v3430, %v3622
  %3624 = vmatprep.mubr.bf16.mxu0 %v2132
  %3625 = vmatmul.mubr.bf16.gmra.mxu0 %v2131
  %v3626 = vpop.f32.mrf.mxu0
  %v3627 = vadd.f32 %v3434, %v3626
  %v3628 = vpop.f32.mrf.mxu0
  %v3629 = vadd.f32 %v3436, %v3628
  %v3630 = vpop.f32.mrf.mxu0
  %v3631 = vadd.f32 %v3438, %v3630
  %v3632 = vpop.f32.mrf.mxu0
  %v3633 = vadd.f32 %v3440, %v3632
  %3634 = vmatprep.mubr.bf16.mxu0 %v2136
  %3635 = vmatmul.mubr.bf16.gmra.mxu0 %v2135
  %v3636 = vpop.f32.mrf.mxu0
  %v3637 = vadd.f32 %v3444, %v3636
  %v3638 = vpop.f32.mrf.mxu0
  %v3639 = vadd.f32 %v3446, %v3638
  %v3640 = vpop.f32.mrf.mxu0
  %v3641 = vadd.f32 %v3448, %v3640
  %v3642 = vpop.f32.mrf.mxu0
  %v3643 = vadd.f32 %v3450, %v3642
  %3644 = vmatprep.mubr.bf16.mxu0 %v2140
  %3645 = vmatmul.mubr.bf16.gmra.mxu0 %v2139
  %v3646 = vpop.f32.mrf.mxu0
  %v3647 = vadd.f32 %v3454, %v3646
  %v3648 = vpop.f32.mrf.mxu0
  %v3649 = vadd.f32 %v3456, %v3648
  %v3650 = vpop.f32.mrf.mxu0
  %v3651 = vadd.f32 %v3458, %v3650
  %v3652 = vpop.f32.mrf.mxu0
  %v3653 = vadd.f32 %v3460, %v3652
  %3654 = vmatprep.mubr.bf16.mxu0 %v2144
  %3655 = vmatmul.mubr.bf16.gmra.mxu0 %v2143
  %v3656 = vpop.f32.mrf.mxu0
  %v3657 = vadd.f32 %v3464, %v3656
  %v3658 = vpop.f32.mrf.mxu0
  %v3659 = vadd.f32 %v3466, %v3658
  %v3660 = vpop.f32.mrf.mxu0
  %v3661 = vadd.f32 %v3468, %v3660
  %v3662 = vpop.f32.mrf.mxu0
  %v3663 = vadd.f32 %v3470, %v3662
  %3664 = vmatprep.mubr.bf16.mxu0 %v2148
  %3665 = vmatmul.mubr.bf16.gmra.mxu0 %v2147
  %v3666 = vpop.f32.mrf.mxu0
  %v3667 = vadd.f32 %v3474, %v3666
  %v3668 = vpop.f32.mrf.mxu0
  %v3669 = vadd.f32 %v3476, %v3668
  %v3670 = vpop.f32.mrf.mxu0
  %v3671 = vadd.f32 %v3478, %v3670
  %v3672 = vpop.f32.mrf.mxu0
  %v3673 = vadd.f32 %v3480, %v3672
  %3674 = vmatprep.mubr.bf16.mxu0 %v2152
  %3675 = vmatmul.mubr.bf16.gmra.mxu0 %v2151
  %v3676 = vpop.f32.mrf.mxu0
  %v3677 = vadd.f32 %v3484, %v3676
  %v3678 = vpop.f32.mrf.mxu0
  %v3679 = vadd.f32 %v3486, %v3678
  %v3680 = vpop.f32.mrf.mxu0
  %v3681 = vadd.f32 %v3488, %v3680
  %v3682 = vpop.f32.mrf.mxu0
  %v3683 = vadd.f32 %v3490, %v3682
  %3684 = vmatprep.mubr.bf16.mxu0 %v2156
  %3685 = vmatmul.mubr.bf16.gmra.mxu0 %v2155
  %v3686 = vpop.f32.mrf.mxu0
  %v3687 = vadd.f32 %v3494, %v3686
  %v3688 = vpop.f32.mrf.mxu0
  %v3689 = vadd.f32 %v3496, %v3688
  %v3690 = vpop.f32.mrf.mxu0
  %v3691 = vadd.f32 %v3498, %v3690
  %v3692 = vpop.f32.mrf.mxu0
  %v3693 = vadd.f32 %v3500, %v3692
  %3694 = vmatprep.mubr.bf16.mxu0 %v2160
  %3695 = vmatmul.mubr.bf16.gmra.mxu0 %v2159
  %v3696 = vpop.f32.mrf.mxu0
  %v3697 = vadd.f32 %v3504, %v3696
  %v3698 = vpop.f32.mrf.mxu0
  %v3699 = vadd.f32 %v3506, %v3698
  %v3700 = vpop.f32.mrf.mxu0
  %v3701 = vadd.f32 %v3508, %v3700
  %v3702 = vpop.f32.mrf.mxu0
  %v3703 = vadd.f32 %v3510, %v3702
  %3704 = vmatprep.mubr.bf16.mxu0 %v2164
  %3705 = vmatmul.mubr.bf16.gmra.mxu0 %v2163
  %v3706 = vpop.f32.mrf.mxu0
  %v3707 = vadd.f32 %v3514, %v3706
  %v3708 = vpop.f32.mrf.mxu0
  %v3709 = vadd.f32 %v3516, %v3708
  %v3710 = vpop.f32.mrf.mxu0
  %v3711 = vadd.f32 %v3518, %v3710
  %v3712 = vpop.f32.mrf.mxu0
  %v3713 = vadd.f32 %v3520, %v3712
  %3714 = vmatprep.mubr.bf16.mxu0 %v2168
  %3715 = vmatmul.mubr.bf16.gmra.mxu0 %v2167
  %v3716 = vpop.f32.mrf.mxu0
  %v3717 = vadd.f32 %v3524, %v3716
  %v3718 = vpop.f32.mrf.mxu0
  %v3719 = vadd.f32 %v3526, %v3718
  %v3720 = vpop.f32.mrf.mxu0
  %v3721 = vadd.f32 %v3528, %v3720
  %v3722 = vpop.f32.mrf.mxu0
  %v3723 = vadd.f32 %v3530, %v3722
  %3724 = vmatprep.mubr.bf16.mxu0 %v2172
  %3725 = vmatmul.mubr.bf16.gmra.mxu0 %v2171
  %v3726 = vpop.f32.mrf.mxu0
  %v3727 = vadd.f32 %v3534, %v3726
  %v3728 = vpop.f32.mrf.mxu0
  %v3729 = vadd.f32 %v3536, %v3728
  %v3730 = vpop.f32.mrf.mxu0
  %v3731 = vadd.f32 %v3538, %v3730
  %v3732 = vpop.f32.mrf.mxu0
  %v3733 = vadd.f32 %v3540, %v3732
  %3734 = vdwg.mxu0
  %vm3735 = vcmp.gt.f32.partialorder %v3191, 0.0
  %vm3736 = vcmp.gt.f32.partialorder %v3193, 0.0
  %vm3737 = vcmp.gt.f32.partialorder %v3577, 0.0
  %vm3738 = vcmp.gt.f32.partialorder %v3579, 0.0
  %vm3739 = vcmp.gt.f32.partialorder %v3195, 0.0
  %vm3740 = vcmp.gt.f32.partialorder %v3197, 0.0
  %vm3741 = vcmp.gt.f32.partialorder %v3581, 0.0
  %vm3742 = vcmp.gt.f32.partialorder %v3583, 0.0
  %vm3743 = vcmp.gt.f32.partialorder %v3201, 0.0
  %vm3744 = vcmp.gt.f32.partialorder %v3203, 0.0
  %vm3745 = vcmp.gt.f32.partialorder %v3587, 0.0
  %vm3746 = vcmp.gt.f32.partialorder %v3589, 0.0
  %vm3747 = vcmp.gt.f32.partialorder %v3205, 0.0
  %vm3748 = vcmp.gt.f32.partialorder %v3207, 0.0
  %vm3749 = vcmp.gt.f32.partialorder %v3591, 0.0
  %vm3750 = vcmp.gt.f32.partialorder %v3593, 0.0
  %vm3751 = vcmp.gt.f32.partialorder %v3211, 0.0
  %vm3752 = vcmp.gt.f32.partialorder %v3213, 0.0
  %vm3753 = vcmp.gt.f32.partialorder %v3597, 0.0
  %vm3754 = vcmp.gt.f32.partialorder %v3599, 0.0
  %vm3755 = vcmp.gt.f32.partialorder %v3215, 0.0
  %vm3756 = vcmp.gt.f32.partialorder %v3217, 0.0
  %vm3757 = vcmp.gt.f32.partialorder %v3601, 0.0
  %vm3758 = vcmp.gt.f32.partialorder %v3603, 0.0
  %vm3759 = vcmp.gt.f32.partialorder %v3221, 0.0
  %vm3760 = vcmp.gt.f32.partialorder %v3223, 0.0
  %vm3761 = vcmp.gt.f32.partialorder %v3607, 0.0
  %vm3762 = vcmp.gt.f32.partialorder %v3609, 0.0
  %vm3763 = vcmp.gt.f32.partialorder %v3225, 0.0
  %vm3764 = vcmp.gt.f32.partialorder %v3227, 0.0
  %vm3765 = vcmp.gt.f32.partialorder %v3611, 0.0
  %vm3766 = vcmp.gt.f32.partialorder %v3613, 0.0
  %vm3767 = vcmp.gt.f32.partialorder %v3231, 0.0
  %vm3768 = vcmp.gt.f32.partialorder %v3233, 0.0
  %vm3769 = vcmp.gt.f32.partialorder %v3617, 0.0
  %vm3770 = vcmp.gt.f32.partialorder %v3619, 0.0
  %vm3771 = vcmp.gt.f32.partialorder %v3235, 0.0
  %vm3772 = vcmp.gt.f32.partialorder %v3237, 0.0
  %vm3773 = vcmp.gt.f32.partialorder %v3621, 0.0
  %vm3774 = vcmp.gt.f32.partialorder %v3623, 0.0
  %vm3775 = vcmp.gt.f32.partialorder %v3241, 0.0
  %vm3776 = vcmp.gt.f32.partialorder %v3243, 0.0
  %vm3777 = vcmp.gt.f32.partialorder %v3627, 0.0
  %vm3778 = vcmp.gt.f32.partialorder %v3629, 0.0
  %vm3779 = vcmp.gt.f32.partialorder %v3245, 0.0
  %vm3780 = vcmp.gt.f32.partialorder %v3247, 0.0
  %vm3781 = vcmp.gt.f32.partialorder %v3631, 0.0
  %vm3782 = vcmp.gt.f32.partialorder %v3633, 0.0
  %vm3783 = vcmp.gt.f32.partialorder %v3251, 0.0
  %vm3784 = vcmp.gt.f32.partialorder %v3253, 0.0
  %vm3785 = vcmp.gt.f32.partialorder %v3637, 0.0
  %vm3786 = vcmp.gt.f32.partialorder %v3639, 0.0
  %vm3787 = vcmp.gt.f32.partialorder %v3255, 0.0
  %vm3788 = vcmp.gt.f32.partialorder %v3257, 0.0
  %vm3789 = vcmp.gt.f32.partialorder %v3641, 0.0
  %vm3790 = vcmp.gt.f32.partialorder %v3643, 0.0
  %vm3791 = vcmp.gt.f32.partialorder %v3261, 0.0
  %vm3792 = vcmp.gt.f32.partialorder %v3263, 0.0
  %vm3793 = vcmp.gt.f32.partialorder %v3647, 0.0
  %vm3794 = vcmp.gt.f32.partialorder %v3649, 0.0
  %vm3795 = vcmp.gt.f32.partialorder %v3265, 0.0
  %vm3796 = vcmp.gt.f32.partialorder %v3267, 0.0
  %vm3797 = vcmp.gt.f32.partialorder %v3651, 0.0
  %vm3798 = vcmp.gt.f32.partialorder %v3653, 0.0
  %vm3799 = vcmp.gt.f32.partialorder %v3271, 0.0
  %vm3800 = vcmp.gt.f32.partialorder %v3273, 0.0
  %vm3801 = vcmp.gt.f32.partialorder %v3657, 0.0
  %vm3802 = vcmp.gt.f32.partialorder %v3659, 0.0
  %vm3803 = vcmp.gt.f32.partialorder %v3275, 0.0
  %vm3804 = vcmp.gt.f32.partialorder %v3277, 0.0
  %vm3805 = vcmp.gt.f32.partialorder %v3661, 0.0
  %vm3806 = vcmp.gt.f32.partialorder %v3663, 0.0
  %vm3807 = vcmp.gt.f32.partialorder %v3281, 0.0
  %vm3808 = vcmp.gt.f32.partialorder %v3283, 0.0
  %vm3809 = vcmp.gt.f32.partialorder %v3667, 0.0
  %vm3810 = vcmp.gt.f32.partialorder %v3669, 0.0
  %vm3811 = vcmp.gt.f32.partialorder %v3285, 0.0
  %vm3812 = vcmp.gt.f32.partialorder %v3287, 0.0
  %vm3813 = vcmp.gt.f32.partialorder %v3671, 0.0
  %vm3814 = vcmp.gt.f32.partialorder %v3673, 0.0
  %vm3815 = vcmp.gt.f32.partialorder %v3291, 0.0
  %vm3816 = vcmp.gt.f32.partialorder %v3293, 0.0
  %vm3817 = vcmp.gt.f32.partialorder %v3677, 0.0
  %vm3818 = vcmp.gt.f32.partialorder %v3679, 0.0
  %vm3819 = vcmp.gt.f32.partialorder %v3295, 0.0
  %vm3820 = vcmp.gt.f32.partialorder %v3297, 0.0
  %vm3821 = vcmp.gt.f32.partialorder %v3681, 0.0
  %vm3822 = vcmp.gt.f32.partialorder %v3683, 0.0
  %vm3823 = vcmp.gt.f32.partialorder %v3301, 0.0
  %vm3824 = vcmp.gt.f32.partialorder %v3303, 0.0
  %vm3825 = vcmp.gt.f32.partialorder %v3687, 0.0
  %vm3826 = vcmp.gt.f32.partialorder %v3689, 0.0
  %vm3827 = vcmp.gt.f32.partialorder %v3305, 0.0
  %vm3828 = vcmp.gt.f32.partialorder %v3307, 0.0
  %vm3829 = vcmp.gt.f32.partialorder %v3691, 0.0
  %vm3830 = vcmp.gt.f32.partialorder %v3693, 0.0
  %vm3831 = vcmp.gt.f32.partialorder %v3311, 0.0
  %vm3832 = vcmp.gt.f32.partialorder %v3313, 0.0
  %vm3833 = vcmp.gt.f32.partialorder %v3697, 0.0
  %vm3834 = vcmp.gt.f32.partialorder %v3699, 0.0
  %vm3835 = vcmp.gt.f32.partialorder %v3315, 0.0
  %vm3836 = vcmp.gt.f32.partialorder %v3317, 0.0
  %vm3837 = vcmp.gt.f32.partialorder %v3701, 0.0
  %vm3838 = vcmp.gt.f32.partialorder %v3703, 0.0
  %vm3839 = vcmp.gt.f32.partialorder %v3321, 0.0
  %vm3840 = vcmp.gt.f32.partialorder %v3323, 0.0
  %vm3841 = vcmp.gt.f32.partialorder %v3707, 0.0
  %vm3842 = vcmp.gt.f32.partialorder %v3709, 0.0
  %vm3843 = vcmp.gt.f32.partialorder %v3325, 0.0
  %vm3844 = vcmp.gt.f32.partialorder %v3327, 0.0
  %vm3845 = vcmp.gt.f32.partialorder %v3711, 0.0
  %vm3846 = vcmp.gt.f32.partialorder %v3713, 0.0
  %vm3847 = vcmp.gt.f32.partialorder %v3331, 0.0
  %vm3848 = vcmp.gt.f32.partialorder %v3333, 0.0
  %vm3849 = vcmp.gt.f32.partialorder %v3717, 0.0
  %vm3850 = vcmp.gt.f32.partialorder %v3719, 0.0
  %vm3851 = vcmp.gt.f32.partialorder %v3335, 0.0
  %vm3852 = vcmp.gt.f32.partialorder %v3337, 0.0
  %vm3853 = vcmp.gt.f32.partialorder %v3721, 0.0
  %vm3854 = vcmp.gt.f32.partialorder %v3723, 0.0
  %vm3855 = vcmp.gt.f32.partialorder %v3341, 0.0
  %vm3856 = vcmp.gt.f32.partialorder %v3343, 0.0
  %vm3857 = vcmp.gt.f32.partialorder %v3727, 0.0
  %vm3858 = vcmp.gt.f32.partialorder %v3729, 0.0
  %vm3859 = vcmp.gt.f32.partialorder %v3345, 0.0
  %vm3860 = vcmp.gt.f32.partialorder %v3347, 0.0
  %vm3861 = vcmp.gt.f32.partialorder %v3731, 0.0
  %vm3862 = vcmp.gt.f32.partialorder %v3733, 0.0
  %v3863 = vmul.f32 %v3191, 0.2
  %v3864 = vmul.f32 %v3193, 0.2
  %v3865 = vmul.f32 %v3577, 0.2
  %v3866 = vmul.f32 %v3579, 0.2
  %v3867 = vmul.f32 %v3195, 0.2
  %v3868 = vmul.f32 %v3197, 0.2
  %v3869 = vmul.f32 %v3581, 0.2
  %v3870 = vmul.f32 %v3583, 0.2
  %v3871 = vmul.f32 %v3201, 0.2
  %v3872 = vmul.f32 %v3203, 0.2
  %v3873 = vmul.f32 %v3587, 0.2
  %v3874 = vmul.f32 %v3589, 0.2
  %v3875 = vmul.f32 %v3205, 0.2
  %v3876 = vmul.f32 %v3207, 0.2
  %v3877 = vmul.f32 %v3591, 0.2
  %v3878 = vmul.f32 %v3593, 0.2
  %v3879 = vmul.f32 %v3211, 0.2
  %v3880 = vmul.f32 %v3213, 0.2
  %v3881 = vmul.f32 %v3597, 0.2
  %v3882 = vmul.f32 %v3599, 0.2
  %v3883 = vmul.f32 %v3215, 0.2
  %v3884 = vmul.f32 %v3217, 0.2
  %v3885 = vmul.f32 %v3601, 0.2
  %v3886 = vmul.f32 %v3603, 0.2
  %v3887 = vmul.f32 %v3221, 0.2
  %v3888 = vmul.f32 %v3223, 0.2
  %v3889 = vmul.f32 %v3607, 0.2
  %v3890 = vmul.f32 %v3609, 0.2
  %v3891 = vmul.f32 %v3225, 0.2
  %v3892 = vmul.f32 %v3227, 0.2
  %v3893 = vmul.f32 %v3611, 0.2
  %v3894 = vmul.f32 %v3613, 0.2
  %v3895 = vmul.f32 %v3231, 0.2
  %v3896 = vmul.f32 %v3233, 0.2
  %v3897 = vmul.f32 %v3617, 0.2
  %v3898 = vmul.f32 %v3619, 0.2
  %v3899 = vmul.f32 %v3235, 0.2
  %v3900 = vmul.f32 %v3237, 0.2
  %v3901 = vmul.f32 %v3621, 0.2
  %v3902 = vmul.f32 %v3623, 0.2
  %v3903 = vmul.f32 %v3241, 0.2
  %v3904 = vmul.f32 %v3243, 0.2
  %v3905 = vmul.f32 %v3627, 0.2
  %v3906 = vmul.f32 %v3629, 0.2
  %v3907 = vmul.f32 %v3245, 0.2
  %v3908 = vmul.f32 %v3247, 0.2
  %v3909 = vmul.f32 %v3631, 0.2
  %v3910 = vmul.f32 %v3633, 0.2
  %v3911 = vmul.f32 %v3251, 0.2
  %v3912 = vmul.f32 %v3253, 0.2
  %v3913 = vmul.f32 %v3637, 0.2
  %v3914 = vmul.f32 %v3639, 0.2
  %v3915 = vmul.f32 %v3255, 0.2
  %v3916 = vmul.f32 %v3257, 0.2
  %v3917 = vmul.f32 %v3641, 0.2
  %v3918 = vmul.f32 %v3643, 0.2
  %v3919 = vmul.f32 %v3261, 0.2
  %v3920 = vmul.f32 %v3263, 0.2
  %v3921 = vmul.f32 %v3647, 0.2
  %v3922 = vmul.f32 %v3649, 0.2
  %v3923 = vmul.f32 %v3265, 0.2
  %v3924 = vmul.f32 %v3267, 0.2
  %v3925 = vmul.f32 %v3651, 0.2
  %v3926 = vmul.f32 %v3653, 0.2
  %v3927 = vmul.f32 %v3271, 0.2
  %v3928 = vmul.f32 %v3273, 0.2
  %v3929 = vmul.f32 %v3657, 0.2
  %v3930 = vmul.f32 %v3659, 0.2
  %v3931 = vmul.f32 %v3275, 0.2
  %v3932 = vmul.f32 %v3277, 0.2
  %v3933 = vmul.f32 %v3661, 0.2
  %v3934 = vmul.f32 %v3663, 0.2
  %v3935 = vmul.f32 %v3281, 0.2
  %v3936 = vmul.f32 %v3283, 0.2
  %v3937 = vmul.f32 %v3667, 0.2
  %v3938 = vmul.f32 %v3669, 0.2
  %v3939 = vmul.f32 %v3285, 0.2
  %v3940 = vmul.f32 %v3287, 0.2
  %v3941 = vmul.f32 %v3671, 0.2
  %v3942 = vmul.f32 %v3673, 0.2
  %v3943 = vmul.f32 %v3291, 0.2
  %v3944 = vmul.f32 %v3293, 0.2
  %v3945 = vmul.f32 %v3677, 0.2
  %v3946 = vmul.f32 %v3679, 0.2
  %v3947 = vmul.f32 %v3295, 0.2
  %v3948 = vmul.f32 %v3297, 0.2
  %v3949 = vmul.f32 %v3681, 0.2
  %v3950 = vmul.f32 %v3683, 0.2
  %v3951 = vmul.f32 %v3301, 0.2
  %v3952 = vmul.f32 %v3303, 0.2
  %v3953 = vmul.f32 %v3687, 0.2
  %v3954 = vmul.f32 %v3689, 0.2
  %v3955 = vmul.f32 %v3305, 0.2
  %v3956 = vmul.f32 %v3307, 0.2
  %v3957 = vmul.f32 %v3691, 0.2
  %v3958 = vmul.f32 %v3693, 0.2
  %v3959 = vmul.f32 %v3311, 0.2
  %v3960 = vmul.f32 %v3313, 0.2
  %v3961 = vmul.f32 %v3697, 0.2
  %v3962 = vmul.f32 %v3699, 0.2
  %v3963 = vmul.f32 %v3315, 0.2
  %v3964 = vmul.f32 %v3317, 0.2
  %v3965 = vmul.f32 %v3701, 0.2
  %v3966 = vmul.f32 %v3703, 0.2
  %v3967 = vmul.f32 %v3321, 0.2
  %v3968 = vmul.f32 %v3323, 0.2
  %v3969 = vmul.f32 %v3707, 0.2
  %v3970 = vmul.f32 %v3709, 0.2
  %v3971 = vmul.f32 %v3325, 0.2
  %v3972 = vmul.f32 %v3327, 0.2
  %v3973 = vmul.f32 %v3711, 0.2
  %v3974 = vmul.f32 %v3713, 0.2
  %v3975 = vmul.f32 %v3331, 0.2
  %v3976 = vmul.f32 %v3333, 0.2
  %v3977 = vmul.f32 %v3717, 0.2
  %v3978 = vmul.f32 %v3719, 0.2
  %v3979 = vmul.f32 %v3335, 0.2
  %v3980 = vmul.f32 %v3337, 0.2
  %v3981 = vmul.f32 %v3721, 0.2
  %v3982 = vmul.f32 %v3723, 0.2
  %v3983 = vmul.f32 %v3341, 0.2
  %v3984 = vmul.f32 %v3343, 0.2
  %v3985 = vmul.f32 %v3727, 0.2
  %v3986 = vmul.f32 %v3729, 0.2
  %v3987 = vmul.f32 %v3345, 0.2
  %v3988 = vmul.f32 %v3347, 0.2
  %v3989 = vmul.f32 %v3731, 0.2
  %v3990 = vmul.f32 %v3733, 0.2
  %v3991 = vsel %vm3735, %v3191, %v3863
  %v3992 = vsel %vm3736, %v3193, %v3864
  %v3993 = vsel %vm3737, %v3577, %v3865
  %v3994 = vsel %vm3738, %v3579, %v3866
  %v3995 = vsel %vm3739, %v3195, %v3867
  %v3996 = vsel %vm3740, %v3197, %v3868
  %v3997 = vsel %vm3741, %v3581, %v3869
  %v3998 = vsel %vm3742, %v3583, %v3870
  %v3999 = vsel %vm3743, %v3201, %v3871
  %v4000 = vsel %vm3744, %v3203, %v3872
  %v4001 = vsel %vm3745, %v3587, %v3873
  %v4002 = vsel %vm3746, %v3589, %v3874
  %v4003 = vsel %vm3747, %v3205, %v3875
  %v4004 = vsel %vm3748, %v3207, %v3876
  %v4005 = vsel %vm3749, %v3591, %v3877
  %v4006 = vsel %vm3750, %v3593, %v3878
  %v4007 = vsel %vm3751, %v3211, %v3879
  %v4008 = vsel %vm3752, %v3213, %v3880
  %v4009 = vsel %vm3753, %v3597, %v3881
  %v4010 = vsel %vm3754, %v3599, %v3882
  %v4011 = vsel %vm3755, %v3215, %v3883
  %v4012 = vsel %vm3756, %v3217, %v3884
  %v4013 = vsel %vm3757, %v3601, %v3885
  %v4014 = vsel %vm3758, %v3603, %v3886
  %v4015 = vsel %vm3759, %v3221, %v3887
  %v4016 = vsel %vm3760, %v3223, %v3888
  %v4017 = vsel %vm3761, %v3607, %v3889
  %v4018 = vsel %vm3762, %v3609, %v3890
  %v4019 = vsel %vm3763, %v3225, %v3891
  %v4020 = vsel %vm3764, %v3227, %v3892
  %v4021 = vsel %vm3765, %v3611, %v3893
  %v4022 = vsel %vm3766, %v3613, %v3894
  %v4023 = vsel %vm3767, %v3231, %v3895
  %v4024 = vsel %vm3768, %v3233, %v3896
  %v4025 = vsel %vm3769, %v3617, %v3897
  %v4026 = vsel %vm3770, %v3619, %v3898
  %v4027 = vsel %vm3771, %v3235, %v3899
  %v4028 = vsel %vm3772, %v3237, %v3900
  %v4029 = vsel %vm3773, %v3621, %v3901
  %v4030 = vsel %vm3774, %v3623, %v3902
  %v4031 = vsel %vm3775, %v3241, %v3903
  %v4032 = vsel %vm3776, %v3243, %v3904
  %v4033 = vsel %vm3777, %v3627, %v3905
  %v4034 = vsel %vm3778, %v3629, %v3906
  %v4035 = vsel %vm3779, %v3245, %v3907
  %v4036 = vsel %vm3780, %v3247, %v3908
  %v4037 = vsel %vm3781, %v3631, %v3909
  %v4038 = vsel %vm3782, %v3633, %v3910
  %v4039 = vsel %vm3783, %v3251, %v3911
  %v4040 = vsel %vm3784, %v3253, %v3912
  %v4041 = vsel %vm3785, %v3637, %v3913
  %v4042 = vsel %vm3786, %v3639, %v3914
  %v4043 = vsel %vm3787, %v3255, %v3915
  %v4044 = vsel %vm3788, %v3257, %v3916
  %v4045 = vsel %vm3789, %v3641, %v3917
  %v4046 = vsel %vm3790, %v3643, %v3918
  %v4047 = vsel %vm3791, %v3261, %v3919
  %v4048 = vsel %vm3792, %v3263, %v3920
  %v4049 = vsel %vm3793, %v3647, %v3921
  %v4050 = vsel %vm3794, %v3649, %v3922
  %v4051 = vsel %vm3795, %v3265, %v3923
  %v4052 = vsel %vm3796, %v3267, %v3924
  %v4053 = vsel %vm3797, %v3651, %v3925
  %v4054 = vsel %vm3798, %v3653, %v3926
  %v4055 = vsel %vm3799, %v3271, %v3927
  %v4056 = vsel %vm3800, %v3273, %v3928
  %v4057 = vsel %vm3801, %v3657, %v3929
  %v4058 = vsel %vm3802, %v3659, %v3930
  %v4059 = vsel %vm3803, %v3275, %v3931
  %v4060 = vsel %vm3804, %v3277, %v3932
  %v4061 = vsel %vm3805, %v3661, %v3933
  %v4062 = vsel %vm3806, %v3663, %v3934
  %v4063 = vsel %vm3807, %v3281, %v3935
  %v4064 = vsel %vm3808, %v3283, %v3936
  %v4065 = vsel %vm3809, %v3667, %v3937
  %v4066 = vsel %vm3810, %v3669, %v3938
  %v4067 = vsel %vm3811, %v3285, %v3939
  %v4068 = vsel %vm3812, %v3287, %v3940
  %v4069 = vsel %vm3813, %v3671, %v3941
  %v4070 = vsel %vm3814, %v3673, %v3942
  %v4071 = vsel %vm3815, %v3291, %v3943
  %v4072 = vsel %vm3816, %v3293, %v3944
  %v4073 = vsel %vm3817, %v3677, %v3945
  %v4074 = vsel %vm3818, %v3679, %v3946
  %v4075 = vsel %vm3819, %v3295, %v3947
  %v4076 = vsel %vm3820, %v3297, %v3948
  %v4077 = vsel %vm3821, %v3681, %v3949
  %v4078 = vsel %vm3822, %v3683, %v3950
  %v4079 = vsel %vm3823, %v3301, %v3951
  %v4080 = vsel %vm3824, %v3303, %v3952
  %v4081 = vsel %vm3825, %v3687, %v3953
  %v4082 = vsel %vm3826, %v3689, %v3954
  %v4083 = vsel %vm3827, %v3305, %v3955
  %v4084 = vsel %vm3828, %v3307, %v3956
  %v4085 = vsel %vm3829, %v3691, %v3957
  %v4086 = vsel %vm3830, %v3693, %v3958
  %v4087 = vsel %vm3831, %v3311, %v3959
  %v4088 = vsel %vm3832, %v3313, %v3960
  %v4089 = vsel %vm3833, %v3697, %v3961
  %v4090 = vsel %vm3834, %v3699, %v3962
  %v4091 = vsel %vm3835, %v3315, %v3963
  %v4092 = vsel %vm3836, %v3317, %v3964
  %v4093 = vsel %vm3837, %v3701, %v3965
  %v4094 = vsel %vm3838, %v3703, %v3966
  %v4095 = vsel %vm3839, %v3321, %v3967
  %v4096 = vsel %vm3840, %v3323, %v3968
  %v4097 = vsel %vm3841, %v3707, %v3969
  %v4098 = vsel %vm3842, %v3709, %v3970
  %v4099 = vsel %vm3843, %v3325, %v3971
  %v4100 = vsel %vm3844, %v3327, %v3972
  %v4101 = vsel %vm3845, %v3711, %v3973
  %v4102 = vsel %vm3846, %v3713, %v3974
  %v4103 = vsel %vm3847, %v3331, %v3975
  %v4104 = vsel %vm3848, %v3333, %v3976
  %v4105 = vsel %vm3849, %v3717, %v3977
  %v4106 = vsel %vm3850, %v3719, %v3978
  %v4107 = vsel %vm3851, %v3335, %v3979
  %v4108 = vsel %vm3852, %v3337, %v3980
  %v4109 = vsel %vm3853, %v3721, %v3981
  %v4110 = vsel %vm3854, %v3723, %v3982
  %v4111 = vsel %vm3855, %v3341, %v3983
  %v4112 = vsel %vm3856, %v3343, %v3984
  %v4113 = vsel %vm3857, %v3727, %v3985
  %v4114 = vsel %vm3858, %v3729, %v3986
  %v4115 = vsel %vm3859, %v3345, %v3987
  %v4116 = vsel %vm3860, %v3347, %v3988
  %v4117 = vsel %vm3861, %v3731, %v3989
  %v4118 = vsel %vm3862, %v3733, %v3990
  %v4119 = vpack.c.bf16 %v3995, %v3991
  %v4120 = vpack.c.bf16 %v3996, %v3992
  %v4121 = vpack.c.bf16 %v3997, %v3993
  %v4122 = vpack.c.bf16 %v3998, %v3994
  %v4123 = vpack.c.bf16 %v4003, %v3999
  %v4124 = vpack.c.bf16 %v4004, %v4000
  %v4125 = vpack.c.bf16 %v4005, %v4001
  %v4126 = vpack.c.bf16 %v4006, %v4002
  %v4127 = vpack.c.bf16 %v4011, %v4007
  %v4128 = vpack.c.bf16 %v4012, %v4008
  %v4129 = vpack.c.bf16 %v4013, %v4009
  %v4130 = vpack.c.bf16 %v4014, %v4010
  %v4131 = vpack.c.bf16 %v4019, %v4015
  %v4132 = vpack.c.bf16 %v4020, %v4016
  %v4133 = vpack.c.bf16 %v4021, %v4017
  %v4134 = vpack.c.bf16 %v4022, %v4018
  %v4135 = vpack.c.bf16 %v4027, %v4023
  %v4136 = vpack.c.bf16 %v4028, %v4024
  %v4137 = vpack.c.bf16 %v4029, %v4025
  %v4138 = vpack.c.bf16 %v4030, %v4026
  %v4139 = vpack.c.bf16 %v4035, %v4031
  %v4140 = vpack.c.bf16 %v4036, %v4032
  %v4141 = vpack.c.bf16 %v4037, %v4033
  %v4142 = vpack.c.bf16 %v4038, %v4034
  %v4143 = vpack.c.bf16 %v4043, %v4039
  %v4144 = vpack.c.bf16 %v4044, %v4040
  %v4145 = vpack.c.bf16 %v4045, %v4041
  %v4146 = vpack.c.bf16 %v4046, %v4042
  %v4147 = vpack.c.bf16 %v4051, %v4047
  %v4148 = vpack.c.bf16 %v4052, %v4048
  %v4149 = vpack.c.bf16 %v4053, %v4049
  %v4150 = vpack.c.bf16 %v4054, %v4050
  %v4151 = vpack.c.bf16 %v4059, %v4055
  %v4152 = vpack.c.bf16 %v4060, %v4056
  %v4153 = vpack.c.bf16 %v4061, %v4057
  %v4154 = vpack.c.bf16 %v4062, %v4058
  %v4155 = vpack.c.bf16 %v4067, %v4063
  %v4156 = vpack.c.bf16 %v4068, %v4064
  %v4157 = vpack.c.bf16 %v4069, %v4065
  %v4158 = vpack.c.bf16 %v4070, %v4066
  %v4159 = vpack.c.bf16 %v4075, %v4071
  %v4160 = vpack.c.bf16 %v4076, %v4072
  %v4161 = vpack.c.bf16 %v4077, %v4073
  %v4162 = vpack.c.bf16 %v4078, %v4074
  %v4163 = vpack.c.bf16 %v4083, %v4079
  %v4164 = vpack.c.bf16 %v4084, %v4080
  %v4165 = vpack.c.bf16 %v4085, %v4081
  %v4166 = vpack.c.bf16 %v4086, %v4082
  %v4167 = vpack.c.bf16 %v4091, %v4087
  %v4168 = vpack.c.bf16 %v4092, %v4088
  %v4169 = vpack.c.bf16 %v4093, %v4089
  %v4170 = vpack.c.bf16 %v4094, %v4090
  %v4171 = vpack.c.bf16 %v4099, %v4095
  %v4172 = vpack.c.bf16 %v4100, %v4096
  %v4173 = vpack.c.bf16 %v4101, %v4097
  %v4174 = vpack.c.bf16 %v4102, %v4098
  %v4175 = vpack.c.bf16 %v4107, %v4103
  %v4176 = vpack.c.bf16 %v4108, %v4104
  %v4177 = vpack.c.bf16 %v4109, %v4105
  %v4178 = vpack.c.bf16 %v4110, %v4106
  %v4179 = vpack.c.bf16 %v4115, %v4111
  %v4180 = vpack.c.bf16 %v4116, %v4112
  %v4181 = vpack.c.bf16 %v4117, %v4113
  %v4182 = vpack.c.bf16 %v4118, %v4114
  %v4183 = vld [vmem:[%s5] sm:$0xff]
  %v4184 = vld [vmem:[%s5 + $0x8] sm:$0xff]
  %v4185 = vld [vmem:[%s5 + $0x10] sm:$0xff]
  %v4186 = vld [vmem:[%s5 + $0x18] sm:$0xff]
  %v4187 = vld [vmem:[%s5 + $0x20] sm:$0xff]
  %v4188 = vld [vmem:[%s5 + $0x28] sm:$0xff]
  %v4189 = vld [vmem:[%s5 + $0x30] sm:$0xff]
  %v4190 = vld [vmem:[%s5 + $0x38] sm:$0xff]
  %v4191 = vld [vmem:[%s5 + $0x40] sm:$0xff]
  %v4192 = vld [vmem:[%s5 + $0x48] sm:$0xff]
  %v4193 = vld [vmem:[%s5 + $0x50] sm:$0xff]
  %v4194 = vld [vmem:[%s5 + $0x58] sm:$0xff]
  %v4195 = vld [vmem:[%s5 + $0x60] sm:$0xff]
  %v4196 = vld [vmem:[%s5 + $0x68] sm:$0xff]
  %v4197 = vld [vmem:[%s5 + $0x70] sm:$0xff]
  %v4198 = vld [vmem:[%s5 + $0x78] sm:$0xff]
  %v4199 = vld [vmem:[%s5 + $0x80] sm:$0xff]
  %v4200 = vld [vmem:[%s5 + $0x88] sm:$0xff]
  %v4201 = vld [vmem:[%s5 + $0x90] sm:$0xff]
  %v4202 = vld [vmem:[%s5 + $0x98] sm:$0xff]
  %v4203 = vld [vmem:[%s5 + $0xa0] sm:$0xff]
  %v4204 = vld [vmem:[%s5 + $0xa8] sm:$0xff]
  %v4205 = vld [vmem:[%s5 + $0xb0] sm:$0xff]
  %v4206 = vld [vmem:[%s5 + $0xb8] sm:$0xff]
  %v4207 = vld [vmem:[%s5 + $0xc0] sm:$0xff]
  %v4208 = vld [vmem:[%s5 + $0xc8] sm:$0xff]
  %v4209 = vld [vmem:[%s5 + $0xd0] sm:$0xff]
  %v4210 = vld [vmem:[%s5 + $0xd8] sm:$0xff]
  %v4211 = vld [vmem:[%s5 + $0xe0] sm:$0xff]
  %v4212 = vld [vmem:[%s5 + $0xe8] sm:$0xff]
  %v4213 = vld [vmem:[%s5 + $0xf0] sm:$0xff]
  %v4214 = vld [vmem:[%s5 + $0xf8] sm:$0xff]
  %v4215 = vld [vmem:[%s5 + $0x100] sm:$0xff]
  %v4216 = vld [vmem:[%s5 + $0x108] sm:$0xff]
  %v4217 = vld [vmem:[%s5 + $0x110] sm:$0xff]
  %v4218 = vld [vmem:[%s5 + $0x118] sm:$0xff]
  %v4219 = vld [vmem:[%s5 + $0x120] sm:$0xff]
  %v4220 = vld [vmem:[%s5 + $0x128] sm:$0xff]
  %v4221 = vld [vmem:[%s5 + $0x130] sm:$0xff]
  %v4222 = vld [vmem:[%s5 + $0x138] sm:$0xff]
  %v4223 = vld [vmem:[%s5 + $0x140] sm:$0xff]
  %v4224 = vld [vmem:[%s5 + $0x148] sm:$0xff]
  %v4225 = vld [vmem:[%s5 + $0x150] sm:$0xff]
  %v4226 = vld [vmem:[%s5 + $0x158] sm:$0xff]
  %v4227 = vld [vmem:[%s5 + $0x160] sm:$0xff]
  %v4228 = vld [vmem:[%s5 + $0x168] sm:$0xff]
  %v4229 = vld [vmem:[%s5 + $0x170] sm:$0xff]
  %v4230 = vld [vmem:[%s5 + $0x178] sm:$0xff]
  %v4231 = vld [vmem:[%s5 + $0x180] sm:$0xff]
  %v4232 = vld [vmem:[%s5 + $0x188] sm:$0xff]
  %v4233 = vld [vmem:[%s5 + $0x190] sm:$0xff]
  %v4234 = vld [vmem:[%s5 + $0x198] sm:$0xff]
  %v4235 = vld [vmem:[%s5 + $0x1a0] sm:$0xff]
  %v4236 = vld [vmem:[%s5 + $0x1a8] sm:$0xff]
  %v4237 = vld [vmem:[%s5 + $0x1b0] sm:$0xff]
  %v4238 = vld [vmem:[%s5 + $0x1b8] sm:$0xff]
  %v4239 = vld [vmem:[%s5 + $0x1c0] sm:$0xff]
  %v4240 = vld [vmem:[%s5 + $0x1c8] sm:$0xff]
  %v4241 = vld [vmem:[%s5 + $0x1d0] sm:$0xff]
  %v4242 = vld [vmem:[%s5 + $0x1d8] sm:$0xff]
  %v4243 = vld [vmem:[%s5 + $0x1e0] sm:$0xff]
  %v4244 = vld [vmem:[%s5 + $0x1e8] sm:$0xff]
  %v4245 = vld [vmem:[%s5 + $0x1f0] sm:$0xff]
  %v4246 = vld [vmem:[%s5 + $0x1f8] sm:$0xff]
  %v4247 = vld [vmem:[%s5 + $0x200] sm:$0xff]
  %v4248 = vld [vmem:[%s5 + $0x208] sm:$0xff]
  %v4249 = vld [vmem:[%s5 + $0x210] sm:$0xff]
  %v4250 = vld [vmem:[%s5 + $0x218] sm:$0xff]
  %v4251 = vld [vmem:[%s5 + $0x220] sm:$0xff]
  %v4252 = vld [vmem:[%s5 + $0x228] sm:$0xff]
  %v4253 = vld [vmem:[%s5 + $0x230] sm:$0xff]
  %v4254 = vld [vmem:[%s5 + $0x238] sm:$0xff]
  %v4255 = vld [vmem:[%s5 + $0x240] sm:$0xff]
  %v4256 = vld [vmem:[%s5 + $0x248] sm:$0xff]
  %v4257 = vld [vmem:[%s5 + $0x250] sm:$0xff]
  %v4258 = vld [vmem:[%s5 + $0x258] sm:$0xff]
  %v4259 = vld [vmem:[%s5 + $0x260] sm:$0xff]
  %v4260 = vld [vmem:[%s5 + $0x268] sm:$0xff]
  %v4261 = vld [vmem:[%s5 + $0x270] sm:$0xff]
  %v4262 = vld [vmem:[%s5 + $0x278] sm:$0xff]
  %v4263 = vld [vmem:[%s5 + $0x280] sm:$0xff]
  %v4264 = vld [vmem:[%s5 + $0x288] sm:$0xff]
  %v4265 = vld [vmem:[%s5 + $0x290] sm:$0xff]
  %v4266 = vld [vmem:[%s5 + $0x298] sm:$0xff]
  %v4267 = vld [vmem:[%s5 + $0x2a0] sm:$0xff]
  %v4268 = vld [vmem:[%s5 + $0x2a8] sm:$0xff]
  %v4269 = vld [vmem:[%s5 + $0x2b0] sm:$0xff]
  %v4270 = vld [vmem:[%s5 + $0x2b8] sm:$0xff]
  %v4271 = vld [vmem:[%s5 + $0x2c0] sm:$0xff]
  %v4272 = vld [vmem:[%s5 + $0x2c8] sm:$0xff]
  %v4273 = vld [vmem:[%s5 + $0x2d0] sm:$0xff]
  %v4274 = vld [vmem:[%s5 + $0x2d8] sm:$0xff]
  %v4275 = vld [vmem:[%s5 + $0x2e0] sm:$0xff]
  %v4276 = vld [vmem:[%s5 + $0x2e8] sm:$0xff]
  %v4277 = vld [vmem:[%s5 + $0x2f0] sm:$0xff]
  %v4278 = vld [vmem:[%s5 + $0x2f8] sm:$0xff]
  %v4279 = vld [vmem:[%s5 + $0x300] sm:$0xff]
  %v4280 = vld [vmem:[%s5 + $0x308] sm:$0xff]
  %v4281 = vld [vmem:[%s5 + $0x310] sm:$0xff]
  %v4282 = vld [vmem:[%s5 + $0x318] sm:$0xff]
  %v4283 = vld [vmem:[%s5 + $0x320] sm:$0xff]
  %v4284 = vld [vmem:[%s5 + $0x328] sm:$0xff]
  %v4285 = vld [vmem:[%s5 + $0x330] sm:$0xff]
  %v4286 = vld [vmem:[%s5 + $0x338] sm:$0xff]
  %v4287 = vld [vmem:[%s5 + $0x340] sm:$0xff]
  %v4288 = vld [vmem:[%s5 + $0x348] sm:$0xff]
  %v4289 = vld [vmem:[%s5 + $0x350] sm:$0xff]
  %v4290 = vld [vmem:[%s5 + $0x358] sm:$0xff]
  %v4291 = vld [vmem:[%s5 + $0x360] sm:$0xff]
  %v4292 = vld [vmem:[%s5 + $0x368] sm:$0xff]
  %v4293 = vld [vmem:[%s5 + $0x370] sm:$0xff]
  %v4294 = vld [vmem:[%s5 + $0x378] sm:$0xff]
  %v4295 = vld [vmem:[%s5 + $0x380] sm:$0xff]
  %v4296 = vld [vmem:[%s5 + $0x388] sm:$0xff]
  %v4297 = vld [vmem:[%s5 + $0x390] sm:$0xff]
  %v4298 = vld [vmem:[%s5 + $0x398] sm:$0xff]
  %v4299 = vld [vmem:[%s5 + $0x3a0] sm:$0xff]
  %v4300 = vld [vmem:[%s5 + $0x3a8] sm:$0xff]
  %v4301 = vld [vmem:[%s5 + $0x3b0] sm:$0xff]
  %v4302 = vld [vmem:[%s5 + $0x3b8] sm:$0xff]
  %v4303 = vld [vmem:[%s5 + $0x3c0] sm:$0xff]
  %v4304 = vld [vmem:[%s5 + $0x3c8] sm:$0xff]
  %v4305 = vld [vmem:[%s5 + $0x3d0] sm:$0xff]
  %v4306 = vld [vmem:[%s5 + $0x3d8] sm:$0xff]
  %v4307 = vld [vmem:[%s5 + $0x3e0] sm:$0xff]
  %v4308 = vld [vmem:[%s5 + $0x3e8] sm:$0xff]
  %v4309 = vld [vmem:[%s5 + $0x3f0] sm:$0xff]
  %v4310 = vld [vmem:[%s5 + $0x3f8] sm:$0xff]
  %v4311 = vld [vmem:[%s6] sm:$0xf]
  %v4313 = vlaneseq
  %v4314 = vshrl.u32 %v4313, 7
  %v4315 = vsub.s32 0, %v4314
  %v4316 = vrot.slane %v4311, %v4315
  %v4317 = vlaneseq
  %v4318 = vshrl.u32 %v4317, 7
  %v4319 = vsub.s32 1, %v4318
  %v4320 = vrot.slane %v4311, %v4319
  %v4321 = vlaneseq
  %v4322 = vshrl.u32 %v4321, 7
  %v4323 = vsub.s32 2, %v4322
  %v4324 = vrot.slane %v4311, %v4323
  %v4325 = vlaneseq
  %v4326 = vshrl.u32 %v4325, 7
  %v4327 = vsub.s32 3, %v4326
  %v4328 = vrot.slane %v4311, %v4327
  %v4461 = vunpack.c.l.b16 %v4183
  %v4462 = vunpack.c.h.b16 %v4183
  %v4463 = vunpack.c.l.b16 %v4184
  %v4464 = vunpack.c.h.b16 %v4184
  %v4465 = vunpack.c.l.b16 %v4185
  %v4466 = vunpack.c.h.b16 %v4185
  %v4467 = vunpack.c.l.b16 %v4186
  %v4468 = vunpack.c.h.b16 %v4186
  %v4469 = vunpack.c.l.b16 %v4187
  %v4470 = vunpack.c.h.b16 %v4187
  %v4471 = vunpack.c.l.b16 %v4188
  %v4472 = vunpack.c.h.b16 %v4188
  %v4473 = vunpack.c.l.b16 %v4189
  %v4474 = vunpack.c.h.b16 %v4189
  %v4475 = vunpack.c.l.b16 %v4190
  %v4476 = vunpack.c.h.b16 %v4190
  %v4477 = vunpack.c.l.b16 %v4191
  %v4478 = vunpack.c.h.b16 %v4191
  %v4479 = vunpack.c.l.b16 %v4192
  %v4480 = vunpack.c.h.b16 %v4192
  %v4481 = vunpack.c.l.b16 %v4193
  %v4482 = vunpack.c.h.b16 %v4193
  %v4483 = vunpack.c.l.b16 %v4194
  %v4484 = vunpack.c.h.b16 %v4194
  %v4485 = vunpack.c.l.b16 %v4195
  %v4486 = vunpack.c.h.b16 %v4195
  %v4487 = vunpack.c.l.b16 %v4196
  %v4488 = vunpack.c.h.b16 %v4196
  %v4489 = vunpack.c.l.b16 %v4197
  %v4490 = vunpack.c.h.b16 %v4197
  %v4491 = vunpack.c.l.b16 %v4198
  %v4492 = vunpack.c.h.b16 %v4198
  %v4493 = vunpack.c.l.b16 %v4199
  %v4494 = vunpack.c.h.b16 %v4199
  %v4495 = vunpack.c.l.b16 %v4200
  %v4496 = vunpack.c.h.b16 %v4200
  %v4497 = vunpack.c.l.b16 %v4201
  %v4498 = vunpack.c.h.b16 %v4201
  %v4499 = vunpack.c.l.b16 %v4202
  %v4500 = vunpack.c.h.b16 %v4202
  %v4501 = vunpack.c.l.b16 %v4203
  %v4502 = vunpack.c.h.b16 %v4203
  %v4503 = vunpack.c.l.b16 %v4204
  %v4504 = vunpack.c.h.b16 %v4204
  %v4505 = vunpack.c.l.b16 %v4205
  %v4506 = vunpack.c.h.b16 %v4205
  %v4507 = vunpack.c.l.b16 %v4206
  %v4508 = vunpack.c.h.b16 %v4206
  %v4509 = vunpack.c.l.b16 %v4207
  %v4510 = vunpack.c.h.b16 %v4207
  %v4511 = vunpack.c.l.b16 %v4208
  %v4512 = vunpack.c.h.b16 %v4208
  %v4513 = vunpack.c.l.b16 %v4209
  %v4514 = vunpack.c.h.b16 %v4209
  %v4515 = vunpack.c.l.b16 %v4210
  %v4516 = vunpack.c.h.b16 %v4210
  %v4517 = vunpack.c.l.b16 %v4211
  %v4518 = vunpack.c.h.b16 %v4211
  %v4519 = vunpack.c.l.b16 %v4212
  %v4520 = vunpack.c.h.b16 %v4212
  %v4521 = vunpack.c.l.b16 %v4213
  %v4522 = vunpack.c.h.b16 %v4213
  %v4523 = vunpack.c.l.b16 %v4214
  %v4524 = vunpack.c.h.b16 %v4214
  %v4525 = vunpack.c.l.b16 %v4215
  %v4526 = vunpack.c.h.b16 %v4215
  %v4527 = vunpack.c.l.b16 %v4216
  %v4528 = vunpack.c.h.b16 %v4216
  %v4529 = vunpack.c.l.b16 %v4217
  %v4530 = vunpack.c.h.b16 %v4217
  %v4531 = vunpack.c.l.b16 %v4218
  %v4532 = vunpack.c.h.b16 %v4218
  %v4533 = vunpack.c.l.b16 %v4219
  %v4534 = vunpack.c.h.b16 %v4219
  %v4535 = vunpack.c.l.b16 %v4220
  %v4536 = vunpack.c.h.b16 %v4220
  %v4537 = vunpack.c.l.b16 %v4221
  %v4538 = vunpack.c.h.b16 %v4221
  %v4539 = vunpack.c.l.b16 %v4222
  %v4540 = vunpack.c.h.b16 %v4222
  %v4541 = vunpack.c.l.b16 %v4223
  %v4542 = vunpack.c.h.b16 %v4223
  %v4543 = vunpack.c.l.b16 %v4224
  %v4544 = vunpack.c.h.b16 %v4224
  %v4545 = vunpack.c.l.b16 %v4225
  %v4546 = vunpack.c.h.b16 %v4225
  %v4547 = vunpack.c.l.b16 %v4226
  %v4548 = vunpack.c.h.b16 %v4226
  %v4549 = vunpack.c.l.b16 %v4227
  %v4550 = vunpack.c.h.b16 %v4227
  %v4551 = vunpack.c.l.b16 %v4228
  %v4552 = vunpack.c.h.b16 %v4228
  %v4553 = vunpack.c.l.b16 %v4229
  %v4554 = vunpack.c.h.b16 %v4229
  %v4555 = vunpack.c.l.b16 %v4230
  %v4556 = vunpack.c.h.b16 %v4230
  %v4557 = vunpack.c.l.b16 %v4231
  %v4558 = vunpack.c.h.b16 %v4231
  %v4559 = vunpack.c.l.b16 %v4232
  %v4560 = vunpack.c.h.b16 %v4232
  %v4561 = vunpack.c.l.b16 %v4233
  %v4562 = vunpack.c.h.b16 %v4233
  %v4563 = vunpack.c.l.b16 %v4234
  %v4564 = vunpack.c.h.b16 %v4234
  %v4565 = vunpack.c.l.b16 %v4235
  %v4566 = vunpack.c.h.b16 %v4235
  %v4567 = vunpack.c.l.b16 %v4236
  %v4568 = vunpack.c.h.b16 %v4236
  %v4569 = vunpack.c.l.b16 %v4237
  %v4570 = vunpack.c.h.b16 %v4237
  %v4571 = vunpack.c.l.b16 %v4238
  %v4572 = vunpack.c.h.b16 %v4238
  %v4573 = vunpack.c.l.b16 %v4239
  %v4574 = vunpack.c.h.b16 %v4239
  %v4575 = vunpack.c.l.b16 %v4240
  %v4576 = vunpack.c.h.b16 %v4240
  %v4577 = vunpack.c.l.b16 %v4241
  %v4578 = vunpack.c.h.b16 %v4241
  %v4579 = vunpack.c.l.b16 %v4242
  %v4580 = vunpack.c.h.b16 %v4242
  %v4581 = vunpack.c.l.b16 %v4243
  %v4582 = vunpack.c.h.b16 %v4243
  %v4583 = vunpack.c.l.b16 %v4244
  %v4584 = vunpack.c.h.b16 %v4244
  %v4585 = vunpack.c.l.b16 %v4245
  %v4586 = vunpack.c.h.b16 %v4245
  %v4587 = vunpack.c.l.b16 %v4246
  %v4588 = vunpack.c.h.b16 %v4246
  %v4589 = vunpack.c.l.b16 %v4247
  %v4590 = vunpack.c.h.b16 %v4247
  %v4591 = vunpack.c.l.b16 %v4248
  %v4592 = vunpack.c.h.b16 %v4248
  %v4593 = vunpack.c.l.b16 %v4249
  %v4594 = vunpack.c.h.b16 %v4249
  %v4595 = vunpack.c.l.b16 %v4250
  %v4596 = vunpack.c.h.b16 %v4250
  %v4597 = vunpack.c.l.b16 %v4251
  %v4598 = vunpack.c.h.b16 %v4251
  %v4599 = vunpack.c.l.b16 %v4252
  %v4600 = vunpack.c.h.b16 %v4252
  %v4601 = vunpack.c.l.b16 %v4253
  %v4602 = vunpack.c.h.b16 %v4253
  %v4603 = vunpack.c.l.b16 %v4254
  %v4604 = vunpack.c.h.b16 %v4254
  %v4605 = vunpack.c.l.b16 %v4255
  %v4606 = vunpack.c.h.b16 %v4255
  %v4607 = vunpack.c.l.b16 %v4256
  %v4608 = vunpack.c.h.b16 %v4256
  %v4609 = vunpack.c.l.b16 %v4257
  %v4610 = vunpack.c.h.b16 %v4257
  %v4611 = vunpack.c.l.b16 %v4258
  %v4612 = vunpack.c.h.b16 %v4258
  %v4613 = vunpack.c.l.b16 %v4259
  %v4614 = vunpack.c.h.b16 %v4259
  %v4615 = vunpack.c.l.b16 %v4260
  %v4616 = vunpack.c.h.b16 %v4260
  %v4617 = vunpack.c.l.b16 %v4261
  %v4618 = vunpack.c.h.b16 %v4261
  %v4619 = vunpack.c.l.b16 %v4262
  %v4620 = vunpack.c.h.b16 %v4262
  %v4621 = vunpack.c.l.b16 %v4263
  %v4622 = vunpack.c.h.b16 %v4263
  %v4623 = vunpack.c.l.b16 %v4264
  %v4624 = vunpack.c.h.b16 %v4264
  %v4625 = vunpack.c.l.b16 %v4265
  %v4626 = vunpack.c.h.b16 %v4265
  %v4627 = vunpack.c.l.b16 %v4266
  %v4628 = vunpack.c.h.b16 %v4266
  %v4629 = vunpack.c.l.b16 %v4267
  %v4630 = vunpack.c.h.b16 %v4267
  %v4631 = vunpack.c.l.b16 %v4268
  %v4632 = vunpack.c.h.b16 %v4268
  %v4633 = vunpack.c.l.b16 %v4269
  %v4634 = vunpack.c.h.b16 %v4269
  %v4635 = vunpack.c.l.b16 %v4270
  %v4636 = vunpack.c.h.b16 %v4270
  %v4637 = vunpack.c.l.b16 %v4271
  %v4638 = vunpack.c.h.b16 %v4271
  %v4639 = vunpack.c.l.b16 %v4272
  %v4640 = vunpack.c.h.b16 %v4272
  %v4641 = vunpack.c.l.b16 %v4273
  %v4642 = vunpack.c.h.b16 %v4273
  %v4643 = vunpack.c.l.b16 %v4274
  %v4644 = vunpack.c.h.b16 %v4274
  %v4645 = vunpack.c.l.b16 %v4275
  %v4646 = vunpack.c.h.b16 %v4275
  %v4647 = vunpack.c.l.b16 %v4276
  %v4648 = vunpack.c.h.b16 %v4276
  %v4649 = vunpack.c.l.b16 %v4277
  %v4650 = vunpack.c.h.b16 %v4277
  %v4651 = vunpack.c.l.b16 %v4278
  %v4652 = vunpack.c.h.b16 %v4278
  %v4653 = vunpack.c.l.b16 %v4279
  %v4654 = vunpack.c.h.b16 %v4279
  %v4655 = vunpack.c.l.b16 %v4280
  %v4656 = vunpack.c.h.b16 %v4280
  %v4657 = vunpack.c.l.b16 %v4281
  %v4658 = vunpack.c.h.b16 %v4281
  %v4659 = vunpack.c.l.b16 %v4282
  %v4660 = vunpack.c.h.b16 %v4282
  %v4661 = vunpack.c.l.b16 %v4283
  %v4662 = vunpack.c.h.b16 %v4283
  %v4663 = vunpack.c.l.b16 %v4284
  %v4664 = vunpack.c.h.b16 %v4284
  %v4665 = vunpack.c.l.b16 %v4285
  %v4666 = vunpack.c.h.b16 %v4285
  %v4667 = vunpack.c.l.b16 %v4286
  %v4668 = vunpack.c.h.b16 %v4286
  %v4669 = vunpack.c.l.b16 %v4287
  %v4670 = vunpack.c.h.b16 %v4287
  %v4671 = vunpack.c.l.b16 %v4288
  %v4672 = vunpack.c.h.b16 %v4288
  %v4673 = vunpack.c.l.b16 %v4289
  %v4674 = vunpack.c.h.b16 %v4289
  %v4675 = vunpack.c.l.b16 %v4290
  %v4676 = vunpack.c.h.b16 %v4290
  %v4677 = vunpack.c.l.b16 %v4291
  %v4678 = vunpack.c.h.b16 %v4291
  %v4679 = vunpack.c.l.b16 %v4292
  %v4680 = vunpack.c.h.b16 %v4292
  %v4681 = vunpack.c.l.b16 %v4293
  %v4682 = vunpack.c.h.b16 %v4293
  %v4683 = vunpack.c.l.b16 %v4294
  %v4684 = vunpack.c.h.b16 %v4294
  %v4685 = vunpack.c.l.b16 %v4295
  %v4686 = vunpack.c.h.b16 %v4295
  %v4687 = vunpack.c.l.b16 %v4296
  %v4688 = vunpack.c.h.b16 %v4296
  %v4689 = vunpack.c.l.b16 %v4297
  %v4690 = vunpack.c.h.b16 %v4297
  %v4691 = vunpack.c.l.b16 %v4298
  %v4692 = vunpack.c.h.b16 %v4298
  %v4693 = vunpack.c.l.b16 %v4299
  %v4694 = vunpack.c.h.b16 %v4299
  %v4695 = vunpack.c.l.b16 %v4300
  %v4696 = vunpack.c.h.b16 %v4300
  %v4697 = vunpack.c.l.b16 %v4301
  %v4698 = vunpack.c.h.b16 %v4301
  %v4699 = vunpack.c.l.b16 %v4302
  %v4700 = vunpack.c.h.b16 %v4302
  %v4701 = vunpack.c.l.b16 %v4303
  %v4702 = vunpack.c.h.b16 %v4303
  %v4703 = vunpack.c.l.b16 %v4304
  %v4704 = vunpack.c.h.b16 %v4304
  %v4705 = vunpack.c.l.b16 %v4305
  %v4706 = vunpack.c.h.b16 %v4305
  %v4707 = vunpack.c.l.b16 %v4306
  %v4708 = vunpack.c.h.b16 %v4306
  %v4709 = vunpack.c.l.b16 %v4307
  %v4710 = vunpack.c.h.b16 %v4307
  %v4711 = vunpack.c.l.b16 %v4308
  %v4712 = vunpack.c.h.b16 %v4308
  %v4713 = vunpack.c.l.b16 %v4309
  %v4714 = vunpack.c.h.b16 %v4309
  %v4715 = vunpack.c.l.b16 %v4310
  %v4716 = vunpack.c.h.b16 %v4310
  %v4717 = vpack.c.b16 %v4465, %v4461
  %v4718 = vpack.c.b16 %v4466, %v4462
  %v4719 = vpack.c.b16 %v4467, %v4463
  %v4720 = vpack.c.b16 %v4468, %v4464
  %v4721 = vpack.c.b16 %v4473, %v4469
  %v4722 = vpack.c.b16 %v4474, %v4470
  %v4723 = vpack.c.b16 %v4475, %v4471
  %v4724 = vpack.c.b16 %v4476, %v4472
  %v4725 = vpack.c.b16 %v4481, %v4477
  %v4726 = vpack.c.b16 %v4482, %v4478
  %v4727 = vpack.c.b16 %v4483, %v4479
  %v4728 = vpack.c.b16 %v4484, %v4480
  %v4729 = vpack.c.b16 %v4489, %v4485
  %v4730 = vpack.c.b16 %v4490, %v4486
  %v4731 = vpack.c.b16 %v4491, %v4487
  %v4732 = vpack.c.b16 %v4492, %v4488
  %v4733 = vpack.c.b16 %v4497, %v4493
  %v4734 = vpack.c.b16 %v4498, %v4494
  %v4735 = vpack.c.b16 %v4499, %v4495
  %v4736 = vpack.c.b16 %v4500, %v4496
  %v4737 = vpack.c.b16 %v4505, %v4501
  %v4738 = vpack.c.b16 %v4506, %v4502
  %v4739 = vpack.c.b16 %v4507, %v4503
  %v4740 = vpack.c.b16 %v4508, %v4504
  %v4741 = vpack.c.b16 %v4513, %v4509
  %v4742 = vpack.c.b16 %v4514, %v4510
  %v4743 = vpack.c.b16 %v4515, %v4511
  %v4744 = vpack.c.b16 %v4516, %v4512
  %v4745 = vpack.c.b16 %v4521, %v4517
  %v4746 = vpack.c.b16 %v4522, %v4518
  %v4747 = vpack.c.b16 %v4523, %v4519
  %v4748 = vpack.c.b16 %v4524, %v4520
  %v4749 = vpack.c.b16 %v4529, %v4525
  %v4750 = vpack.c.b16 %v4530, %v4526
  %v4751 = vpack.c.b16 %v4531, %v4527
  %v4752 = vpack.c.b16 %v4532, %v4528
  %v4753 = vpack.c.b16 %v4537, %v4533
  %v4754 = vpack.c.b16 %v4538, %v4534
  %v4755 = vpack.c.b16 %v4539, %v4535
  %v4756 = vpack.c.b16 %v4540, %v4536
  %v4757 = vpack.c.b16 %v4545, %v4541
  %v4758 = vpack.c.b16 %v4546, %v4542
  %v4759 = vpack.c.b16 %v4547, %v4543
  %v4760 = vpack.c.b16 %v4548, %v4544
  %v4761 = vpack.c.b16 %v4553, %v4549
  %v4762 = vpack.c.b16 %v4554, %v4550
  %v4763 = vpack.c.b16 %v4555, %v4551
  %v4764 = vpack.c.b16 %v4556, %v4552
  %v4765 = vpack.c.b16 %v4561, %v4557
  %v4766 = vpack.c.b16 %v4562, %v4558
  %v4767 = vpack.c.b16 %v4563, %v4559
  %v4768 = vpack.c.b16 %v4564, %v4560
  %v4769 = vpack.c.b16 %v4569, %v4565
  %v4770 = vpack.c.b16 %v4570, %v4566
  %v4771 = vpack.c.b16 %v4571, %v4567
  %v4772 = vpack.c.b16 %v4572, %v4568
  %v4773 = vpack.c.b16 %v4577, %v4573
  %v4774 = vpack.c.b16 %v4578, %v4574
  %v4775 = vpack.c.b16 %v4579, %v4575
  %v4776 = vpack.c.b16 %v4580, %v4576
  %v4777 = vpack.c.b16 %v4585, %v4581
  %v4778 = vpack.c.b16 %v4586, %v4582
  %v4779 = vpack.c.b16 %v4587, %v4583
  %v4780 = vpack.c.b16 %v4588, %v4584
  %v4781 = vpack.c.b16 %v4593, %v4589
  %v4782 = vpack.c.b16 %v4594, %v4590
  %v4783 = vpack.c.b16 %v4595, %v4591
  %v4784 = vpack.c.b16 %v4596, %v4592
  %v4785 = vpack.c.b16 %v4601, %v4597
  %v4786 = vpack.c.b16 %v4602, %v4598
  %v4787 = vpack.c.b16 %v4603, %v4599
  %v4788 = vpack.c.b16 %v4604, %v4600
  %v4789 = vpack.c.b16 %v4609, %v4605
  %v4790 = vpack.c.b16 %v4610, %v4606
  %v4791 = vpack.c.b16 %v4611, %v4607
  %v4792 = vpack.c.b16 %v4612, %v4608
  %v4793 = vpack.c.b16 %v4617, %v4613
  %v4794 = vpack.c.b16 %v4618, %v4614
  %v4795 = vpack.c.b16 %v4619, %v4615
  %v4796 = vpack.c.b16 %v4620, %v4616
  %v4797 = vpack.c.b16 %v4625, %v4621
  %v4798 = vpack.c.b16 %v4626, %v4622
  %v4799 = vpack.c.b16 %v4627, %v4623
  %v4800 = vpack.c.b16 %v4628, %v4624
  %v4801 = vpack.c.b16 %v4633, %v4629
  %v4802 = vpack.c.b16 %v4634, %v4630
  %v4803 = vpack.c.b16 %v4635, %v4631
  %v4804 = vpack.c.b16 %v4636, %v4632
  %v4805 = vpack.c.b16 %v4641, %v4637
  %v4806 = vpack.c.b16 %v4642, %v4638
  %v4807 = vpack.c.b16 %v4643, %v4639
  %v4808 = vpack.c.b16 %v4644, %v4640
  %v4809 = vpack.c.b16 %v4649, %v4645
  %v4810 = vpack.c.b16 %v4650, %v4646
  %v4811 = vpack.c.b16 %v4651, %v4647
  %v4812 = vpack.c.b16 %v4652, %v4648
  %v4813 = vpack.c.b16 %v4657, %v4653
  %v4814 = vpack.c.b16 %v4658, %v4654
  %v4815 = vpack.c.b16 %v4659, %v4655
  %v4816 = vpack.c.b16 %v4660, %v4656
  %v4817 = vpack.c.b16 %v4665, %v4661
  %v4818 = vpack.c.b16 %v4666, %v4662
  %v4819 = vpack.c.b16 %v4667, %v4663
  %v4820 = vpack.c.b16 %v4668, %v4664
  %v4821 = vpack.c.b16 %v4673, %v4669
  %v4822 = vpack.c.b16 %v4674, %v4670
  %v4823 = vpack.c.b16 %v4675, %v4671
  %v4824 = vpack.c.b16 %v4676, %v4672
  %v4825 = vpack.c.b16 %v4681, %v4677
  %v4826 = vpack.c.b16 %v4682, %v4678
  %v4827 = vpack.c.b16 %v4683, %v4679
  %v4828 = vpack.c.b16 %v4684, %v4680
  %v4829 = vpack.c.b16 %v4689, %v4685
  %v4830 = vpack.c.b16 %v4690, %v4686
  %v4831 = vpack.c.b16 %v4691, %v4687
  %v4832 = vpack.c.b16 %v4692, %v4688
  %v4833 = vpack.c.b16 %v4697, %v4693
  %v4834 = vpack.c.b16 %v4698, %v4694
  %v4835 = vpack.c.b16 %v4699, %v4695
  %v4836 = vpack.c.b16 %v4700, %v4696
  %v4837 = vpack.c.b16 %v4705, %v4701
  %v4838 = vpack.c.b16 %v4706, %v4702
  %v4839 = vpack.c.b16 %v4707, %v4703
  %v4840 = vpack.c.b16 %v4708, %v4704
  %v4841 = vpack.c.b16 %v4713, %v4709
  %v4842 = vpack.c.b16 %v4714, %v4710
  %v4843 = vpack.c.b16 %v4715, %v4711
  %v4844 = vpack.c.b16 %v4716, %v4712
  %4973 = vmatprep.subr.bf16.mxu0 %v4746
  %4974 = vmatpush1.bf16.msra.mxu0 %v4745
  %4975 = vmatprep.subr.bf16.mxu0 %v4742
  %4976 = vmatpush1.bf16.msra.mxu0 %v4741
  %4977 = vmatprep.subr.bf16.mxu0 %v4738
  %4978 = vmatpush1.bf16.msra.mxu0 %v4737
  %4979 = vmatprep.subr.bf16.mxu0 %v4734
  %4980 = vmatpush1.bf16.msra.mxu0 %v4733
  %4981 = vmatprep.subr.bf16.mxu0 %v4730
  %4982 = vmatpush1.bf16.msra.mxu0 %v4729
  %4983 = vmatprep.subr.bf16.mxu0 %v4726
  %4984 = vmatpush1.bf16.msra.mxu0 %v4725
  %4985 = vmatprep.subr.bf16.mxu0 %v4722
  %4986 = vmatpush1.bf16.msra.mxu0 %v4721
  %4987 = vmatprep.subr.bf16.mxu0 %v4718
  %4988 = vmatpush1.bf16.msra.mxu0 %v4717
  %4989 = vmatprep.subr.bf16.mxu0 %v4778
  %4990 = vmatpush2.bf16.msra.mxu0 %v4777
  %4991 = vmatprep.subr.bf16.mxu0 %v4774
  %4992 = vmatpush2.bf16.msra.mxu0 %v4773
  %4993 = vmatprep.subr.bf16.mxu0 %v4770
  %4994 = vmatpush2.bf16.msra.mxu0 %v4769
  %4995 = vmatprep.subr.bf16.mxu0 %v4766
  %4996 = vmatpush2.bf16.msra.mxu0 %v4765
  %4997 = vmatprep.subr.bf16.mxu0 %v4762
  %4998 = vmatpush2.bf16.msra.mxu0 %v4761
  %4999 = vmatprep.subr.bf16.mxu0 %v4758
  %5000 = vmatpush2.bf16.msra.mxu0 %v4757
  %5001 = vmatprep.subr.bf16.mxu0 %v4754
  %5002 = vmatpush2.bf16.msra.mxu0 %v4753
  %5003 = vmatprep.subr.bf16.mxu0 %v4750
  %5004 = vmatpush2.bf16.msra.mxu0 %v4749
  %5005 = vmatprep.mubr.bf16.mxu0 %v4120
  %5006 = vmatmul.mubr.bf16.gmra.mxu0 %v4119
  %v5007 = vpop.f32.mrf.mxu0
  %v5008 = vadd.f32 %v4316, %v5007
  %v5009 = vpop.f32.mrf.mxu0
  %v5010 = vadd.f32 %v4320, %v5009
  %v5011 = vpop.f32.mrf.mxu0
  %v5012 = vadd.f32 %v4316, %v5011
  %v5013 = vpop.f32.mrf.mxu0
  %v5014 = vadd.f32 %v4320, %v5013
  %5015 = vmatprep.mubr.bf16.mxu0 %v4124
  %5016 = vmatmul.mubr.bf16.gmra.mxu0 %v4123
  %v5017 = vpop.f32.mrf.mxu0
  %v5018 = vadd.f32 %v4316, %v5017
  %v5019 = vpop.f32.mrf.mxu0
  %v5020 = vadd.f32 %v4320, %v5019
  %v5021 = vpop.f32.mrf.mxu0
  %v5022 = vadd.f32 %v4316, %v5021
  %v5023 = vpop.f32.mrf.mxu0
  %v5024 = vadd.f32 %v4320, %v5023
  %5025 = vmatprep.mubr.bf16.mxu0 %v4128
  %5026 = vmatmul.mubr.bf16.gmra.mxu0 %v4127
  %v5027 = vpop.f32.mrf.mxu0
  %v5028 = vadd.f32 %v4316, %v5027
  %v5029 = vpop.f32.mrf.mxu0
  %v5030 = vadd.f32 %v4320, %v5029
  %v5031 = vpop.f32.mrf.mxu0
  %v5032 = vadd.f32 %v4316, %v5031
  %v5033 = vpop.f32.mrf.mxu0
  %v5034 = vadd.f32 %v4320, %v5033
  %5035 = vmatprep.mubr.bf16.mxu0 %v4132
  %5036 = vmatmul.mubr.bf16.gmra.mxu0 %v4131
  %v5037 = vpop.f32.mrf.mxu0
  %v5038 = vadd.f32 %v4316, %v5037
  %v5039 = vpop.f32.mrf.mxu0
  %v5040 = vadd.f32 %v4320, %v5039
  %v5041 = vpop.f32.mrf.mxu0
  %v5042 = vadd.f32 %v4316, %v5041
  %v5043 = vpop.f32.mrf.mxu0
  %v5044 = vadd.f32 %v4320, %v5043
  %5045 = vmatprep.mubr.bf16.mxu0 %v4136
  %5046 = vmatmul.mubr.bf16.gmra.mxu0 %v4135
  %v5047 = vpop.f32.mrf.mxu0
  %v5048 = vadd.f32 %v4316, %v5047
  %v5049 = vpop.f32.mrf.mxu0
  %v5050 = vadd.f32 %v4320, %v5049
  %v5051 = vpop.f32.mrf.mxu0
  %v5052 = vadd.f32 %v4316, %v5051
  %v5053 = vpop.f32.mrf.mxu0
  %v5054 = vadd.f32 %v4320, %v5053
  %5055 = vmatprep.mubr.bf16.mxu0 %v4140
  %5056 = vmatmul.mubr.bf16.gmra.mxu0 %v4139
  %v5057 = vpop.f32.mrf.mxu0
  %v5058 = vadd.f32 %v4316, %v5057
  %v5059 = vpop.f32.mrf.mxu0
  %v5060 = vadd.f32 %v4320, %v5059
  %v5061 = vpop.f32.mrf.mxu0
  %v5062 = vadd.f32 %v4316, %v5061
  %v5063 = vpop.f32.mrf.mxu0
  %v5064 = vadd.f32 %v4320, %v5063
  %5065 = vmatprep.mubr.bf16.mxu0 %v4144
  %5066 = vmatmul.mubr.bf16.gmra.mxu0 %v4143
  %v5067 = vpop.f32.mrf.mxu0
  %v5068 = vadd.f32 %v4316, %v5067
  %v5069 = vpop.f32.mrf.mxu0
  %v5070 = vadd.f32 %v4320, %v5069
  %v5071 = vpop.f32.mrf.mxu0
  %v5072 = vadd.f32 %v4316, %v5071
  %v5073 = vpop.f32.mrf.mxu0
  %v5074 = vadd.f32 %v4320, %v5073
  %5075 = vmatprep.mubr.bf16.mxu0 %v4148
  %5076 = vmatmul.mubr.bf16.gmra.mxu0 %v4147
  %v5077 = vpop.f32.mrf.mxu0
  %v5078 = vadd.f32 %v4316, %v5077
  %v5079 = vpop.f32.mrf.mxu0
  %v5080 = vadd.f32 %v4320, %v5079
  %v5081 = vpop.f32.mrf.mxu0
  %v5082 = vadd.f32 %v4316, %v5081
  %v5083 = vpop.f32.mrf.mxu0
  %v5084 = vadd.f32 %v4320, %v5083
  %5085 = vmatprep.mubr.bf16.mxu0 %v4152
  %5086 = vmatmul.mubr.bf16.gmra.mxu0 %v4151
  %v5087 = vpop.f32.mrf.mxu0
  %v5088 = vadd.f32 %v4316, %v5087
  %v5089 = vpop.f32.mrf.mxu0
  %v5090 = vadd.f32 %v4320, %v5089
  %v5091 = vpop.f32.mrf.mxu0
  %v5092 = vadd.f32 %v4316, %v5091
  %v5093 = vpop.f32.mrf.mxu0
  %v5094 = vadd.f32 %v4320, %v5093
  %5095 = vmatprep.mubr.bf16.mxu0 %v4156
  %5096 = vmatmul.mubr.bf16.gmra.mxu0 %v4155
  %v5097 = vpop.f32.mrf.mxu0
  %v5098 = vadd.f32 %v4316, %v5097
  %v5099 = vpop.f32.mrf.mxu0
  %v5100 = vadd.f32 %v4320, %v5099
  %v5101 = vpop.f32.mrf.mxu0
  %v5102 = vadd.f32 %v4316, %v5101
  %v5103 = vpop.f32.mrf.mxu0
  %v5104 = vadd.f32 %v4320, %v5103
  %5105 = vmatprep.mubr.bf16.mxu0 %v4160
  %5106 = vmatmul.mubr.bf16.gmra.mxu0 %v4159
  %v5107 = vpop.f32.mrf.mxu0
  %v5108 = vadd.f32 %v4316, %v5107
  %v5109 = vpop.f32.mrf.mxu0
  %v5110 = vadd.f32 %v4320, %v5109
  %v5111 = vpop.f32.mrf.mxu0
  %v5112 = vadd.f32 %v4316, %v5111
  %v5113 = vpop.f32.mrf.mxu0
  %v5114 = vadd.f32 %v4320, %v5113
  %5115 = vmatprep.mubr.bf16.mxu0 %v4164
  %5116 = vmatmul.mubr.bf16.gmra.mxu0 %v4163
  %v5117 = vpop.f32.mrf.mxu0
  %v5118 = vadd.f32 %v4316, %v5117
  %v5119 = vpop.f32.mrf.mxu0
  %v5120 = vadd.f32 %v4320, %v5119
  %v5121 = vpop.f32.mrf.mxu0
  %v5122 = vadd.f32 %v4316, %v5121
  %v5123 = vpop.f32.mrf.mxu0
  %v5124 = vadd.f32 %v4320, %v5123
  %5125 = vmatprep.mubr.bf16.mxu0 %v4168
  %5126 = vmatmul.mubr.bf16.gmra.mxu0 %v4167
  %v5127 = vpop.f32.mrf.mxu0
  %v5128 = vadd.f32 %v4316, %v5127
  %v5129 = vpop.f32.mrf.mxu0
  %v5130 = vadd.f32 %v4320, %v5129
  %v5131 = vpop.f32.mrf.mxu0
  %v5132 = vadd.f32 %v4316, %v5131
  %v5133 = vpop.f32.mrf.mxu0
  %v5134 = vadd.f32 %v4320, %v5133
  %5135 = vmatprep.mubr.bf16.mxu0 %v4172
  %5136 = vmatmul.mubr.bf16.gmra.mxu0 %v4171
  %v5137 = vpop.f32.mrf.mxu0
  %v5138 = vadd.f32 %v4316, %v5137
  %v5139 = vpop.f32.mrf.mxu0
  %v5140 = vadd.f32 %v4320, %v5139
  %v5141 = vpop.f32.mrf.mxu0
  %v5142 = vadd.f32 %v4316, %v5141
  %v5143 = vpop.f32.mrf.mxu0
  %v5144 = vadd.f32 %v4320, %v5143
  %5145 = vmatprep.mubr.bf16.mxu0 %v4176
  %5146 = vmatmul.mubr.bf16.gmra.mxu0 %v4175
  %v5147 = vpop.f32.mrf.mxu0
  %v5148 = vadd.f32 %v4316, %v5147
  %v5149 = vpop.f32.mrf.mxu0
  %v5150 = vadd.f32 %v4320, %v5149
  %v5151 = vpop.f32.mrf.mxu0
  %v5152 = vadd.f32 %v4316, %v5151
  %v5153 = vpop.f32.mrf.mxu0
  %v5154 = vadd.f32 %v4320, %v5153
  %5155 = vmatprep.mubr.bf16.mxu0 %v4180
  %5156 = vmatmul.mubr.bf16.gmra.mxu0 %v4179
  %v5157 = vpop.f32.mrf.mxu0
  %v5158 = vadd.f32 %v4316, %v5157
  %v5159 = vpop.f32.mrf.mxu0
  %v5160 = vadd.f32 %v4320, %v5159
  %v5161 = vpop.f32.mrf.mxu0
  %v5162 = vadd.f32 %v4316, %v5161
  %v5163 = vpop.f32.mrf.mxu0
  %v5164 = vadd.f32 %v4320, %v5163
  %5165 = vdwg.mxu0
  %5166 = vmatprep.subr.bf16.mxu0 %v4810
  %5167 = vmatpush1.bf16.msra.mxu0 %v4809
  %5168 = vmatprep.subr.bf16.mxu0 %v4806
  %5169 = vmatpush1.bf16.msra.mxu0 %v4805
  %5170 = vmatprep.subr.bf16.mxu0 %v4802
  %5171 = vmatpush1.bf16.msra.mxu0 %v4801
  %5172 = vmatprep.subr.bf16.mxu0 %v4798
  %5173 = vmatpush1.bf16.msra.mxu0 %v4797
  %5174 = vmatprep.subr.bf16.mxu0 %v4794
  %5175 = vmatpush1.bf16.msra.mxu0 %v4793
  %5176 = vmatprep.subr.bf16.mxu0 %v4790
  %5177 = vmatpush1.bf16.msra.mxu0 %v4789
  %5178 = vmatprep.subr.bf16.mxu0 %v4786
  %5179 = vmatpush1.bf16.msra.mxu0 %v4785
  %5180 = vmatprep.subr.bf16.mxu0 %v4782
  %5181 = vmatpush1.bf16.msra.mxu0 %v4781
  %5182 = vmatprep.subr.bf16.mxu0 %v4842
  %5183 = vmatpush2.bf16.msra.mxu0 %v4841
  %5184 = vmatprep.subr.bf16.mxu0 %v4838
  %5185 = vmatpush2.bf16.msra.mxu0 %v4837
  %5186 = vmatprep.subr.bf16.mxu0 %v4834
  %5187 = vmatpush2.bf16.msra.mxu0 %v4833
  %5188 = vmatprep.subr.bf16.mxu0 %v4830
  %5189 = vmatpush2.bf16.msra.mxu0 %v4829
  %5190 = vmatprep.subr.bf16.mxu0 %v4826
  %5191 = vmatpush2.bf16.msra.mxu0 %v4825
  %5192 = vmatprep.subr.bf16.mxu0 %v4822
  %5193 = vmatpush2.bf16.msra.mxu0 %v4821
  %5194 = vmatprep.subr.bf16.mxu0 %v4818
  %5195 = vmatpush2.bf16.msra.mxu0 %v4817
  %5196 = vmatprep.subr.bf16.mxu0 %v4814
  %5197 = vmatpush2.bf16.msra.mxu0 %v4813
  %5198 = vmatprep.mubr.bf16.mxu0 %v4122
  %5199 = vmatmul.mubr.bf16.gmra.mxu0 %v4121
  %v5200 = vpop.f32.mrf.mxu0
  %v5201 = vadd.f32 %v5008, %v5200
  %v5202 = vpop.f32.mrf.mxu0
  %v5203 = vadd.f32 %v5010, %v5202
  %v5204 = vpop.f32.mrf.mxu0
  %v5205 = vadd.f32 %v5012, %v5204
  %v5206 = vpop.f32.mrf.mxu0
  %v5207 = vadd.f32 %v5014, %v5206
  %5208 = vmatprep.mubr.bf16.mxu0 %v4126
  %5209 = vmatmul.mubr.bf16.gmra.mxu0 %v4125
  %v5210 = vpop.f32.mrf.mxu0
  %v5211 = vadd.f32 %v5018, %v5210
  %v5212 = vpop.f32.mrf.mxu0
  %v5213 = vadd.f32 %v5020, %v5212
  %v5214 = vpop.f32.mrf.mxu0
  %v5215 = vadd.f32 %v5022, %v5214
  %v5216 = vpop.f32.mrf.mxu0
  %v5217 = vadd.f32 %v5024, %v5216
  %5218 = vmatprep.mubr.bf16.mxu0 %v4130
  %5219 = vmatmul.mubr.bf16.gmra.mxu0 %v4129
  %v5220 = vpop.f32.mrf.mxu0
  %v5221 = vadd.f32 %v5028, %v5220
  %v5222 = vpop.f32.mrf.mxu0
  %v5223 = vadd.f32 %v5030, %v5222
  %v5224 = vpop.f32.mrf.mxu0
  %v5225 = vadd.f32 %v5032, %v5224
  %v5226 = vpop.f32.mrf.mxu0
  %v5227 = vadd.f32 %v5034, %v5226
  %5228 = vmatprep.mubr.bf16.mxu0 %v4134
  %5229 = vmatmul.mubr.bf16.gmra.mxu0 %v4133
  %v5230 = vpop.f32.mrf.mxu0
  %v5231 = vadd.f32 %v5038, %v5230
  %v5232 = vpop.f32.mrf.mxu0
  %v5233 = vadd.f32 %v5040, %v5232
  %v5234 = vpop.f32.mrf.mxu0
  %v5235 = vadd.f32 %v5042, %v5234
  %v5236 = vpop.f32.mrf.mxu0
  %v5237 = vadd.f32 %v5044, %v5236
  %5238 = vmatprep.mubr.bf16.mxu0 %v4138
  %5239 = vmatmul.mubr.bf16.gmra.mxu0 %v4137
  %v5240 = vpop.f32.mrf.mxu0
  %v5241 = vadd.f32 %v5048, %v5240
  %v5242 = vpop.f32.mrf.mxu0
  %v5243 = vadd.f32 %v5050, %v5242
  %v5244 = vpop.f32.mrf.mxu0
  %v5245 = vadd.f32 %v5052, %v5244
  %v5246 = vpop.f32.mrf.mxu0
  %v5247 = vadd.f32 %v5054, %v5246
  %5248 = vmatprep.mubr.bf16.mxu0 %v4142
  %5249 = vmatmul.mubr.bf16.gmra.mxu0 %v4141
  %v5250 = vpop.f32.mrf.mxu0
  %v5251 = vadd.f32 %v5058, %v5250
  %v5252 = vpop.f32.mrf.mxu0
  %v5253 = vadd.f32 %v5060, %v5252
  %v5254 = vpop.f32.mrf.mxu0
  %v5255 = vadd.f32 %v5062, %v5254
  %v5256 = vpop.f32.mrf.mxu0
  %v5257 = vadd.f32 %v5064, %v5256
  %5258 = vmatprep.mubr.bf16.mxu0 %v4146
  %5259 = vmatmul.mubr.bf16.gmra.mxu0 %v4145
  %v5260 = vpop.f32.mrf.mxu0
  %v5261 = vadd.f32 %v5068, %v5260
  %v5262 = vpop.f32.mrf.mxu0
  %v5263 = vadd.f32 %v5070, %v5262
  %v5264 = vpop.f32.mrf.mxu0
  %v5265 = vadd.f32 %v5072, %v5264
  %v5266 = vpop.f32.mrf.mxu0
  %v5267 = vadd.f32 %v5074, %v5266
  %5268 = vmatprep.mubr.bf16.mxu0 %v4150
  %5269 = vmatmul.mubr.bf16.gmra.mxu0 %v4149
  %v5270 = vpop.f32.mrf.mxu0
  %v5271 = vadd.f32 %v5078, %v5270
  %v5272 = vpop.f32.mrf.mxu0
  %v5273 = vadd.f32 %v5080, %v5272
  %v5274 = vpop.f32.mrf.mxu0
  %v5275 = vadd.f32 %v5082, %v5274
  %v5276 = vpop.f32.mrf.mxu0
  %v5277 = vadd.f32 %v5084, %v5276
  %5278 = vmatprep.mubr.bf16.mxu0 %v4154
  %5279 = vmatmul.mubr.bf16.gmra.mxu0 %v4153
  %v5280 = vpop.f32.mrf.mxu0
  %v5281 = vadd.f32 %v5088, %v5280
  %v5282 = vpop.f32.mrf.mxu0
  %v5283 = vadd.f32 %v5090, %v5282
  %v5284 = vpop.f32.mrf.mxu0
  %v5285 = vadd.f32 %v5092, %v5284
  %v5286 = vpop.f32.mrf.mxu0
  %v5287 = vadd.f32 %v5094, %v5286
  %5288 = vmatprep.mubr.bf16.mxu0 %v4158
  %5289 = vmatmul.mubr.bf16.gmra.mxu0 %v4157
  %v5290 = vpop.f32.mrf.mxu0
  %v5291 = vadd.f32 %v5098, %v5290
  %v5292 = vpop.f32.mrf.mxu0
  %v5293 = vadd.f32 %v5100, %v5292
  %v5294 = vpop.f32.mrf.mxu0
  %v5295 = vadd.f32 %v5102, %v5294
  %v5296 = vpop.f32.mrf.mxu0
  %v5297 = vadd.f32 %v5104, %v5296
  %5298 = vmatprep.mubr.bf16.mxu0 %v4162
  %5299 = vmatmul.mubr.bf16.gmra.mxu0 %v4161
  %v5300 = vpop.f32.mrf.mxu0
  %v5301 = vadd.f32 %v5108, %v5300
  %v5302 = vpop.f32.mrf.mxu0
  %v5303 = vadd.f32 %v5110, %v5302
  %v5304 = vpop.f32.mrf.mxu0
  %v5305 = vadd.f32 %v5112, %v5304
  %v5306 = vpop.f32.mrf.mxu0
  %v5307 = vadd.f32 %v5114, %v5306
  %5308 = vmatprep.mubr.bf16.mxu0 %v4166
  %5309 = vmatmul.mubr.bf16.gmra.mxu0 %v4165
  %v5310 = vpop.f32.mrf.mxu0
  %v5311 = vadd.f32 %v5118, %v5310
  %v5312 = vpop.f32.mrf.mxu0
  %v5313 = vadd.f32 %v5120, %v5312
  %v5314 = vpop.f32.mrf.mxu0
  %v5315 = vadd.f32 %v5122, %v5314
  %v5316 = vpop.f32.mrf.mxu0
  %v5317 = vadd.f32 %v5124, %v5316
  %5318 = vmatprep.mubr.bf16.mxu0 %v4170
  %5319 = vmatmul.mubr.bf16.gmra.mxu0 %v4169
  %v5320 = vpop.f32.mrf.mxu0
  %v5321 = vadd.f32 %v5128, %v5320
  %v5322 = vpop.f32.mrf.mxu0
  %v5323 = vadd.f32 %v5130, %v5322
  %v5324 = vpop.f32.mrf.mxu0
  %v5325 = vadd.f32 %v5132, %v5324
  %v5326 = vpop.f32.mrf.mxu0
  %v5327 = vadd.f32 %v5134, %v5326
  %5328 = vmatprep.mubr.bf16.mxu0 %v4174
  %5329 = vmatmul.mubr.bf16.gmra.mxu0 %v4173
  %v5330 = vpop.f32.mrf.mxu0
  %v5331 = vadd.f32 %v5138, %v5330
  %v5332 = vpop.f32.mrf.mxu0
  %v5333 = vadd.f32 %v5140, %v5332
  %v5334 = vpop.f32.mrf.mxu0
  %v5335 = vadd.f32 %v5142, %v5334
  %v5336 = vpop.f32.mrf.mxu0
  %v5337 = vadd.f32 %v5144, %v5336
  %5338 = vmatprep.mubr.bf16.mxu0 %v4178
  %5339 = vmatmul.mubr.bf16.gmra.mxu0 %v4177
  %v5340 = vpop.f32.mrf.mxu0
  %v5341 = vadd.f32 %v5148, %v5340
  %v5342 = vpop.f32.mrf.mxu0
  %v5343 = vadd.f32 %v5150, %v5342
  %v5344 = vpop.f32.mrf.mxu0
  %v5345 = vadd.f32 %v5152, %v5344
  %v5346 = vpop.f32.mrf.mxu0
  %v5347 = vadd.f32 %v5154, %v5346
  %5348 = vmatprep.mubr.bf16.mxu0 %v4182
  %5349 = vmatmul.mubr.bf16.gmra.mxu0 %v4181
  %v5350 = vpop.f32.mrf.mxu0
  %v5351 = vadd.f32 %v5158, %v5350
  %v5352 = vpop.f32.mrf.mxu0
  %v5353 = vadd.f32 %v5160, %v5352
  %v5354 = vpop.f32.mrf.mxu0
  %v5355 = vadd.f32 %v5162, %v5354
  %v5356 = vpop.f32.mrf.mxu0
  %v5357 = vadd.f32 %v5164, %v5356
  %5358 = vdwg.mxu0
  %5359 = vmatprep.subr.bf16.mxu0 %v4748
  %5360 = vmatpush1.bf16.msra.mxu0 %v4747
  %5361 = vmatprep.subr.bf16.mxu0 %v4744
  %5362 = vmatpush1.bf16.msra.mxu0 %v4743
  %5363 = vmatprep.subr.bf16.mxu0 %v4740
  %5364 = vmatpush1.bf16.msra.mxu0 %v4739
  %5365 = vmatprep.subr.bf16.mxu0 %v4736
  %5366 = vmatpush1.bf16.msra.mxu0 %v4735
  %5367 = vmatprep.subr.bf16.mxu0 %v4732
  %5368 = vmatpush1.bf16.msra.mxu0 %v4731
  %5369 = vmatprep.subr.bf16.mxu0 %v4728
  %5370 = vmatpush1.bf16.msra.mxu0 %v4727
  %5371 = vmatprep.subr.bf16.mxu0 %v4724
  %5372 = vmatpush1.bf16.msra.mxu0 %v4723
  %5373 = vmatprep.subr.bf16.mxu0 %v4720
  %5374 = vmatpush1.bf16.msra.mxu0 %v4719
  %5375 = vmatprep.subr.bf16.mxu0 %v4780
  %5376 = vmatpush2.bf16.msra.mxu0 %v4779
  %5377 = vmatprep.subr.bf16.mxu0 %v4776
  %5378 = vmatpush2.bf16.msra.mxu0 %v4775
  %5379 = vmatprep.subr.bf16.mxu0 %v4772
  %5380 = vmatpush2.bf16.msra.mxu0 %v4771
  %5381 = vmatprep.subr.bf16.mxu0 %v4768
  %5382 = vmatpush2.bf16.msra.mxu0 %v4767
  %5383 = vmatprep.subr.bf16.mxu0 %v4764
  %5384 = vmatpush2.bf16.msra.mxu0 %v4763
  %5385 = vmatprep.subr.bf16.mxu0 %v4760
  %5386 = vmatpush2.bf16.msra.mxu0 %v4759
  %5387 = vmatprep.subr.bf16.mxu0 %v4756
  %5388 = vmatpush2.bf16.msra.mxu0 %v4755
  %5389 = vmatprep.subr.bf16.mxu0 %v4752
  %5390 = vmatpush2.bf16.msra.mxu0 %v4751
  %5391 = vmatprep.mubr.bf16.mxu0 %v4120
  %5392 = vmatmul.mubr.bf16.gmra.mxu0 %v4119
  %v5393 = vpop.f32.mrf.mxu0
  %v5394 = vadd.f32 %v4324, %v5393
  %v5395 = vpop.f32.mrf.mxu0
  %v5396 = vadd.f32 %v4328, %v5395
  %v5397 = vpop.f32.mrf.mxu0
  %v5398 = vadd.f32 %v4324, %v5397
  %v5399 = vpop.f32.mrf.mxu0
  %v5400 = vadd.f32 %v4328, %v5399
  %5401 = vmatprep.mubr.bf16.mxu0 %v4124
  %5402 = vmatmul.mubr.bf16.gmra.mxu0 %v4123
  %v5403 = vpop.f32.mrf.mxu0
  %v5404 = vadd.f32 %v4324, %v5403
  %v5405 = vpop.f32.mrf.mxu0
  %v5406 = vadd.f32 %v4328, %v5405
  %v5407 = vpop.f32.mrf.mxu0
  %v5408 = vadd.f32 %v4324, %v5407
  %v5409 = vpop.f32.mrf.mxu0
  %v5410 = vadd.f32 %v4328, %v5409
  %5411 = vmatprep.mubr.bf16.mxu0 %v4128
  %5412 = vmatmul.mubr.bf16.gmra.mxu0 %v4127
  %v5413 = vpop.f32.mrf.mxu0
  %v5414 = vadd.f32 %v4324, %v5413
  %v5415 = vpop.f32.mrf.mxu0
  %v5416 = vadd.f32 %v4328, %v5415
  %v5417 = vpop.f32.mrf.mxu0
  %v5418 = vadd.f32 %v4324, %v5417
  %v5419 = vpop.f32.mrf.mxu0
  %v5420 = vadd.f32 %v4328, %v5419
  %5421 = vmatprep.mubr.bf16.mxu0 %v4132
  %5422 = vmatmul.mubr.bf16.gmra.mxu0 %v4131
  %v5423 = vpop.f32.mrf.mxu0
  %v5424 = vadd.f32 %v4324, %v5423
  %v5425 = vpop.f32.mrf.mxu0
  %v5426 = vadd.f32 %v4328, %v5425
  %v5427 = vpop.f32.mrf.mxu0
  %v5428 = vadd.f32 %v4324, %v5427
  %v5429 = vpop.f32.mrf.mxu0
  %v5430 = vadd.f32 %v4328, %v5429
  %5431 = vmatprep.mubr.bf16.mxu0 %v4136
  %5432 = vmatmul.mubr.bf16.gmra.mxu0 %v4135
  %v5433 = vpop.f32.mrf.mxu0
  %v5434 = vadd.f32 %v4324, %v5433
  %v5435 = vpop.f32.mrf.mxu0
  %v5436 = vadd.f32 %v4328, %v5435
  %v5437 = vpop.f32.mrf.mxu0
  %v5438 = vadd.f32 %v4324, %v5437
  %v5439 = vpop.f32.mrf.mxu0
  %v5440 = vadd.f32 %v4328, %v5439
  %5441 = vmatprep.mubr.bf16.mxu0 %v4140
  %5442 = vmatmul.mubr.bf16.gmra.mxu0 %v4139
  %v5443 = vpop.f32.mrf.mxu0
  %v5444 = vadd.f32 %v4324, %v5443
  %v5445 = vpop.f32.mrf.mxu0
  %v5446 = vadd.f32 %v4328, %v5445
  %v5447 = vpop.f32.mrf.mxu0
  %v5448 = vadd.f32 %v4324, %v5447
  %v5449 = vpop.f32.mrf.mxu0
  %v5450 = vadd.f32 %v4328, %v5449
  %5451 = vmatprep.mubr.bf16.mxu0 %v4144
  %5452 = vmatmul.mubr.bf16.gmra.mxu0 %v4143
  %v5453 = vpop.f32.mrf.mxu0
  %v5454 = vadd.f32 %v4324, %v5453
  %v5455 = vpop.f32.mrf.mxu0
  %v5456 = vadd.f32 %v4328, %v5455
  %v5457 = vpop.f32.mrf.mxu0
  %v5458 = vadd.f32 %v4324, %v5457
  %v5459 = vpop.f32.mrf.mxu0
  %v5460 = vadd.f32 %v4328, %v5459
  %5461 = vmatprep.mubr.bf16.mxu0 %v4148
  %5462 = vmatmul.mubr.bf16.gmra.mxu0 %v4147
  %v5463 = vpop.f32.mrf.mxu0
  %v5464 = vadd.f32 %v4324, %v5463
  %v5465 = vpop.f32.mrf.mxu0
  %v5466 = vadd.f32 %v4328, %v5465
  %v5467 = vpop.f32.mrf.mxu0
  %v5468 = vadd.f32 %v4324, %v5467
  %v5469 = vpop.f32.mrf.mxu0
  %v5470 = vadd.f32 %v4328, %v5469
  %5471 = vmatprep.mubr.bf16.mxu0 %v4152
  %5472 = vmatmul.mubr.bf16.gmra.mxu0 %v4151
  %v5473 = vpop.f32.mrf.mxu0
  %v5474 = vadd.f32 %v4324, %v5473
  %v5475 = vpop.f32.mrf.mxu0
  %v5476 = vadd.f32 %v4328, %v5475
  %v5477 = vpop.f32.mrf.mxu0
  %v5478 = vadd.f32 %v4324, %v5477
  %v5479 = vpop.f32.mrf.mxu0
  %v5480 = vadd.f32 %v4328, %v5479
  %5481 = vmatprep.mubr.bf16.mxu0 %v4156
  %5482 = vmatmul.mubr.bf16.gmra.mxu0 %v4155
  %v5483 = vpop.f32.mrf.mxu0
  %v5484 = vadd.f32 %v4324, %v5483
  %v5485 = vpop.f32.mrf.mxu0
  %v5486 = vadd.f32 %v4328, %v5485
  %v5487 = vpop.f32.mrf.mxu0
  %v5488 = vadd.f32 %v4324, %v5487
  %v5489 = vpop.f32.mrf.mxu0
  %v5490 = vadd.f32 %v4328, %v5489
  %5491 = vmatprep.mubr.bf16.mxu0 %v4160
  %5492 = vmatmul.mubr.bf16.gmra.mxu0 %v4159
  %v5493 = vpop.f32.mrf.mxu0
  %v5494 = vadd.f32 %v4324, %v5493
  %v5495 = vpop.f32.mrf.mxu0
  %v5496 = vadd.f32 %v4328, %v5495
  %v5497 = vpop.f32.mrf.mxu0
  %v5498 = vadd.f32 %v4324, %v5497
  %v5499 = vpop.f32.mrf.mxu0
  %v5500 = vadd.f32 %v4328, %v5499
  %5501 = vmatprep.mubr.bf16.mxu0 %v4164
  %5502 = vmatmul.mubr.bf16.gmra.mxu0 %v4163
  %v5503 = vpop.f32.mrf.mxu0
  %v5504 = vadd.f32 %v4324, %v5503
  %v5505 = vpop.f32.mrf.mxu0
  %v5506 = vadd.f32 %v4328, %v5505
  %v5507 = vpop.f32.mrf.mxu0
  %v5508 = vadd.f32 %v4324, %v5507
  %v5509 = vpop.f32.mrf.mxu0
  %v5510 = vadd.f32 %v4328, %v5509
  %5511 = vmatprep.mubr.bf16.mxu0 %v4168
  %5512 = vmatmul.mubr.bf16.gmra.mxu0 %v4167
  %v5513 = vpop.f32.mrf.mxu0
  %v5514 = vadd.f32 %v4324, %v5513
  %v5515 = vpop.f32.mrf.mxu0
  %v5516 = vadd.f32 %v4328, %v5515
  %v5517 = vpop.f32.mrf.mxu0
  %v5518 = vadd.f32 %v4324, %v5517
  %v5519 = vpop.f32.mrf.mxu0
  %v5520 = vadd.f32 %v4328, %v5519
  %5521 = vmatprep.mubr.bf16.mxu0 %v4172
  %5522 = vmatmul.mubr.bf16.gmra.mxu0 %v4171
  %v5523 = vpop.f32.mrf.mxu0
  %v5524 = vadd.f32 %v4324, %v5523
  %v5525 = vpop.f32.mrf.mxu0
  %v5526 = vadd.f32 %v4328, %v5525
  %v5527 = vpop.f32.mrf.mxu0
  %v5528 = vadd.f32 %v4324, %v5527
  %v5529 = vpop.f32.mrf.mxu0
  %v5530 = vadd.f32 %v4328, %v5529
  %5531 = vmatprep.mubr.bf16.mxu0 %v4176
  %5532 = vmatmul.mubr.bf16.gmra.mxu0 %v4175
  %v5533 = vpop.f32.mrf.mxu0
  %v5534 = vadd.f32 %v4324, %v5533
  %v5535 = vpop.f32.mrf.mxu0
  %v5536 = vadd.f32 %v4328, %v5535
  %v5537 = vpop.f32.mrf.mxu0
  %v5538 = vadd.f32 %v4324, %v5537
  %v5539 = vpop.f32.mrf.mxu0
  %v5540 = vadd.f32 %v4328, %v5539
  %5541 = vmatprep.mubr.bf16.mxu0 %v4180
  %5542 = vmatmul.mubr.bf16.gmra.mxu0 %v4179
  %v5543 = vpop.f32.mrf.mxu0
  %v5544 = vadd.f32 %v4324, %v5543
  %v5545 = vpop.f32.mrf.mxu0
  %v5546 = vadd.f32 %v4328, %v5545
  %v5547 = vpop.f32.mrf.mxu0
  %v5548 = vadd.f32 %v4324, %v5547
  %v5549 = vpop.f32.mrf.mxu0
  %v5550 = vadd.f32 %v4328, %v5549
  %5551 = vdwg.mxu0
  %5552 = vmatprep.subr.bf16.mxu0 %v4812
  %5553 = vmatpush1.bf16.msra.mxu0 %v4811
  %5554 = vmatprep.subr.bf16.mxu0 %v4808
  %5555 = vmatpush1.bf16.msra.mxu0 %v4807
  %5556 = vmatprep.subr.bf16.mxu0 %v4804
  %5557 = vmatpush1.bf16.msra.mxu0 %v4803
  %5558 = vmatprep.subr.bf16.mxu0 %v4800
  %5559 = vmatpush1.bf16.msra.mxu0 %v4799
  %5560 = vmatprep.subr.bf16.mxu0 %v4796
  %5561 = vmatpush1.bf16.msra.mxu0 %v4795
  %5562 = vmatprep.subr.bf16.mxu0 %v4792
  %5563 = vmatpush1.bf16.msra.mxu0 %v4791
  %5564 = vmatprep.subr.bf16.mxu0 %v4788
  %5565 = vmatpush1.bf16.msra.mxu0 %v4787
  %5566 = vmatprep.subr.bf16.mxu0 %v4784
  %5567 = vmatpush1.bf16.msra.mxu0 %v4783
  %5568 = vmatprep.subr.bf16.mxu0 %v4844
  %5569 = vmatpush2.bf16.msra.mxu0 %v4843
  %5570 = vmatprep.subr.bf16.mxu0 %v4840
  %5571 = vmatpush2.bf16.msra.mxu0 %v4839
  %5572 = vmatprep.subr.bf16.mxu0 %v4836
  %5573 = vmatpush2.bf16.msra.mxu0 %v4835
  %5574 = vmatprep.subr.bf16.mxu0 %v4832
  %5575 = vmatpush2.bf16.msra.mxu0 %v4831
  %5576 = vmatprep.subr.bf16.mxu0 %v4828
  %5577 = vmatpush2.bf16.msra.mxu0 %v4827
  %5578 = vmatprep.subr.bf16.mxu0 %v4824
  %5579 = vmatpush2.bf16.msra.mxu0 %v4823
  %5580 = vmatprep.subr.bf16.mxu0 %v4820
  %5581 = vmatpush2.bf16.msra.mxu0 %v4819
  %5582 = vmatprep.subr.bf16.mxu0 %v4816
  %5583 = vmatpush2.bf16.msra.mxu0 %v4815
  %5584 = vmatprep.mubr.bf16.mxu0 %v4122
  %5585 = vmatmul.mubr.bf16.gmra.mxu0 %v4121
  %v5586 = vpop.f32.mrf.mxu0
  %v5587 = vadd.f32 %v5394, %v5586
  %v5588 = vpop.f32.mrf.mxu0
  %v5589 = vadd.f32 %v5396, %v5588
  %v5590 = vpop.f32.mrf.mxu0
  %v5591 = vadd.f32 %v5398, %v5590
  %v5592 = vpop.f32.mrf.mxu0
  %v5593 = vadd.f32 %v5400, %v5592
  %5594 = vmatprep.mubr.bf16.mxu0 %v4126
  %5595 = vmatmul.mubr.bf16.gmra.mxu0 %v4125
  %v5596 = vpop.f32.mrf.mxu0
  %v5597 = vadd.f32 %v5404, %v5596
  %v5598 = vpop.f32.mrf.mxu0
  %v5599 = vadd.f32 %v5406, %v5598
  %v5600 = vpop.f32.mrf.mxu0
  %v5601 = vadd.f32 %v5408, %v5600
  %v5602 = vpop.f32.mrf.mxu0
  %v5603 = vadd.f32 %v5410, %v5602
  %5604 = vmatprep.mubr.bf16.mxu0 %v4130
  %5605 = vmatmul.mubr.bf16.gmra.mxu0 %v4129
  %v5606 = vpop.f32.mrf.mxu0
  %v5607 = vadd.f32 %v5414, %v5606
  %v5608 = vpop.f32.mrf.mxu0
  %v5609 = vadd.f32 %v5416, %v5608
  %v5610 = vpop.f32.mrf.mxu0
  %v5611 = vadd.f32 %v5418, %v5610
  %v5612 = vpop.f32.mrf.mxu0
  %v5613 = vadd.f32 %v5420, %v5612
  %5614 = vmatprep.mubr.bf16.mxu0 %v4134
  %5615 = vmatmul.mubr.bf16.gmra.mxu0 %v4133
  %v5616 = vpop.f32.mrf.mxu0
  %v5617 = vadd.f32 %v5424, %v5616
  %v5618 = vpop.f32.mrf.mxu0
  %v5619 = vadd.f32 %v5426, %v5618
  %v5620 = vpop.f32.mrf.mxu0
  %v5621 = vadd.f32 %v5428, %v5620
  %v5622 = vpop.f32.mrf.mxu0
  %v5623 = vadd.f32 %v5430, %v5622
  %5624 = vmatprep.mubr.bf16.mxu0 %v4138
  %5625 = vmatmul.mubr.bf16.gmra.mxu0 %v4137
  %v5626 = vpop.f32.mrf.mxu0
  %v5627 = vadd.f32 %v5434, %v5626
  %v5628 = vpop.f32.mrf.mxu0
  %v5629 = vadd.f32 %v5436, %v5628
  %v5630 = vpop.f32.mrf.mxu0
  %v5631 = vadd.f32 %v5438, %v5630
  %v5632 = vpop.f32.mrf.mxu0
  %v5633 = vadd.f32 %v5440, %v5632
  %5634 = vmatprep.mubr.bf16.mxu0 %v4142
  %5635 = vmatmul.mubr.bf16.gmra.mxu0 %v4141
  %v5636 = vpop.f32.mrf.mxu0
  %v5637 = vadd.f32 %v5444, %v5636
  %v5638 = vpop.f32.mrf.mxu0
  %v5639 = vadd.f32 %v5446, %v5638
  %v5640 = vpop.f32.mrf.mxu0
  %v5641 = vadd.f32 %v5448, %v5640
  %v5642 = vpop.f32.mrf.mxu0
  %v5643 = vadd.f32 %v5450, %v5642
  %5644 = vmatprep.mubr.bf16.mxu0 %v4146
  %5645 = vmatmul.mubr.bf16.gmra.mxu0 %v4145
  %v5646 = vpop.f32.mrf.mxu0
  %v5647 = vadd.f32 %v5454, %v5646
  %v5648 = vpop.f32.mrf.mxu0
  %v5649 = vadd.f32 %v5456, %v5648
  %v5650 = vpop.f32.mrf.mxu0
  %v5651 = vadd.f32 %v5458, %v5650
  %v5652 = vpop.f32.mrf.mxu0
  %v5653 = vadd.f32 %v5460, %v5652
  %5654 = vmatprep.mubr.bf16.mxu0 %v4150
  %5655 = vmatmul.mubr.bf16.gmra.mxu0 %v4149
  %v5656 = vpop.f32.mrf.mxu0
  %v5657 = vadd.f32 %v5464, %v5656
  %v5658 = vpop.f32.mrf.mxu0
  %v5659 = vadd.f32 %v5466, %v5658
  %v5660 = vpop.f32.mrf.mxu0
  %v5661 = vadd.f32 %v5468, %v5660
  %v5662 = vpop.f32.mrf.mxu0
  %v5663 = vadd.f32 %v5470, %v5662
  %5664 = vmatprep.mubr.bf16.mxu0 %v4154
  %5665 = vmatmul.mubr.bf16.gmra.mxu0 %v4153
  %v5666 = vpop.f32.mrf.mxu0
  %v5667 = vadd.f32 %v5474, %v5666
  %v5668 = vpop.f32.mrf.mxu0
  %v5669 = vadd.f32 %v5476, %v5668
  %v5670 = vpop.f32.mrf.mxu0
  %v5671 = vadd.f32 %v5478, %v5670
  %v5672 = vpop.f32.mrf.mxu0
  %v5673 = vadd.f32 %v5480, %v5672
  %5674 = vmatprep.mubr.bf16.mxu0 %v4158
  %5675 = vmatmul.mubr.bf16.gmra.mxu0 %v4157
  %v5676 = vpop.f32.mrf.mxu0
  %v5677 = vadd.f32 %v5484, %v5676
  %v5678 = vpop.f32.mrf.mxu0
  %v5679 = vadd.f32 %v5486, %v5678
  %v5680 = vpop.f32.mrf.mxu0
  %v5681 = vadd.f32 %v5488, %v5680
  %v5682 = vpop.f32.mrf.mxu0
  %v5683 = vadd.f32 %v5490, %v5682
  %5684 = vmatprep.mubr.bf16.mxu0 %v4162
  %5685 = vmatmul.mubr.bf16.gmra.mxu0 %v4161
  %v5686 = vpop.f32.mrf.mxu0
  %v5687 = vadd.f32 %v5494, %v5686
  %v5688 = vpop.f32.mrf.mxu0
  %v5689 = vadd.f32 %v5496, %v5688
  %v5690 = vpop.f32.mrf.mxu0
  %v5691 = vadd.f32 %v5498, %v5690
  %v5692 = vpop.f32.mrf.mxu0
  %v5693 = vadd.f32 %v5500, %v5692
  %5694 = vmatprep.mubr.bf16.mxu0 %v4166
  %5695 = vmatmul.mubr.bf16.gmra.mxu0 %v4165
  %v5696 = vpop.f32.mrf.mxu0
  %v5697 = vadd.f32 %v5504, %v5696
  %v5698 = vpop.f32.mrf.mxu0
  %v5699 = vadd.f32 %v5506, %v5698
  %v5700 = vpop.f32.mrf.mxu0
  %v5701 = vadd.f32 %v5508, %v5700
  %v5702 = vpop.f32.mrf.mxu0
  %v5703 = vadd.f32 %v5510, %v5702
  %5704 = vmatprep.mubr.bf16.mxu0 %v4170
  %5705 = vmatmul.mubr.bf16.gmra.mxu0 %v4169
  %v5706 = vpop.f32.mrf.mxu0
  %v5707 = vadd.f32 %v5514, %v5706
  %v5708 = vpop.f32.mrf.mxu0
  %v5709 = vadd.f32 %v5516, %v5708
  %v5710 = vpop.f32.mrf.mxu0
  %v5711 = vadd.f32 %v5518, %v5710
  %v5712 = vpop.f32.mrf.mxu0
  %v5713 = vadd.f32 %v5520, %v5712
  %5714 = vmatprep.mubr.bf16.mxu0 %v4174
  %5715 = vmatmul.mubr.bf16.gmra.mxu0 %v4173
  %v5716 = vpop.f32.mrf.mxu0
  %v5717 = vadd.f32 %v5524, %v5716
  %v5718 = vpop.f32.mrf.mxu0
  %v5719 = vadd.f32 %v5526, %v5718
  %v5720 = vpop.f32.mrf.mxu0
  %v5721 = vadd.f32 %v5528, %v5720
  %v5722 = vpop.f32.mrf.mxu0
  %v5723 = vadd.f32 %v5530, %v5722
  %5724 = vmatprep.mubr.bf16.mxu0 %v4178
  %5725 = vmatmul.mubr.bf16.gmra.mxu0 %v4177
  %v5726 = vpop.f32.mrf.mxu0
  %v5727 = vadd.f32 %v5534, %v5726
  %v5728 = vpop.f32.mrf.mxu0
  %v5729 = vadd.f32 %v5536, %v5728
  %v5730 = vpop.f32.mrf.mxu0
  %v5731 = vadd.f32 %v5538, %v5730
  %v5732 = vpop.f32.mrf.mxu0
  %v5733 = vadd.f32 %v5540, %v5732
  %5734 = vmatprep.mubr.bf16.mxu0 %v4182
  %5735 = vmatmul.mubr.bf16.gmra.mxu0 %v4181
  %v5736 = vpop.f32.mrf.mxu0
  %v5737 = vadd.f32 %v5544, %v5736
  %v5738 = vpop.f32.mrf.mxu0
  %v5739 = vadd.f32 %v5546, %v5738
  %v5740 = vpop.f32.mrf.mxu0
  %v5741 = vadd.f32 %v5548, %v5740
  %v5742 = vpop.f32.mrf.mxu0
  %v5743 = vadd.f32 %v5550, %v5742
  %5744 = vdwg.mxu0
  %vm5745 = vcmp.gt.f32.partialorder %v5201, 0.0
  %vm5746 = vcmp.gt.f32.partialorder %v5203, 0.0
  %vm5747 = vcmp.gt.f32.partialorder %v5587, 0.0
  %vm5748 = vcmp.gt.f32.partialorder %v5589, 0.0
  %vm5749 = vcmp.gt.f32.partialorder %v5205, 0.0
  %vm5750 = vcmp.gt.f32.partialorder %v5207, 0.0
  %vm5751 = vcmp.gt.f32.partialorder %v5591, 0.0
  %vm5752 = vcmp.gt.f32.partialorder %v5593, 0.0
  %vm5753 = vcmp.gt.f32.partialorder %v5211, 0.0
  %vm5754 = vcmp.gt.f32.partialorder %v5213, 0.0
  %vm5755 = vcmp.gt.f32.partialorder %v5597, 0.0
  %vm5756 = vcmp.gt.f32.partialorder %v5599, 0.0
  %vm5757 = vcmp.gt.f32.partialorder %v5215, 0.0
  %vm5758 = vcmp.gt.f32.partialorder %v5217, 0.0
  %vm5759 = vcmp.gt.f32.partialorder %v5601, 0.0
  %vm5760 = vcmp.gt.f32.partialorder %v5603, 0.0
  %vm5761 = vcmp.gt.f32.partialorder %v5221, 0.0
  %vm5762 = vcmp.gt.f32.partialorder %v5223, 0.0
  %vm5763 = vcmp.gt.f32.partialorder %v5607, 0.0
  %vm5764 = vcmp.gt.f32.partialorder %v5609, 0.0
  %vm5765 = vcmp.gt.f32.partialorder %v5225, 0.0
  %vm5766 = vcmp.gt.f32.partialorder %v5227, 0.0
  %vm5767 = vcmp.gt.f32.partialorder %v5611, 0.0
  %vm5768 = vcmp.gt.f32.partialorder %v5613, 0.0
  %vm5769 = vcmp.gt.f32.partialorder %v5231, 0.0
  %vm5770 = vcmp.gt.f32.partialorder %v5233, 0.0
  %vm5771 = vcmp.gt.f32.partialorder %v5617, 0.0
  %vm5772 = vcmp.gt.f32.partialorder %v5619, 0.0
  %vm5773 = vcmp.gt.f32.partialorder %v5235, 0.0
  %vm5774 = vcmp.gt.f32.partialorder %v5237, 0.0
  %vm5775 = vcmp.gt.f32.partialorder %v5621, 0.0
  %vm5776 = vcmp.gt.f32.partialorder %v5623, 0.0
  %vm5777 = vcmp.gt.f32.partialorder %v5241, 0.0
  %vm5778 = vcmp.gt.f32.partialorder %v5243, 0.0
  %vm5779 = vcmp.gt.f32.partialorder %v5627, 0.0
  %vm5780 = vcmp.gt.f32.partialorder %v5629, 0.0
  %vm5781 = vcmp.gt.f32.partialorder %v5245, 0.0
  %vm5782 = vcmp.gt.f32.partialorder %v5247, 0.0
  %vm5783 = vcmp.gt.f32.partialorder %v5631, 0.0
  %vm5784 = vcmp.gt.f32.partialorder %v5633, 0.0
  %vm5785 = vcmp.gt.f32.partialorder %v5251, 0.0
  %vm5786 = vcmp.gt.f32.partialorder %v5253, 0.0
  %vm5787 = vcmp.gt.f32.partialorder %v5637, 0.0
  %vm5788 = vcmp.gt.f32.partialorder %v5639, 0.0
  %vm5789 = vcmp.gt.f32.partialorder %v5255, 0.0
  %vm5790 = vcmp.gt.f32.partialorder %v5257, 0.0
  %vm5791 = vcmp.gt.f32.partialorder %v5641, 0.0
  %vm5792 = vcmp.gt.f32.partialorder %v5643, 0.0
  %vm5793 = vcmp.gt.f32.partialorder %v5261, 0.0
  %vm5794 = vcmp.gt.f32.partialorder %v5263, 0.0
  %vm5795 = vcmp.gt.f32.partialorder %v5647, 0.0
  %vm5796 = vcmp.gt.f32.partialorder %v5649, 0.0
  %vm5797 = vcmp.gt.f32.partialorder %v5265, 0.0
  %vm5798 = vcmp.gt.f32.partialorder %v5267, 0.0
  %vm5799 = vcmp.gt.f32.partialorder %v5651, 0.0
  %vm5800 = vcmp.gt.f32.partialorder %v5653, 0.0
  %vm5801 = vcmp.gt.f32.partialorder %v5271, 0.0
  %vm5802 = vcmp.gt.f32.partialorder %v5273, 0.0
  %vm5803 = vcmp.gt.f32.partialorder %v5657, 0.0
  %vm5804 = vcmp.gt.f32.partialorder %v5659, 0.0
  %vm5805 = vcmp.gt.f32.partialorder %v5275, 0.0
  %vm5806 = vcmp.gt.f32.partialorder %v5277, 0.0
  %vm5807 = vcmp.gt.f32.partialorder %v5661, 0.0
  %vm5808 = vcmp.gt.f32.partialorder %v5663, 0.0
  %vm5809 = vcmp.gt.f32.partialorder %v5281, 0.0
  %vm5810 = vcmp.gt.f32.partialorder %v5283, 0.0
  %vm5811 = vcmp.gt.f32.partialorder %v5667, 0.0
  %vm5812 = vcmp.gt.f32.partialorder %v5669, 0.0
  %vm5813 = vcmp.gt.f32.partialorder %v5285, 0.0
  %vm5814 = vcmp.gt.f32.partialorder %v5287, 0.0
  %vm5815 = vcmp.gt.f32.partialorder %v5671, 0.0
  %vm5816 = vcmp.gt.f32.partialorder %v5673, 0.0
  %vm5817 = vcmp.gt.f32.partialorder %v5291, 0.0
  %vm5818 = vcmp.gt.f32.partialorder %v5293, 0.0
  %vm5819 = vcmp.gt.f32.partialorder %v5677, 0.0
  %vm5820 = vcmp.gt.f32.partialorder %v5679, 0.0
  %vm5821 = vcmp.gt.f32.partialorder %v5295, 0.0
  %vm5822 = vcmp.gt.f32.partialorder %v5297, 0.0
  %vm5823 = vcmp.gt.f32.partialorder %v5681, 0.0
  %vm5824 = vcmp.gt.f32.partialorder %v5683, 0.0
  %vm5825 = vcmp.gt.f32.partialorder %v5301, 0.0
  %vm5826 = vcmp.gt.f32.partialorder %v5303, 0.0
  %vm5827 = vcmp.gt.f32.partialorder %v5687, 0.0
  %vm5828 = vcmp.gt.f32.partialorder %v5689, 0.0
  %vm5829 = vcmp.gt.f32.partialorder %v5305, 0.0
  %vm5830 = vcmp.gt.f32.partialorder %v5307, 0.0
  %vm5831 = vcmp.gt.f32.partialorder %v5691, 0.0
  %vm5832 = vcmp.gt.f32.partialorder %v5693, 0.0
  %vm5833 = vcmp.gt.f32.partialorder %v5311, 0.0
  %vm5834 = vcmp.gt.f32.partialorder %v5313, 0.0
  %vm5835 = vcmp.gt.f32.partialorder %v5697, 0.0
  %vm5836 = vcmp.gt.f32.partialorder %v5699, 0.0
  %vm5837 = vcmp.gt.f32.partialorder %v5315, 0.0
  %vm5838 = vcmp.gt.f32.partialorder %v5317, 0.0
  %vm5839 = vcmp.gt.f32.partialorder %v5701, 0.0
  %vm5840 = vcmp.gt.f32.partialorder %v5703, 0.0
  %vm5841 = vcmp.gt.f32.partialorder %v5321, 0.0
  %vm5842 = vcmp.gt.f32.partialorder %v5323, 0.0
  %vm5843 = vcmp.gt.f32.partialorder %v5707, 0.0
  %vm5844 = vcmp.gt.f32.partialorder %v5709, 0.0
  %vm5845 = vcmp.gt.f32.partialorder %v5325, 0.0
  %vm5846 = vcmp.gt.f32.partialorder %v5327, 0.0
  %vm5847 = vcmp.gt.f32.partialorder %v5711, 0.0
  %vm5848 = vcmp.gt.f32.partialorder %v5713, 0.0
  %vm5849 = vcmp.gt.f32.partialorder %v5331, 0.0
  %vm5850 = vcmp.gt.f32.partialorder %v5333, 0.0
  %vm5851 = vcmp.gt.f32.partialorder %v5717, 0.0
  %vm5852 = vcmp.gt.f32.partialorder %v5719, 0.0
  %vm5853 = vcmp.gt.f32.partialorder %v5335, 0.0
  %vm5854 = vcmp.gt.f32.partialorder %v5337, 0.0
  %vm5855 = vcmp.gt.f32.partialorder %v5721, 0.0
  %vm5856 = vcmp.gt.f32.partialorder %v5723, 0.0
  %vm5857 = vcmp.gt.f32.partialorder %v5341, 0.0
  %vm5858 = vcmp.gt.f32.partialorder %v5343, 0.0
  %vm5859 = vcmp.gt.f32.partialorder %v5727, 0.0
  %vm5860 = vcmp.gt.f32.partialorder %v5729, 0.0
  %vm5861 = vcmp.gt.f32.partialorder %v5345, 0.0
  %vm5862 = vcmp.gt.f32.partialorder %v5347, 0.0
  %vm5863 = vcmp.gt.f32.partialorder %v5731, 0.0
  %vm5864 = vcmp.gt.f32.partialorder %v5733, 0.0
  %vm5865 = vcmp.gt.f32.partialorder %v5351, 0.0
  %vm5866 = vcmp.gt.f32.partialorder %v5353, 0.0
  %vm5867 = vcmp.gt.f32.partialorder %v5737, 0.0
  %vm5868 = vcmp.gt.f32.partialorder %v5739, 0.0
  %vm5869 = vcmp.gt.f32.partialorder %v5355, 0.0
  %vm5870 = vcmp.gt.f32.partialorder %v5357, 0.0
  %vm5871 = vcmp.gt.f32.partialorder %v5741, 0.0
  %vm5872 = vcmp.gt.f32.partialorder %v5743, 0.0
  %v5873 = vmul.f32 %v5201, 0.2
  %v5874 = vmul.f32 %v5203, 0.2
  %v5875 = vmul.f32 %v5587, 0.2
  %v5876 = vmul.f32 %v5589, 0.2
  %v5877 = vmul.f32 %v5205, 0.2
  %v5878 = vmul.f32 %v5207, 0.2
  %v5879 = vmul.f32 %v5591, 0.2
  %v5880 = vmul.f32 %v5593, 0.2
  %v5881 = vmul.f32 %v5211, 0.2
  %v5882 = vmul.f32 %v5213, 0.2
  %v5883 = vmul.f32 %v5597, 0.2
  %v5884 = vmul.f32 %v5599, 0.2
  %v5885 = vmul.f32 %v5215, 0.2
  %v5886 = vmul.f32 %v5217, 0.2
  %v5887 = vmul.f32 %v5601, 0.2
  %v5888 = vmul.f32 %v5603, 0.2
  %v5889 = vmul.f32 %v5221, 0.2
  %v5890 = vmul.f32 %v5223, 0.2
  %v5891 = vmul.f32 %v5607, 0.2
  %v5892 = vmul.f32 %v5609, 0.2
  %v5893 = vmul.f32 %v5225, 0.2
  %v5894 = vmul.f32 %v5227, 0.2
  %v5895 = vmul.f32 %v5611, 0.2
  %v5896 = vmul.f32 %v5613, 0.2
  %v5897 = vmul.f32 %v5231, 0.2
  %v5898 = vmul.f32 %v5233, 0.2
  %v5899 = vmul.f32 %v5617, 0.2
  %v5900 = vmul.f32 %v5619, 0.2
  %v5901 = vmul.f32 %v5235, 0.2
  %v5902 = vmul.f32 %v5237, 0.2
  %v5903 = vmul.f32 %v5621, 0.2
  %v5904 = vmul.f32 %v5623, 0.2
  %v5905 = vmul.f32 %v5241, 0.2
  %v5906 = vmul.f32 %v5243, 0.2
  %v5907 = vmul.f32 %v5627, 0.2
  %v5908 = vmul.f32 %v5629, 0.2
  %v5909 = vmul.f32 %v5245, 0.2
  %v5910 = vmul.f32 %v5247, 0.2
  %v5911 = vmul.f32 %v5631, 0.2
  %v5912 = vmul.f32 %v5633, 0.2
  %v5913 = vmul.f32 %v5251, 0.2
  %v5914 = vmul.f32 %v5253, 0.2
  %v5915 = vmul.f32 %v5637, 0.2
  %v5916 = vmul.f32 %v5639, 0.2
  %v5917 = vmul.f32 %v5255, 0.2
  %v5918 = vmul.f32 %v5257, 0.2
  %v5919 = vmul.f32 %v5641, 0.2
  %v5920 = vmul.f32 %v5643, 0.2
  %v5921 = vmul.f32 %v5261, 0.2
  %v5922 = vmul.f32 %v5263, 0.2
  %v5923 = vmul.f32 %v5647, 0.2
  %v5924 = vmul.f32 %v5649, 0.2
  %v5925 = vmul.f32 %v5265, 0.2
  %v5926 = vmul.f32 %v5267, 0.2
  %v5927 = vmul.f32 %v5651, 0.2
  %v5928 = vmul.f32 %v5653, 0.2
  %v5929 = vmul.f32 %v5271, 0.2
  %v5930 = vmul.f32 %v5273, 0.2
  %v5931 = vmul.f32 %v5657, 0.2
  %v5932 = vmul.f32 %v5659, 0.2
  %v5933 = vmul.f32 %v5275, 0.2
  %v5934 = vmul.f32 %v5277, 0.2
  %v5935 = vmul.f32 %v5661, 0.2
  %v5936 = vmul.f32 %v5663, 0.2
  %v5937 = vmul.f32 %v5281, 0.2
  %v5938 = vmul.f32 %v5283, 0.2
  %v5939 = vmul.f32 %v5667, 0.2
  %v5940 = vmul.f32 %v5669, 0.2
  %v5941 = vmul.f32 %v5285, 0.2
  %v5942 = vmul.f32 %v5287, 0.2
  %v5943 = vmul.f32 %v5671, 0.2
  %v5944 = vmul.f32 %v5673, 0.2
  %v5945 = vmul.f32 %v5291, 0.2
  %v5946 = vmul.f32 %v5293, 0.2
  %v5947 = vmul.f32 %v5677, 0.2
  %v5948 = vmul.f32 %v5679, 0.2
  %v5949 = vmul.f32 %v5295, 0.2
  %v5950 = vmul.f32 %v5297, 0.2
  %v5951 = vmul.f32 %v5681, 0.2
  %v5952 = vmul.f32 %v5683, 0.2
  %v5953 = vmul.f32 %v5301, 0.2
  %v5954 = vmul.f32 %v5303, 0.2
  %v5955 = vmul.f32 %v5687, 0.2
  %v5956 = vmul.f32 %v5689, 0.2
  %v5957 = vmul.f32 %v5305, 0.2
  %v5958 = vmul.f32 %v5307, 0.2
  %v5959 = vmul.f32 %v5691, 0.2
  %v5960 = vmul.f32 %v5693, 0.2
  %v5961 = vmul.f32 %v5311, 0.2
  %v5962 = vmul.f32 %v5313, 0.2
  %v5963 = vmul.f32 %v5697, 0.2
  %v5964 = vmul.f32 %v5699, 0.2
  %v5965 = vmul.f32 %v5315, 0.2
  %v5966 = vmul.f32 %v5317, 0.2
  %v5967 = vmul.f32 %v5701, 0.2
  %v5968 = vmul.f32 %v5703, 0.2
  %v5969 = vmul.f32 %v5321, 0.2
  %v5970 = vmul.f32 %v5323, 0.2
  %v5971 = vmul.f32 %v5707, 0.2
  %v5972 = vmul.f32 %v5709, 0.2
  %v5973 = vmul.f32 %v5325, 0.2
  %v5974 = vmul.f32 %v5327, 0.2
  %v5975 = vmul.f32 %v5711, 0.2
  %v5976 = vmul.f32 %v5713, 0.2
  %v5977 = vmul.f32 %v5331, 0.2
  %v5978 = vmul.f32 %v5333, 0.2
  %v5979 = vmul.f32 %v5717, 0.2
  %v5980 = vmul.f32 %v5719, 0.2
  %v5981 = vmul.f32 %v5335, 0.2
  %v5982 = vmul.f32 %v5337, 0.2
  %v5983 = vmul.f32 %v5721, 0.2
  %v5984 = vmul.f32 %v5723, 0.2
  %v5985 = vmul.f32 %v5341, 0.2
  %v5986 = vmul.f32 %v5343, 0.2
  %v5987 = vmul.f32 %v5727, 0.2
  %v5988 = vmul.f32 %v5729, 0.2
  %v5989 = vmul.f32 %v5345, 0.2
  %v5990 = vmul.f32 %v5347, 0.2
  %v5991 = vmul.f32 %v5731, 0.2
  %v5992 = vmul.f32 %v5733, 0.2
  %v5993 = vmul.f32 %v5351, 0.2
  %v5994 = vmul.f32 %v5353, 0.2
  %v5995 = vmul.f32 %v5737, 0.2
  %v5996 = vmul.f32 %v5739, 0.2
  %v5997 = vmul.f32 %v5355, 0.2
  %v5998 = vmul.f32 %v5357, 0.2
  %v5999 = vmul.f32 %v5741, 0.2
  %v6000 = vmul.f32 %v5743, 0.2
  %v6001 = vsel %vm5745, %v5201, %v5873
  %v6002 = vsel %vm5746, %v5203, %v5874
  %v6003 = vsel %vm5747, %v5587, %v5875
  %v6004 = vsel %vm5748, %v5589, %v5876
  %v6005 = vsel %vm5749, %v5205, %v5877
  %v6006 = vsel %vm5750, %v5207, %v5878
  %v6007 = vsel %vm5751, %v5591, %v5879
  %v6008 = vsel %vm5752, %v5593, %v5880
  %v6009 = vsel %vm5753, %v5211, %v5881
  %v6010 = vsel %vm5754, %v5213, %v5882
  %v6011 = vsel %vm5755, %v5597, %v5883
  %v6012 = vsel %vm5756, %v5599, %v5884
  %v6013 = vsel %vm5757, %v5215, %v5885
  %v6014 = vsel %vm5758, %v5217, %v5886
  %v6015 = vsel %vm5759, %v5601, %v5887
  %v6016 = vsel %vm5760, %v5603, %v5888
  %v6017 = vsel %vm5761, %v5221, %v5889
  %v6018 = vsel %vm5762, %v5223, %v5890
  %v6019 = vsel %vm5763, %v5607, %v5891
  %v6020 = vsel %vm5764, %v5609, %v5892
  %v6021 = vsel %vm5765, %v5225, %v5893
  %v6022 = vsel %vm5766, %v5227, %v5894
  %v6023 = vsel %vm5767, %v5611, %v5895
  %v6024 = vsel %vm5768, %v5613, %v5896
  %v6025 = vsel %vm5769, %v5231, %v5897
  %v6026 = vsel %vm5770, %v5233, %v5898
  %v6027 = vsel %vm5771, %v5617, %v5899
  %v6028 = vsel %vm5772, %v5619, %v5900
  %v6029 = vsel %vm5773, %v5235, %v5901
  %v6030 = vsel %vm5774, %v5237, %v5902
  %v6031 = vsel %vm5775, %v5621, %v5903
  %v6032 = vsel %vm5776, %v5623, %v5904
  %v6033 = vsel %vm5777, %v5241, %v5905
  %v6034 = vsel %vm5778, %v5243, %v5906
  %v6035 = vsel %vm5779, %v5627, %v5907
  %v6036 = vsel %vm5780, %v5629, %v5908
  %v6037 = vsel %vm5781, %v5245, %v5909
  %v6038 = vsel %vm5782, %v5247, %v5910
  %v6039 = vsel %vm5783, %v5631, %v5911
  %v6040 = vsel %vm5784, %v5633, %v5912
  %v6041 = vsel %vm5785, %v5251, %v5913
  %v6042 = vsel %vm5786, %v5253, %v5914
  %v6043 = vsel %vm5787, %v5637, %v5915
  %v6044 = vsel %vm5788, %v5639, %v5916
  %v6045 = vsel %vm5789, %v5255, %v5917
  %v6046 = vsel %vm5790, %v5257, %v5918
  %v6047 = vsel %vm5791, %v5641, %v5919
  %v6048 = vsel %vm5792, %v5643, %v5920
  %v6049 = vsel %vm5793, %v5261, %v5921
  %v6050 = vsel %vm5794, %v5263, %v5922
  %v6051 = vsel %vm5795, %v5647, %v5923
  %v6052 = vsel %vm5796, %v5649, %v5924
  %v6053 = vsel %vm5797, %v5265, %v5925
  %v6054 = vsel %vm5798, %v5267, %v5926
  %v6055 = vsel %vm5799, %v5651, %v5927
  %v6056 = vsel %vm5800, %v5653, %v5928
  %v6057 = vsel %vm5801, %v5271, %v5929
  %v6058 = vsel %vm5802, %v5273, %v5930
  %v6059 = vsel %vm5803, %v5657, %v5931
  %v6060 = vsel %vm5804, %v5659, %v5932
  %v6061 = vsel %vm5805, %v5275, %v5933
  %v6062 = vsel %vm5806, %v5277, %v5934
  %v6063 = vsel %vm5807, %v5661, %v5935
  %v6064 = vsel %vm5808, %v5663, %v5936
  %v6065 = vsel %vm5809, %v5281, %v5937
  %v6066 = vsel %vm5810, %v5283, %v5938
  %v6067 = vsel %vm5811, %v5667, %v5939
  %v6068 = vsel %vm5812, %v5669, %v5940
  %v6069 = vsel %vm5813, %v5285, %v5941
  %v6070 = vsel %vm5814, %v5287, %v5942
  %v6071 = vsel %vm5815, %v5671, %v5943
  %v6072 = vsel %vm5816, %v5673, %v5944
  %v6073 = vsel %vm5817, %v5291, %v5945
  %v6074 = vsel %vm5818, %v5293, %v5946
  %v6075 = vsel %vm5819, %v5677, %v5947
  %v6076 = vsel %vm5820, %v5679, %v5948
  %v6077 = vsel %vm5821, %v5295, %v5949
  %v6078 = vsel %vm5822, %v5297, %v5950
  %v6079 = vsel %vm5823, %v5681, %v5951
  %v6080 = vsel %vm5824, %v5683, %v5952
  %v6081 = vsel %vm5825, %v5301, %v5953
  %v6082 = vsel %vm5826, %v5303, %v5954
  %v6083 = vsel %vm5827, %v5687, %v5955
  %v6084 = vsel %vm5828, %v5689, %v5956
  %v6085 = vsel %vm5829, %v5305, %v5957
  %v6086 = vsel %vm5830, %v5307, %v5958
  %v6087 = vsel %vm5831, %v5691, %v5959
  %v6088 = vsel %vm5832, %v5693, %v5960
  %v6089 = vsel %vm5833, %v5311, %v5961
  %v6090 = vsel %vm5834, %v5313, %v5962
  %v6091 = vsel %vm5835, %v5697, %v5963
  %v6092 = vsel %vm5836, %v5699, %v5964
  %v6093 = vsel %vm5837, %v5315, %v5965
  %v6094 = vsel %vm5838, %v5317, %v5966
  %v6095 = vsel %vm5839, %v5701, %v5967
  %v6096 = vsel %vm5840, %v5703, %v5968
  %v6097 = vsel %vm5841, %v5321, %v5969
  %v6098 = vsel %vm5842, %v5323, %v5970
  %v6099 = vsel %vm5843, %v5707, %v5971
  %v6100 = vsel %vm5844, %v5709, %v5972
  %v6101 = vsel %vm5845, %v5325, %v5973
  %v6102 = vsel %vm5846, %v5327, %v5974
  %v6103 = vsel %vm5847, %v5711, %v5975
  %v6104 = vsel %vm5848, %v5713, %v5976
  %v6105 = vsel %vm5849, %v5331, %v5977
  %v6106 = vsel %vm5850, %v5333, %v5978
  %v6107 = vsel %vm5851, %v5717, %v5979
  %v6108 = vsel %vm5852, %v5719, %v5980
  %v6109 = vsel %vm5853, %v5335, %v5981
  %v6110 = vsel %vm5854, %v5337, %v5982
  %v6111 = vsel %vm5855, %v5721, %v5983
  %v6112 = vsel %vm5856, %v5723, %v5984
  %v6113 = vsel %vm5857, %v5341, %v5985
  %v6114 = vsel %vm5858, %v5343, %v5986
  %v6115 = vsel %vm5859, %v5727, %v5987
  %v6116 = vsel %vm5860, %v5729, %v5988
  %v6117 = vsel %vm5861, %v5345, %v5989
  %v6118 = vsel %vm5862, %v5347, %v5990
  %v6119 = vsel %vm5863, %v5731, %v5991
  %v6120 = vsel %vm5864, %v5733, %v5992
  %v6121 = vsel %vm5865, %v5351, %v5993
  %v6122 = vsel %vm5866, %v5353, %v5994
  %v6123 = vsel %vm5867, %v5737, %v5995
  %v6124 = vsel %vm5868, %v5739, %v5996
  %v6125 = vsel %vm5869, %v5355, %v5997
  %v6126 = vsel %vm5870, %v5357, %v5998
  %v6127 = vsel %vm5871, %v5741, %v5999
  %v6128 = vsel %vm5872, %v5743, %v6000
  %v6129 = vld [vmem:[%s7] sm:$0xf]
  %v6131 = vlaneseq
  %v6132 = vshrl.u32 %v6131, 7
  %v6133 = vsub.s32 0, %v6132
  %v6134 = vrot.slane %v6129, %v6133
  %v6135 = vlaneseq
  %v6136 = vshrl.u32 %v6135, 7
  %v6137 = vsub.s32 1, %v6136
  %v6138 = vrot.slane %v6129, %v6137
  %v6139 = vlaneseq
  %v6140 = vshrl.u32 %v6139, 7
  %v6141 = vsub.s32 2, %v6140
  %v6142 = vrot.slane %v6129, %v6141
  %v6143 = vlaneseq
  %v6144 = vshrl.u32 %v6143, 7
  %v6145 = vsub.s32 3, %v6144
  %v6146 = vrot.slane %v6129, %v6145
  %v6151 = vmul.f32 %v6001, %v6134
  %v6152 = vmul.f32 %v6002, %v6138
  %v6153 = vmul.f32 %v6003, %v6142
  %v6154 = vmul.f32 %v6004, %v6146
  %v6155 = vmul.f32 %v6005, %v6134
  %v6156 = vmul.f32 %v6006, %v6138
  %v6157 = vmul.f32 %v6007, %v6142
  %v6158 = vmul.f32 %v6008, %v6146
  %v6159 = vmul.f32 %v6009, %v6134
  %v6160 = vmul.f32 %v6010, %v6138
  %v6161 = vmul.f32 %v6011, %v6142
  %v6162 = vmul.f32 %v6012, %v6146
  %v6163 = vmul.f32 %v6013, %v6134
  %v6164 = vmul.f32 %v6014, %v6138
  %v6165 = vmul.f32 %v6015, %v6142
  %v6166 = vmul.f32 %v6016, %v6146
  %v6167 = vmul.f32 %v6017, %v6134
  %v6168 = vmul.f32 %v6018, %v6138
  %v6169 = vmul.f32 %v6019, %v6142
  %v6170 = vmul.f32 %v6020, %v6146
  %v6171 = vmul.f32 %v6021, %v6134
  %v6172 = vmul.f32 %v6022, %v6138
  %v6173 = vmul.f32 %v6023, %v6142
  %v6174 = vmul.f32 %v6024, %v6146
  %v6175 = vmul.f32 %v6025, %v6134
  %v6176 = vmul.f32 %v6026, %v6138
  %v6177 = vmul.f32 %v6027, %v6142
  %v6178 = vmul.f32 %v6028, %v6146
  %v6179 = vmul.f32 %v6029, %v6134
  %v6180 = vmul.f32 %v6030, %v6138
  %v6181 = vmul.f32 %v6031, %v6142
  %v6182 = vmul.f32 %v6032, %v6146
  %v6183 = vmul.f32 %v6033, %v6134
  %v6184 = vmul.f32 %v6034, %v6138
  %v6185 = vmul.f32 %v6035, %v6142
  %v6186 = vmul.f32 %v6036, %v6146
  %v6187 = vmul.f32 %v6037, %v6134
  %v6188 = vmul.f32 %v6038, %v6138
  %v6189 = vmul.f32 %v6039, %v6142
  %v6190 = vmul.f32 %v6040, %v6146
  %v6191 = vmul.f32 %v6041, %v6134
  %v6192 = vmul.f32 %v6042, %v6138
  %v6193 = vmul.f32 %v6043, %v6142
  %v6194 = vmul.f32 %v6044, %v6146
  %v6195 = vmul.f32 %v6045, %v6134
  %v6196 = vmul.f32 %v6046, %v6138
  %v6197 = vmul.f32 %v6047, %v6142
  %v6198 = vmul.f32 %v6048, %v6146
  %v6199 = vmul.f32 %v6049, %v6134
  %v6200 = vmul.f32 %v6050, %v6138
  %v6201 = vmul.f32 %v6051, %v6142
  %v6202 = vmul.f32 %v6052, %v6146
  %v6203 = vmul.f32 %v6053, %v6134
  %v6204 = vmul.f32 %v6054, %v6138
  %v6205 = vmul.f32 %v6055, %v6142
  %v6206 = vmul.f32 %v6056, %v6146
  %v6207 = vmul.f32 %v6057, %v6134
  %v6208 = vmul.f32 %v6058, %v6138
  %v6209 = vmul.f32 %v6059, %v6142
  %v6210 = vmul.f32 %v6060, %v6146
  %v6211 = vmul.f32 %v6061, %v6134
  %v6212 = vmul.f32 %v6062, %v6138
  %v6213 = vmul.f32 %v6063, %v6142
  %v6214 = vmul.f32 %v6064, %v6146
  %v6215 = vmul.f32 %v6065, %v6134
  %v6216 = vmul.f32 %v6066, %v6138
  %v6217 = vmul.f32 %v6067, %v6142
  %v6218 = vmul.f32 %v6068, %v6146
  %v6219 = vmul.f32 %v6069, %v6134
  %v6220 = vmul.f32 %v6070, %v6138
  %v6221 = vmul.f32 %v6071, %v6142
  %v6222 = vmul.f32 %v6072, %v6146
  %v6223 = vmul.f32 %v6073, %v6134
  %v6224 = vmul.f32 %v6074, %v6138
  %v6225 = vmul.f32 %v6075, %v6142
  %v6226 = vmul.f32 %v6076, %v6146
  %v6227 = vmul.f32 %v6077, %v6134
  %v6228 = vmul.f32 %v6078, %v6138
  %v6229 = vmul.f32 %v6079, %v6142
  %v6230 = vmul.f32 %v6080, %v6146
  %v6231 = vmul.f32 %v6081, %v6134
  %v6232 = vmul.f32 %v6082, %v6138
  %v6233 = vmul.f32 %v6083, %v6142
  %v6234 = vmul.f32 %v6084, %v6146
  %v6235 = vmul.f32 %v6085, %v6134
  %v6236 = vmul.f32 %v6086, %v6138
  %v6237 = vmul.f32 %v6087, %v6142
  %v6238 = vmul.f32 %v6088, %v6146
  %v6239 = vmul.f32 %v6089, %v6134
  %v6240 = vmul.f32 %v6090, %v6138
  %v6241 = vmul.f32 %v6091, %v6142
  %v6242 = vmul.f32 %v6092, %v6146
  %v6243 = vmul.f32 %v6093, %v6134
  %v6244 = vmul.f32 %v6094, %v6138
  %v6245 = vmul.f32 %v6095, %v6142
  %v6246 = vmul.f32 %v6096, %v6146
  %v6247 = vmul.f32 %v6097, %v6134
  %v6248 = vmul.f32 %v6098, %v6138
  %v6249 = vmul.f32 %v6099, %v6142
  %v6250 = vmul.f32 %v6100, %v6146
  %v6251 = vmul.f32 %v6101, %v6134
  %v6252 = vmul.f32 %v6102, %v6138
  %v6253 = vmul.f32 %v6103, %v6142
  %v6254 = vmul.f32 %v6104, %v6146
  %v6255 = vmul.f32 %v6105, %v6134
  %v6256 = vmul.f32 %v6106, %v6138
  %v6257 = vmul.f32 %v6107, %v6142
  %v6258 = vmul.f32 %v6108, %v6146
  %v6259 = vmul.f32 %v6109, %v6134
  %v6260 = vmul.f32 %v6110, %v6138
  %v6261 = vmul.f32 %v6111, %v6142
  %v6262 = vmul.f32 %v6112, %v6146
  %v6263 = vmul.f32 %v6113, %v6134
  %v6264 = vmul.f32 %v6114, %v6138
  %v6265 = vmul.f32 %v6115, %v6142
  %v6266 = vmul.f32 %v6116, %v6146
  %v6267 = vmul.f32 %v6117, %v6134
  %v6268 = vmul.f32 %v6118, %v6138
  %v6269 = vmul.f32 %v6119, %v6142
  %v6270 = vmul.f32 %v6120, %v6146
  %v6271 = vmul.f32 %v6121, %v6134
  %v6272 = vmul.f32 %v6122, %v6138
  %v6273 = vmul.f32 %v6123, %v6142
  %v6274 = vmul.f32 %v6124, %v6146
  %v6275 = vmul.f32 %v6125, %v6134
  %v6276 = vmul.f32 %v6126, %v6138
  %v6277 = vmul.f32 %v6127, %v6142
  %v6278 = vmul.f32 %v6128, %v6146
  %v6279 = vadd.f32 %v6151, %v6152
  %v6280 = vadd.f32 %v6279, %v6153
  %v6281 = vadd.f32 %v6280, %v6154
  %6282 = vadd.xlane.f32.xlu0 %v6281
  %v6283 = vpop.xlane.xlu0 %6282
  %v6284 = vadd.f32 %v6155, %v6156
  %v6285 = vadd.f32 %v6284, %v6157
  %v6286 = vadd.f32 %v6285, %v6158
  %6287 = vadd.xlane.f32.xlu0 %v6286
  %v6288 = vpop.xlane.xlu0 %6287
  %v6289 = vadd.f32 %v6159, %v6160
  %v6290 = vadd.f32 %v6289, %v6161
  %v6291 = vadd.f32 %v6290, %v6162
  %6292 = vadd.xlane.f32.xlu0 %v6291
  %v6293 = vpop.xlane.xlu0 %6292
  %v6294 = vadd.f32 %v6163, %v6164
  %v6295 = vadd.f32 %v6294, %v6165
  %v6296 = vadd.f32 %v6295, %v6166
  %6297 = vadd.xlane.f32.xlu0 %v6296
  %v6298 = vpop.xlane.xlu0 %6297
  %v6299 = vadd.f32 %v6167, %v6168
  %v6300 = vadd.f32 %v6299, %v6169
  %v6301 = vadd.f32 %v6300, %v6170
  %6302 = vadd.xlane.f32.xlu0 %v6301
  %v6303 = vpop.xlane.xlu0 %6302
  %v6304 = vadd.f32 %v6171, %v6172
  %v6305 = vadd.f32 %v6304, %v6173
  %v6306 = vadd.f32 %v6305, %v6174
  %6307 = vadd.xlane.f32.xlu0 %v6306
  %v6308 = vpop.xlane.xlu0 %6307
  %v6309 = vadd.f32 %v6175, %v6176
  %v6310 = vadd.f32 %v6309, %v6177
  %v6311 = vadd.f32 %v6310, %v6178
  %6312 = vadd.xlane.f32.xlu0 %v6311
  %v6313 = vpop.xlane.xlu0 %6312
  %v6314 = vadd.f32 %v6179, %v6180
  %v6315 = vadd.f32 %v6314, %v6181
  %v6316 = vadd.f32 %v6315, %v6182
  %6317 = vadd.xlane.f32.xlu0 %v6316
  %v6318 = vpop.xlane.xlu0 %6317
  %v6319 = vadd.f32 %v6183, %v6184
  %v6320 = vadd.f32 %v6319, %v6185
  %v6321 = vadd.f32 %v6320, %v6186
  %6322 = vadd.xlane.f32.xlu0 %v6321
  %v6323 = vpop.xlane.xlu0 %6322
  %v6324 = vadd.f32 %v6187, %v6188
  %v6325 = vadd.f32 %v6324, %v6189
  %v6326 = vadd.f32 %v6325, %v6190
  %6327 = vadd.xlane.f32.xlu0 %v6326
  %v6328 = vpop.xlane.xlu0 %6327
  %v6329 = vadd.f32 %v6191, %v6192
  %v6330 = vadd.f32 %v6329, %v6193
  %v6331 = vadd.f32 %v6330, %v6194
  %6332 = vadd.xlane.f32.xlu0 %v6331
  %v6333 = vpop.xlane.xlu0 %6332
  %v6334 = vadd.f32 %v6195, %v6196
  %v6335 = vadd.f32 %v6334, %v6197
  %v6336 = vadd.f32 %v6335, %v6198
  %6337 = vadd.xlane.f32.xlu0 %v6336
  %v6338 = vpop.xlane.xlu0 %6337
  %v6339 = vadd.f32 %v6199, %v6200
  %v6340 = vadd.f32 %v6339, %v6201
  %v6341 = vadd.f32 %v6340, %v6202
  %6342 = vadd.xlane.f32.xlu0 %v6341
  %v6343 = vpop.xlane.xlu0 %6342
  %v6344 = vadd.f32 %v6203, %v6204
  %v6345 = vadd.f32 %v6344, %v6205
  %v6346 = vadd.f32 %v6345, %v6206
  %6347 = vadd.xlane.f32.xlu0 %v6346
  %v6348 = vpop.xlane.xlu0 %6347
  %v6349 = vadd.f32 %v6207, %v6208
  %v6350 = vadd.f32 %v6349, %v6209
  %v6351 = vadd.f32 %v6350, %v6210
  %6352 = vadd.xlane.f32.xlu0 %v6351
  %v6353 = vpop.xlane.xlu0 %6352
  %v6354 = vadd.f32 %v6211, %v6212
  %v6355 = vadd.f32 %v6354, %v6213
  %v6356 = vadd.f32 %v6355, %v6214
  %6357 = vadd.xlane.f32.xlu0 %v6356
  %v6358 = vpop.xlane.xlu0 %6357
  %v6359 = vadd.f32 %v6215, %v6216
  %v6360 = vadd.f32 %v6359, %v6217
  %v6361 = vadd.f32 %v6360, %v6218
  %6362 = vadd.xlane.f32.xlu0 %v6361
  %v6363 = vpop.xlane.xlu0 %6362
  %v6364 = vadd.f32 %v6219, %v6220
  %v6365 = vadd.f32 %v6364, %v6221
  %v6366 = vadd.f32 %v6365, %v6222
  %6367 = vadd.xlane.f32.xlu0 %v6366
  %v6368 = vpop.xlane.xlu0 %6367
  %v6369 = vadd.f32 %v6223, %v6224
  %v6370 = vadd.f32 %v6369, %v6225
  %v6371 = vadd.f32 %v6370, %v6226
  %6372 = vadd.xlane.f32.xlu0 %v6371
  %v6373 = vpop.xlane.xlu0 %6372
  %v6374 = vadd.f32 %v6227, %v6228
  %v6375 = vadd.f32 %v6374, %v6229
  %v6376 = vadd.f32 %v6375, %v6230
  %6377 = vadd.xlane.f32.xlu0 %v6376
  %v6378 = vpop.xlane.xlu0 %6377
  %v6379 = vadd.f32 %v6231, %v6232
  %v6380 = vadd.f32 %v6379, %v6233
  %v6381 = vadd.f32 %v6380, %v6234
  %6382 = vadd.xlane.f32.xlu0 %v6381
  %v6383 = vpop.xlane.xlu0 %6382
  %v6384 = vadd.f32 %v6235, %v6236
  %v6385 = vadd.f32 %v6384, %v6237
  %v6386 = vadd.f32 %v6385, %v6238
  %6387 = vadd.xlane.f32.xlu0 %v6386
  %v6388 = vpop.xlane.xlu0 %6387
  %v6389 = vadd.f32 %v6239, %v6240
  %v6390 = vadd.f32 %v6389, %v6241
  %v6391 = vadd.f32 %v6390, %v6242
  %6392 = vadd.xlane.f32.xlu0 %v6391
  %v6393 = vpop.xlane.xlu0 %6392
  %v6394 = vadd.f32 %v6243, %v6244
  %v6395 = vadd.f32 %v6394, %v6245
  %v6396 = vadd.f32 %v6395, %v6246
  %6397 = vadd.xlane.f32.xlu0 %v6396
  %v6398 = vpop.xlane.xlu0 %6397
  %v6399 = vadd.f32 %v6247, %v6248
  %v6400 = vadd.f32 %v6399, %v6249
  %v6401 = vadd.f32 %v6400, %v6250
  %6402 = vadd.xlane.f32.xlu0 %v6401
  %v6403 = vpop.xlane.xlu0 %6402
  %v6404 = vadd.f32 %v6251, %v6252
  %v6405 = vadd.f32 %v6404, %v6253
  %v6406 = vadd.f32 %v6405, %v6254
  %6407 = vadd.xlane.f32.xlu0 %v6406
  %v6408 = vpop.xlane.xlu0 %6407
  %v6409 = vadd.f32 %v6255, %v6256
  %v6410 = vadd.f32 %v6409, %v6257
  %v6411 = vadd.f32 %v6410, %v6258
  %6412 = vadd.xlane.f32.xlu0 %v6411
  %v6413 = vpop.xlane.xlu0 %6412
  %v6414 = vadd.f32 %v6259, %v6260
  %v6415 = vadd.f32 %v6414, %v6261
  %v6416 = vadd.f32 %v6415, %v6262
  %6417 = vadd.xlane.f32.xlu0 %v6416
  %v6418 = vpop.xlane.xlu0 %6417
  %v6419 = vadd.f32 %v6263, %v6264
  %v6420 = vadd.f32 %v6419, %v6265
  %v6421 = vadd.f32 %v6420, %v6266
  %6422 = vadd.xlane.f32.xlu0 %v6421
  %v6423 = vpop.xlane.xlu0 %6422
  %v6424 = vadd.f32 %v6267, %v6268
  %v6425 = vadd.f32 %v6424, %v6269
  %v6426 = vadd.f32 %v6425, %v6270
  %6427 = vadd.xlane.f32.xlu0 %v6426
  %v6428 = vpop.xlane.xlu0 %6427
  %v6429 = vadd.f32 %v6271, %v6272
  %v6430 = vadd.f32 %v6429, %v6273
  %v6431 = vadd.f32 %v6430, %v6274
  %6432 = vadd.xlane.f32.xlu0 %v6431
  %v6433 = vpop.xlane.xlu0 %6432
  %v6434 = vadd.f32 %v6275, %v6276
  %v6435 = vadd.f32 %v6434, %v6277
  %v6436 = vadd.f32 %v6435, %v6278
  %6437 = vadd.xlane.f32.xlu0 %v6436
  %v6438 = vpop.xlane.xlu0 %6437
  %v6439 = vld [vmem:[#allocation2] sm:$0x1]
  %v6441 = vlaneseq
  %v6442 = vshrl.u32 %v6441, 7
  %v6443 = vsub.s32 0, %v6442
  %v6444 = vrot.slane %v6439, %v6443
  %v6446 = vadd.f32 %v6283, %v6444
  %v6447 = vadd.f32 %v6288, %v6444
  %v6448 = vadd.f32 %v6293, %v6444
  %v6449 = vadd.f32 %v6298, %v6444
  %v6450 = vadd.f32 %v6303, %v6444
  %v6451 = vadd.f32 %v6308, %v6444
  %v6452 = vadd.f32 %v6313, %v6444
  %v6453 = vadd.f32 %v6318, %v6444
  %v6454 = vadd.f32 %v6323, %v6444
  %v6455 = vadd.f32 %v6328, %v6444
  %v6456 = vadd.f32 %v6333, %v6444
  %v6457 = vadd.f32 %v6338, %v6444
  %v6458 = vadd.f32 %v6343, %v6444
  %v6459 = vadd.f32 %v6348, %v6444
  %v6460 = vadd.f32 %v6353, %v6444
  %v6461 = vadd.f32 %v6358, %v6444
  %v6462 = vadd.f32 %v6363, %v6444
  %v6463 = vadd.f32 %v6368, %v6444
  %v6464 = vadd.f32 %v6373, %v6444
  %v6465 = vadd.f32 %v6378, %v6444
  %v6466 = vadd.f32 %v6383, %v6444
  %v6467 = vadd.f32 %v6388, %v6444
  %v6468 = vadd.f32 %v6393, %v6444
  %v6469 = vadd.f32 %v6398, %v6444
  %v6470 = vadd.f32 %v6403, %v6444
  %v6471 = vadd.f32 %v6408, %v6444
  %v6472 = vadd.f32 %v6413, %v6444
  %v6473 = vadd.f32 %v6418, %v6444
  %v6474 = vadd.f32 %v6423, %v6444
  %v6475 = vadd.f32 %v6428, %v6444
  %v6476 = vadd.f32 %v6433, %v6444
  %v6477 = vadd.f32 %v6438, %v6444
  %vm6478 = vcmask 7168
  %6479 = vst.msk [vmem:[%s9] sm:$0xff] %vm6478, %v6446
  %6480 = vst.msk [vmem:[%s9 + $0x8] sm:$0xff] %vm6478, %v6447
  %6481 = vst.msk [vmem:[%s9 + $0x10] sm:$0xff] %vm6478, %v6448
  %6482 = vst.msk [vmem:[%s9 + $0x18] sm:$0xff] %vm6478, %v6449
  %6483 = vst.msk [vmem:[%s9 + $0x20] sm:$0xff] %vm6478, %v6450
  %6484 = vst.msk [vmem:[%s9 + $0x28] sm:$0xff] %vm6478, %v6451
  %6485 = vst.msk [vmem:[%s9 + $0x30] sm:$0xff] %vm6478, %v6452
  %6486 = vst.msk [vmem:[%s9 + $0x38] sm:$0xff] %vm6478, %v6453
  %6487 = vst.msk [vmem:[%s9 + $0x40] sm:$0xff] %vm6478, %v6454
  %6488 = vst.msk [vmem:[%s9 + $0x48] sm:$0xff] %vm6478, %v6455
  %6489 = vst.msk [vmem:[%s9 + $0x50] sm:$0xff] %vm6478, %v6456
  %6490 = vst.msk [vmem:[%s9 + $0x58] sm:$0xff] %vm6478, %v6457
  %6491 = vst.msk [vmem:[%s9 + $0x60] sm:$0xff] %vm6478, %v6458
  %6492 = vst.msk [vmem:[%s9 + $0x68] sm:$0xff] %vm6478, %v6459
  %6493 = vst.msk [vmem:[%s9 + $0x70] sm:$0xff] %vm6478, %v6460
  %6494 = vst.msk [vmem:[%s9 + $0x78] sm:$0xff] %vm6478, %v6461
  %6495 = vst.msk [vmem:[%s9 + $0x80] sm:$0xff] %vm6478, %v6462
  %6496 = vst.msk [vmem:[%s9 + $0x88] sm:$0xff] %vm6478, %v6463
  %6497 = vst.msk [vmem:[%s9 + $0x90] sm:$0xff] %vm6478, %v6464
  %6498 = vst.msk [vmem:[%s9 + $0x98] sm:$0xff] %vm6478, %v6465
  %6499 = vst.msk [vmem:[%s9 + $0xa0] sm:$0xff] %vm6478, %v6466
  %6500 = vst.msk [vmem:[%s9 + $0xa8] sm:$0xff] %vm6478, %v6467
  %6501 = vst.msk [vmem:[%s9 + $0xb0] sm:$0xff] %vm6478, %v6468
  %6502 = vst.msk [vmem:[%s9 + $0xb8] sm:$0xff] %vm6478, %v6469
  %6503 = vst.msk [vmem:[%s9 + $0xc0] sm:$0xff] %vm6478, %v6470
  %6504 = vst.msk [vmem:[%s9 + $0xc8] sm:$0xff] %vm6478, %v6471
  %6505 = vst.msk [vmem:[%s9 + $0xd0] sm:$0xff] %vm6478, %v6472
  %6506 = vst.msk [vmem:[%s9 + $0xd8] sm:$0xff] %vm6478, %v6473
  %6507 = vst.msk [vmem:[%s9 + $0xe0] sm:$0xff] %vm6478, %v6474
  %6508 = vst.msk [vmem:[%s9 + $0xe8] sm:$0xff] %vm6478, %v6475
  %6509 = vst.msk [vmem:[%s9 + $0xf0] sm:$0xff] %vm6478, %v6476
  %6510 = vst.msk [vmem:[%s9 + $0xf8] sm:$0xff] %vm6478, %v6477
  // Predicated region
  $region38: #{discriminator_mlp_forward.1} parent=0 // pred_check
    _
  $region39: #{discriminator_mlp_forward.1} parent=0 // pred_check_branch
    %6512 = sbr.rel (0) target = $region41
  $region40: #{discriminator_mlp_forward.1} parent=0 // pred_region
    _
  $region41: #{discriminator_mlp_forward.1} parent=0 // pred_fallthru
    _
  // Predicated region
  $region42: #{discriminator_mlp_forward.1} parent=0 // pred_check
    _
  $region43: #{discriminator_mlp_forward.1} parent=0 // pred_check_branch
    %6514 = sbr.rel (0) target = $region45
  $region44: #{discriminator_mlp_forward.1} parent=0 // pred_region
    _
  $region45: #{discriminator_mlp_forward.1} parent=0 // pred_fallthru
    _

</llo_original>
